<compile_context>
chip_gen: v6e
topology: v6e:2x2x1
jax: 0.10.0
libtpu: 0.0.40
codegen_flags: <defaults>
</compile_context>

<pallas_src>
import functools

import jax
import jax.numpy as jnp
import numpy as np
from jax.experimental import pallas as pl
from jax.experimental.pallas import tpu as pltpu


def _round_up(x, m):
    return ((x + m - 1) // m) * m


def _rnn_listener_kernel(tile_max_ref, x_ref, lens_ref, w_ih_ref, w_hh_ref, b_x_ref,
                         b_hn_ref, w_out_ref, b_out_ref, out_ref, h_ref, gx_ref,
                         *, unit_norm, gate_dtype):
    # tile_max_ref: (nb,)          int32  SMEM  per-batch-tile max sequence length (prefetch)
    # x_ref:        (TS, TB, E_p)  bf16   time-major chunk of embedded message
    # lens_ref:     (TB, 1)        int32
    # w_ih_ref:     (E_p, 3*H_p)   bf16   gate order (r, z, n) concatenated on lanes
    # w_hh_ref:     (H_p, 3*H_p)   bf16
    # b_x_ref:      (1, 3*H_p)     f32    (b_ir+b_hr, b_iz+b_hz, b_in)
    # b_hn_ref:     (1, H_p)       f32
    # w_out_ref:    (H_p, H_p)     bf16
    # b_out_ref:    (1, H_p)       f32
    # out_ref:      (TB, H_p)      f32
    # h_ref:        (TB, H_p)      f32    hidden carry across S-chunks (scratch)
    # gx_ref:       (TS, TB, 3*H_p) bf16  hoisted input projection (scratch)
    b = pl.program_id(0)
    s = pl.program_id(1)
    TS, TB, E_p = x_ref.shape
    H_p = out_ref.shape[1]
    t0 = s * TS

    @pl.when(s == 0)
    def _():
        h_ref[...] = jnp.zeros_like(h_ref)

    # Skip chunks where every row of this batch tile has already frozen (ragged padding /
    # the all-padding batch tile added for megacore balance).
    @pl.when(t0 < tile_max_ref[b])
    def _():
        # --- Hoisted input projection: one large MXU GEMM for the whole time chunk. ---
        x_flat = x_ref[...].reshape(TS * TB, E_p)                       # bf16
        gx = jnp.dot(x_flat, w_ih_ref[...], preferred_element_type=jnp.float32)
        gx = gx + b_x_ref[...]                                          # biases pre-combined
        gx_ref[...] = gx.reshape(TS, TB, 3 * H_p).astype(gx_ref.dtype)  # bf16 scratch store

        # Hoist loop-invariant loads.
        w_hh = w_hh_ref[...]                                            # bf16
        b_hn = b_hn_ref[...].astype(gate_dtype)
        lens = lens_ref[...]                                            # (TB, 1) int32

        def step(t, h):
            gx_t = gx_ref[t].astype(gate_dtype)                         # (TB, 3*H_p)
            gh = jnp.dot(h.astype(w_hh.dtype), w_hh,
                         preferred_element_type=gate_dtype)             # (TB, 3*H_p)
            r = jax.nn.sigmoid(gx_t[:, :H_p] + gh[:, :H_p])
            z = jax.nn.sigmoid(gx_t[:, H_p:2 * H_p] + gh[:, H_p:2 * H_p])
            n = jnp.tanh(gx_t[:, 2 * H_p:] + r * (gh[:, 2 * H_p:] + b_hn))
            h_new = ((1 - z) * n + z * h.astype(gate_dtype)).astype(jnp.float32)
            # pack_padded_sequence semantics: freeze h once (global) t >= len (mask in f32)
            return jnp.where(t0 + t < lens, h_new, h)

        h = jax.lax.fori_loop(0, TS, step, h_ref[...],
                              unroll=True if TS <= 16 else 2)
        h_ref[...] = h

    @pl.when(s == pl.num_programs(1) - 1)
    def _():
        h = h_ref[...]
        out = jnp.dot(h.astype(w_out_ref.dtype), w_out_ref[...],
                      preferred_element_type=jnp.float32) + b_out_ref[...]
        if unit_norm:
            # out / (||out||_2 + 1e-9), matching the reference epsilon; sqrt + recip on EUP.
            norm = jnp.sqrt(jnp.sum(out * out, axis=1, keepdims=True))
            out = out * pl.reciprocal(norm + 1e-9, approx=True)
        # Zero padded batch rows (lens == 0) so the full padded output carries no garbage.
        out = jnp.where(lens_ref[...] > 0, out, 0.0)
        out_ref[...] = out.astype(out_ref.dtype)


def _default_gate_dtype():
    """bf16 gate math on chips with bf16 VALU/EUP (v6e / v7x), f32 otherwise (v5e and older)."""
    try:
        kind = jax.devices()[0].device_kind.lower()
    except Exception:
        kind = ""
    if "v6" in kind or "v7" in kind:
        return jnp.bfloat16
    return jnp.float32


def rnn_listener_forward(spk_msg, spk_msg_lens, params, *, unit_norm=True, gate_dtype=None):
    """spk_msg: (B, S) int32 token ids; spk_msg_lens: (B,) int32 (sorted desc)."""
    emb_table = params["emb"]                       # (vocab, D_emb), row 0 == 0
    B, S = spk_msg.shape
    D_emb = emb_table.shape[1]
    D_hid = params["w_out"].shape[0]
    if gate_dtype is None:
        gate_dtype = _default_gate_dtype()

    # ---- padded / tiled sizes (lane-dense last dims, sublane-multiple batch) ----
    H_p = _round_up(D_hid, 128)
    E_p = _round_up(D_emb, 128)
    # Batch tiling: guarantee >= 2 tiles so the "parallel" axis feeds both v7x TensorCores.
    TB = min(_round_up(max(1, (B + 1) // 2), 8), 128)
    B_p = _round_up(B, TB)
    nb = B_p // TB
    if nb < 2:
        B_p, nb = 2 * TB, 2

    # ---- per-generation VMEM budgeting: pick TS and vmem_limit from real chip capacity ----
    try:
        vmem_cap = int(pltpu.get_tpu_info().vmem_capacity_bytes)
    except Exception:
        vmem_cap = 64 * 1024 * 1024                 # conservative (v7x per-TC)
    budget = int(vmem_cap * 0.70)
    bf = 2                                          # bf16 bytes
    weight_bytes = 2 * bf * (E_p * 3 * H_p + H_p * 3 * H_p + H_p * H_p)   # worst-case 2 bufs
    fixed = (weight_bytes + 2 * 4 * (3 * H_p + 2 * H_p)                    # biases
             + 2 * 4 * TB * H_p + 4 * TB * H_p + 2 * 4 * TB)               # out bufs + h + lens
    per_ts = TB * (2 * E_p * bf + 3 * H_p * bf)     # double-buffered x block + bf16 gx scratch
    ts_cap = max(1, (budget - fixed) // per_ts)
    TS = int(max(1, min(S, ts_cap)))
    S_p = _round_up(S, TS)
    ns = S_p // TS
    vmem_limit = int(vmem_cap * 0.85)

    # ---- glue: embedding gather + dropout(identity), time-major, padded, bf16 ----
    x = jnp.take(emb_table, spk_msg, axis=0)                        # (B, S, D_emb)
    x = jnp.transpose(x, (1, 0, 2)).astype(jnp.float32)             # (S, B, D_emb)
    x = jnp.pad(x, ((0, S_p - S), (0, B_p - B), (0, E_p - D_emb))).astype(jnp.bfloat16)
    lens_pad = jnp.pad(spk_msg_lens.astype(jnp.int32), (0, B_p - B))
    lens = lens_pad.reshape(B_p, 1)
    # Per-batch-tile max length (sorted-desc lens -> cheap; computed robustly anyway).
    tile_max = lens_pad.reshape(nb, TB).max(axis=1).astype(jnp.int32)

    # ---- gate-fused, padded weights (r|z|n on the lane axis), bf16 for the MXU ----
    def pad_w(w, rows):
        return jnp.pad(w, ((0, rows - w.shape[0]), (0, H_p - w.shape[1])))

    def pad_b(v):
        return jnp.pad(v, ((0, 0), (0, H_p - v.shape[1])))

    w_ih = jnp.concatenate([pad_w(params["w_ih"][g], E_p) for g in range(3)],
                           axis=1).astype(jnp.bfloat16)             # (E_p, 3*H_p)
    w_hh = jnp.concatenate([pad_w(params["w_hh"][g], H_p) for g in range(3)],
                           axis=1).astype(jnp.bfloat16)             # (H_p, 3*H_p)
    b_x = jnp.concatenate([pad_b(params["b_ih"][0] + params["b_hh"][0]),
                           pad_b(params["b_ih"][1] + params["b_hh"][1]),
                           pad_b(params["b_ih"][2])],
                          axis=1).astype(jnp.float32)               # (1, 3*H_p)
    b_hn = pad_b(params["b_hh"][2]).astype(jnp.float32)             # (1, H_p)
    w_out = jnp.pad(params["w_out"],
                    ((0, H_p - D_hid), (0, H_p - D_hid))).astype(jnp.bfloat16)
    b_out = pad_b(params["b_out"]).astype(jnp.float32)

    def _make_call(weight_pipeline_mode):
        wkw = {} if weight_pipeline_mode is None else {"pipeline_mode": weight_pipeline_mode}
        grid_spec = pltpu.PrefetchScalarGridSpec(
            num_scalar_prefetch=1,                                   # tile_max -> SMEM
            grid=(nb, ns),
            in_specs=[
                pl.BlockSpec((TS, TB, E_p), lambda b, s, ml: (s, b, 0)),   # x streams over S
                pl.BlockSpec((TB, 1), lambda b, s, ml: (b, 0)),            # lens
                pl.BlockSpec((E_p, 3 * H_p), lambda b, s, ml: (0, 0), **wkw),   # W_ih (fused)
                pl.BlockSpec((H_p, 3 * H_p), lambda b, s, ml: (0, 0), **wkw),   # W_hh (fused)
                pl.BlockSpec((1, 3 * H_p), lambda b, s, ml: (0, 0), **wkw),     # input bias
                pl.BlockSpec((1, H_p), lambda b, s, ml: (0, 0), **wkw),         # b_hn
                pl.BlockSpec((H_p, H_p), lambda b, s, ml: (0, 0), **wkw),       # W_out
                pl.BlockSpec((1, H_p), lambda b, s, ml: (0, 0), **wkw),         # b_out
            ],
            out_specs=pl.BlockSpec((TB, H_p), lambda b, s, ml: (b, 0)),
            scratch_shapes=[
                pltpu.VMEM((TB, H_p), jnp.float32),                  # h carry across S-chunks
                pltpu.VMEM((TS, TB, 3 * H_p), jnp.bfloat16),         # hoisted gate projections
            ],
        )
        return pl.pallas_call(
            functools.partial(_rnn_listener_kernel, unit_norm=unit_norm, gate_dtype=gate_dtype),
            out_shape=jax.ShapeDtypeStruct((B_p, H_p), jnp.float32),
            grid_spec=grid_spec,
            compiler_params=pltpu.CompilerParams(
                dimension_semantics=("parallel", "arbitrary"),
                vmem_limit_bytes=vmem_limit,
            ),
        )

    args = (tile_max, x, lens, w_ih, w_hh, b_x, b_hn, w_out, b_out)
    try:
        # Loop-invariant weights single-buffered (their block never changes) to free VMEM.
        out = jax.block_until_ready(_make_call(pl.Buffered(1))(*args))
    except Exception:
        # Fallback if this build does not accept pipeline_mode on pallas_call BlockSpecs.
        out = jax.block_until_ready(_make_call(None)(*args))

    return out[:B, :D_hid]


def make_params(key, vocab_size, D_emb, D_hid):
    ks = jax.random.split(key, 7)
    scale = 0.1
    emb = scale * jax.random.normal(ks[0], (vocab_size, D_emb), jnp.float32)
    emb = emb.at[0].set(0.0)  # padding_idx=0
    params = {
        "emb": emb,
        # gate-major (r, z, n), already transposed for x @ W
        "w_ih": scale * jax.random.normal(ks[1], (3, D_emb, D_hid), jnp.float32),
        "w_hh": scale * jax.random.normal(ks[2], (3, D_hid, D_hid), jnp.float32),
        "b_ih": scale * jax.random.normal(ks[3], (3, 1, D_hid), jnp.float32),
        "b_hh": scale * jax.random.normal(ks[4], (3, 1, D_hid), jnp.float32),
        "w_out": scale * jax.random.normal(ks[5], (D_hid, D_hid), jnp.float32),
        "b_out": scale * jax.random.normal(ks[6], (1, D_hid), jnp.float32),
    }
    return params


def reference_forward(spk_msg, spk_msg_lens, params, *, unit_norm=True):
    """Pure-numpy f32 reference of the same forward pass."""
    emb = np.asarray(params["emb"])
    w_ih = np.asarray(params["w_ih"]); w_hh = np.asarray(params["w_hh"])
    b_ih = np.asarray(params["b_ih"]); b_hh = np.asarray(params["b_hh"])
    w_out = np.asarray(params["w_out"]); b_out = np.asarray(params["b_out"])
    msg = np.asarray(spk_msg); lens = np.asarray(spk_msg_lens)
    B, S = msg.shape
    D_hid = w_hh.shape[-1]
    sig = lambda v: 1.0 / (1.0 + np.exp(-v))
    h = np.zeros((B, D_hid), np.float32)
    for t in range(S):
        x_t = emb[msg[:, t]]
        r = sig(x_t @ w_ih[0] + b_ih[0] + h @ w_hh[0] + b_hh[0])
        z = sig(x_t @ w_ih[1] + b_ih[1] + h @ w_hh[1] + b_hh[1])
        n = np.tanh(x_t @ w_ih[2] + b_ih[2] + r * (h @ w_hh[2] + b_hh[2]))
        h_new = (1.0 - z) * n + z * h
        mask = (t < lens)[:, None]
        h = np.where(mask, h_new, h)
    out = h @ w_out + b_out
    if unit_norm:
        out = out / (np.linalg.norm(out, axis=1, keepdims=True) + 1e-9)
    return out


if __name__ == "__main__":
    B, S, D_emb, D_hid, vocab = 4, 8, 16, 32, 20

    key = jax.random.PRNGKey(0)
    k_tok, k_par = jax.random.split(key)
    params = make_params(k_par, vocab, D_emb, D_hid)

    # lengths sorted descending (pack_padded_sequence requirement), tokens padded with 0
    spk_msg_lens = jnp.array([8, 6, 4, 2], dtype=jnp.int32)
    spk_msg = jax.random.randint(k_tok, (B, S), 1, vocab, dtype=jnp.int32)
    pad_mask = jnp.arange(S)[None, :] < spk_msg_lens[:, None]
    spk_msg = jnp.where(pad_mask, spk_msg, 0)

    out = rnn_listener_forward(spk_msg, spk_msg_lens, params, unit_norm=True)
    out = jax.block_until_ready(out)

    ref = reference_forward(spk_msg, spk_msg_lens, params, unit_norm=True)
    # bf16 matmul operands (+ bf16 gate math on v6e/v7x) -> loosen tolerance vs f32 reference.
    np.testing.assert_allclose(np.asarray(out), ref, rtol=2e-2, atol=2e-2)

    print("KERNEL_OK")
</pallas_src>

<mosaic_0001>
module attributes {stable_mosaic.version = 11 : i64} {
  func.func @_rnn_listener_kernel(%arg0: i32, %arg1: i32, %arg2: memref<2xi32, #tpu.memory_space<smem>>, %arg3: memref<8x8x128xbf16, #tpu.memory_space<vmem>>, %arg4: memref<8x1xi32, #tpu.memory_space<vmem>>, %arg5: memref<128x384xbf16, #tpu.memory_space<vmem>>, %arg6: memref<128x384xbf16, #tpu.memory_space<vmem>>, %arg7: memref<1x384xf32, #tpu.memory_space<vmem>>, %arg8: memref<1x128xf32, #tpu.memory_space<vmem>>, %arg9: memref<128x128xbf16, #tpu.memory_space<vmem>>, %arg10: memref<1x128xf32, #tpu.memory_space<vmem>>, %arg11: memref<8x128xf32, #tpu.memory_space<vmem>>, %arg12: memref<8x128xf32, #tpu.memory_space<vmem>>, %arg13: memref<8x8x384xbf16, #tpu.memory_space<vmem>>) attributes {dimension_semantics = [#tpu.dimension_semantics<parallel>, #tpu.dimension_semantics<arbitrary>], iteration_bounds = array<i64: 2, 1>, scalar_prefetch = 1 : i64, scratch_operands = 2 : i64, tpu.core_type = #tpu.core_type<tc>, window_params = [{transform_indices = @transform_0, window_bounds = array<i64: 8, 8, 128>}, {transform_indices = @transform_1, window_bounds = array<i64: 8, 1>}, {pipeline_mode = #tpu.pipeline_mode<synchronous>, transform_indices = @transform_2, window_bounds = array<i64: 128, 384>}, {pipeline_mode = #tpu.pipeline_mode<synchronous>, transform_indices = @transform_3, window_bounds = array<i64: 128, 384>}, {pipeline_mode = #tpu.pipeline_mode<synchronous>, transform_indices = @transform_4, window_bounds = array<i64: 1, 384>}, {pipeline_mode = #tpu.pipeline_mode<synchronous>, transform_indices = @transform_5, window_bounds = array<i64: 1, 128>}, {pipeline_mode = #tpu.pipeline_mode<synchronous>, transform_indices = @transform_6, window_bounds = array<i64: 128, 128>}, {pipeline_mode = #tpu.pipeline_mode<synchronous>, transform_indices = @transform_7, window_bounds = array<i64: 1, 128>}, {transform_indices = @transform_8, window_bounds = array<i64: 8, 128>}]} {
    %c8_i32 = arith.constant 8 : i32
    %0 = arith.muli %arg1, %c8_i32 : i32
    %c0_i32 = arith.constant 0 : i32
    %1 = arith.cmpi eq, %arg1, %c0_i32 : i32
    %2 = arith.extui %1 : i1 to i32
    %c0_i32_0 = arith.constant 0 : i32
    %3 = arith.cmpi ne, %2, %c0_i32_0 : i32
    scf.if %3 {
      %cst = arith.constant 0.000000e+00 : f32
      %12 = vector.broadcast %cst : f32 to vector<8x128xf32>
      %c0 = arith.constant 0 : index
      %c0_4 = arith.constant 0 : index
      %13 = vector.load %arg12[%c0, %c0_4] : memref<8x128xf32, #tpu.memory_space<vmem>>, vector<8x128xf32>
      tpu.vector_store %arg12[%c0, %c0_4], %12 {strides = array<i32>} : memref<8x128xf32, #tpu.memory_space<vmem>>, vector<8x128xf32>,
    } else {
    }
    %4 = arith.index_cast %arg0 : i32 to index
    %5 = memref.load %arg2[%4] : memref<2xi32, #tpu.memory_space<smem>>
    %6 = arith.cmpi slt, %0, %5 : i32
    %7 = arith.extui %6 : i1 to i32
    %c0_i32_1 = arith.constant 0 : i32
    %8 = arith.cmpi ne, %7, %c0_i32_1 : i32
    scf.if %8 {
      %c0 = arith.constant 0 : index
      %c0_4 = arith.constant 0 : index
      %c0_5 = arith.constant 0 : index
      %12 = vector.load %arg3[%c0, %c0_4, %c0_5] : memref<8x8x128xbf16, #tpu.memory_space<vmem>>, vector<8x8x128xbf16>
      %13 = vector.shape_cast %12 : vector<8x8x128xbf16> to vector<64x128xbf16>
      %c0_6 = arith.constant 0 : index
      %c0_7 = arith.constant 0 : index
      %14 = vector.load %arg5[%c0_6, %c0_7] : memref<128x384xbf16, #tpu.memory_space<vmem>>, vector<128x384xbf16>
      %cst = arith.constant dense<0.000000e+00> : vector<64x384xf32>
      %15 = tpu.matmul %13, %14, %cst {dimension_numbers = #tpu.dot_dimension_numbers<[1], [0], [0], [1], [0, 0, 1, 1], [], []>} : vector<64x128xbf16>, vector<128x384xbf16>, vector<64x384xf32> -> vector<64x384xf32>
      %c0_8 = arith.constant 0 : index
      %c0_9 = arith.constant 0 : index
      %16 = vector.load %arg7[%c0_8, %c0_9] : memref<1x384xf32, #tpu.memory_space<vmem>>, vector<1x384xf32>
      %17 = vector.broadcast %16 : vector<1x384xf32> to vector<64x384xf32>
      %18 = arith.addf %15, %17 : vector<64x384xf32>
      %19 = vector.shape_cast %18 : vector<64x384xf32> to vector<8x8x384xf32>
      %20 = arith.truncf %19 : vector<8x8x384xf32> to vector<8x8x384xbf16>
      %c0_10 = arith.constant 0 : index
      %c0_11 = arith.constant 0 : index
      %c0_12 = arith.constant 0 : index
      %21 = vector.load %arg13[%c0_10, %c0_11, %c0_12] : memref<8x8x384xbf16, #tpu.memory_space<vmem>>, vector<8x8x384xbf16>
      tpu.vector_store %arg13[%c0_10, %c0_11, %c0_12], %20 {strides = array<i32>} : memref<8x8x384xbf16, #tpu.memory_space<vmem>>, vector<8x8x384xbf16>,
      %c0_13 = arith.constant 0 : index
      %c0_14 = arith.constant 0 : index
      %22 = vector.load %arg6[%c0_13, %c0_14] : memref<128x384xbf16, #tpu.memory_space<vmem>>, vector<128x384xbf16>
      %c0_15 = arith.constant 0 : index
      %c0_16 = arith.constant 0 : index
      %23 = vector.load %arg8[%c0_15, %c0_16] : memref<1x128xf32, #tpu.memory_space<vmem>>, vector<1x128xf32>
      %c0_17 = arith.constant 0 : index
      %c0_18 = arith.constant 0 : index
      %24 = vector.load %arg4[%c0_17, %c0_18] : memref<8x1xi32, #tpu.memory_space<vmem>>, vector<8x1xi32>
      %c0_19 = arith.constant 0 : index
      %c0_20 = arith.constant 0 : index
      %25 = vector.load %arg12[%c0_19, %c0_20] : memref<8x128xf32, #tpu.memory_space<vmem>>, vector<8x128xf32>
      %c0_i32_21 = arith.constant 0 : i32
      %26 = arith.index_cast %c0_i32_21 : i32 to index
      %c0_22 = arith.constant 0 : index
      %c0_23 = arith.constant 0 : index
      %27 = vector.load %arg13[%26, %c0_22, %c0_23] : memref<8x8x384xbf16, #tpu.memory_space<vmem>>, vector<1x8x384xbf16>
      %28 = vector.shape_cast %27 : vector<1x8x384xbf16> to vector<8x384xbf16>
      %29 = arith.extf %28 : vector<8x384xbf16> to vector<8x384xf32>
      %30 = arith.truncf %25 : vector<8x128xf32> to vector<8x128xbf16>
      %cst_24 = arith.constant dense<0.000000e+00> : vector<8x384xf32>
      %31 = tpu.matmul %30, %22, %cst_24 {dimension_numbers = #tpu.dot_dimension_numbers<[1], [0], [0], [1], [0, 0, 1, 1], [], []>} : vector<8x128xbf16>, vector<128x384xbf16>, vector<8x384xf32> -> vector<8x384xf32>
      %32 = vector.extract_strided_slice %29 {offsets = [0, 0], sizes = [8, 128], strides = [1, 1]} : vector<8x384xf32> to vector<8x128xf32>
      %33 = vector.extract_strided_slice %31 {offsets = [0, 0], sizes = [8, 128], strides = [1, 1]} : vector<8x384xf32> to vector<8x128xf32>
      %34 = arith.addf %32, %33 : vector<8x128xf32>
      %35 = arith.negf %34 : vector<8x128xf32>
      %36 = math.exp %35 : vector<8x128xf32>
      %cst_25 = arith.constant 1.000000e+00 : f32
      %37 = vector.broadcast %cst_25 : f32 to vector<8x128xf32>
      %38 = arith.addf %37, %36 : vector<8x128xf32>
      %39 = arith.divf %37, %38 : vector<8x128xf32>
      %40 = vector.extract_strided_slice %29 {offsets = [0, 128], sizes = [8, 128], strides = [1, 1]} : vector<8x384xf32> to vector<8x128xf32>
      %41 = vector.extract_strided_slice %31 {offsets = [0, 128], sizes = [8, 128], strides = [1, 1]} : vector<8x384xf32> to vector<8x128xf32>
      %42 = arith.addf %40, %41 : vector<8x128xf32>
      %43 = arith.negf %42 : vector<8x128xf32>
      %44 = math.exp %43 : vector<8x128xf32>
      %cst_26 = arith.constant 1.000000e+00 : f32
      %45 = vector.broadcast %cst_26 : f32 to vector<8x128xf32>
      %46 = arith.addf %45, %44 : vector<8x128xf32>
      %47 = arith.divf %45, %46 : vector<8x128xf32>
      %48 = vector.extract_strided_slice %29 {offsets = [0, 256], sizes = [8, 128], strides = [1, 1]} : vector<8x384xf32> to vector<8x128xf32>
      %49 = vector.extract_strided_slice %31 {offsets = [0, 256], sizes = [8, 128], strides = [1, 1]} : vector<8x384xf32> to vector<8x128xf32>
      %50 = vector.broadcast %23 : vector<1x128xf32> to vector<8x128xf32>
      %51 = arith.addf %49, %50 : vector<8x128xf32>
      %52 = arith.mulf %39, %51 : vector<8x128xf32>
      %53 = arith.addf %48, %52 : vector<8x128xf32>
      %54 = math.tanh %53 : vector<8x128xf32>
      %cst_27 = arith.constant 1.000000e+00 : f32
      %55 = vector.broadcast %cst_27 : f32 to vector<8x128xf32>
      %56 = arith.subf %55, %47 : vector<8x128xf32>
      %57 = arith.mulf %56, %54 : vector<8x128xf32>
      %58 = arith.mulf %47, %25 : vector<8x128xf32>
      %59 = arith.addf %57, %58 : vector<8x128xf32>
      %60 = arith.addi %0, %c0_i32_21 : i32
      %61 = vector.broadcast %60 : i32 to vector<8x1xi32>
      %62 = arith.cmpi slt, %61, %24 : vector<8x1xi32>
      %63 = vector.shape_cast %62 : vector<8x1xi1> to vector<8x1xi1>
      %64 = vector.broadcast %63 : vector<8x1xi1> to vector<8x128xi1>
      %65 = arith.select %64, %59, %25 : vector<8x128xi1>, vector<8x128xf32>
      %c1_i32 = arith.constant 1 : i32
      %66 = arith.index_cast %c1_i32 : i32 to index
      %c0_28 = arith.constant 0 : index
      %c0_29 = arith.constant 0 : index
      %67 = vector.load %arg13[%66, %c0_28, %c0_29] : memref<8x8x384xbf16, #tpu.memory_space<vmem>>, vector<1x8x384xbf16>
      %68 = vector.shape_cast %67 : vector<1x8x384xbf16> to vector<8x384xbf16>
      %69 = arith.extf %68 : vector<8x384xbf16> to vector<8x384xf32>
      %70 = arith.truncf %65 : vector<8x128xf32> to vector<8x128xbf16>
      %cst_30 = arith.constant dense<0.000000e+00> : vector<8x384xf32>
      %71 = tpu.matmul %70, %22, %cst_30 {dimension_numbers = #tpu.dot_dimension_numbers<[1], [0], [0], [1], [0, 0, 1, 1], [], []>} : vector<8x128xbf16>, vector<128x384xbf16>, vector<8x384xf32> -> vector<8x384xf32>
      %72 = vector.extract_strided_slice %69 {offsets = [0, 0], sizes = [8, 128], strides = [1, 1]} : vector<8x384xf32> to vector<8x128xf32>
      %73 = vector.extract_strided_slice %71 {offsets = [0, 0], sizes = [8, 128], strides = [1, 1]} : vector<8x384xf32> to vector<8x128xf32>
      %74 = arith.addf %72, %73 : vector<8x128xf32>
      %75 = arith.negf %74 : vector<8x128xf32>
      %76 = math.exp %75 : vector<8x128xf32>
      %cst_31 = arith.constant 1.000000e+00 : f32
      %77 = vector.broadcast %cst_31 : f32 to vector<8x128xf32>
      %78 = arith.addf %77, %76 : vector<8x128xf32>
      %79 = arith.divf %77, %78 : vector<8x128xf32>
      %80 = vector.extract_strided_slice %69 {offsets = [0, 128], sizes = [8, 128], strides = [1, 1]} : vector<8x384xf32> to vector<8x128xf32>
      %81 = vector.extract_strided_slice %71 {offsets = [0, 128], sizes = [8, 128], strides = [1, 1]} : vector<8x384xf32> to vector<8x128xf32>
      %82 = arith.addf %80, %81 : vector<8x128xf32>
      %83 = arith.negf %82 : vector<8x128xf32>
      %84 = math.exp %83 : vector<8x128xf32>
      %cst_32 = arith.constant 1.000000e+00 : f32
      %85 = vector.broadcast %cst_32 : f32 to vector<8x128xf32>
      %86 = arith.addf %85, %84 : vector<8x128xf32>
      %87 = arith.divf %85, %86 : vector<8x128xf32>
      %88 = vector.extract_strided_slice %69 {offsets = [0, 256], sizes = [8, 128], strides = [1, 1]} : vector<8x384xf32> to vector<8x128xf32>
      %89 = vector.extract_strided_slice %71 {offsets = [0, 256], sizes = [8, 128], strides = [1, 1]} : vector<8x384xf32> to vector<8x128xf32>
      %90 = vector.broadcast %23 : vector<1x128xf32> to vector<8x128xf32>
      %91 = arith.addf %89, %90 : vector<8x128xf32>
      %92 = arith.mulf %79, %91 : vector<8x128xf32>
      %93 = arith.addf %88, %92 : vector<8x128xf32>
      %94 = math.tanh %93 : vector<8x128xf32>
      %cst_33 = arith.constant 1.000000e+00 : f32
      %95 = vector.broadcast %cst_33 : f32 to vector<8x128xf32>
      %96 = arith.subf %95, %87 : vector<8x128xf32>
      %97 = arith.mulf %96, %94 : vector<8x128xf32>
      %98 = arith.mulf %87, %65 : vector<8x128xf32>
      %99 = arith.addf %97, %98 : vector<8x128xf32>
      %100 = arith.addi %0, %c1_i32 : i32
      %101 = vector.broadcast %100 : i32 to vector<8x1xi32>
      %102 = arith.cmpi slt, %101, %24 : vector<8x1xi32>
      %103 = vector.shape_cast %102 : vector<8x1xi1> to vector<8x1xi1>
      %104 = vector.broadcast %103 : vector<8x1xi1> to vector<8x128xi1>
      %105 = arith.select %104, %99, %65 : vector<8x128xi1>, vector<8x128xf32>
      %c2_i32 = arith.constant 2 : i32
      %106 = arith.index_cast %c2_i32 : i32 to index
      %c0_34 = arith.constant 0 : index
      %c0_35 = arith.constant 0 : index
      %107 = vector.load %arg13[%106, %c0_34, %c0_35] : memref<8x8x384xbf16, #tpu.memory_space<vmem>>, vector<1x8x384xbf16>
      %108 = vector.shape_cast %107 : vector<1x8x384xbf16> to vector<8x384xbf16>
      %109 = arith.extf %108 : vector<8x384xbf16> to vector<8x384xf32>
      %110 = arith.truncf %105 : vector<8x128xf32> to vector<8x128xbf16>
      %cst_36 = arith.constant dense<0.000000e+00> : vector<8x384xf32>
      %111 = tpu.matmul %110, %22, %cst_36 {dimension_numbers = #tpu.dot_dimension_numbers<[1], [0], [0], [1], [0, 0, 1, 1], [], []>} : vector<8x128xbf16>, vector<128x384xbf16>, vector<8x384xf32> -> vector<8x384xf32>
      %112 = vector.extract_strided_slice %109 {offsets = [0, 0], sizes = [8, 128], strides = [1, 1]} : vector<8x384xf32> to vector<8x128xf32>
      %113 = vector.extract_strided_slice %111 {offsets = [0, 0], sizes = [8, 128], strides = [1, 1]} : vector<8x384xf32> to vector<8x128xf32>
      %114 = arith.addf %112, %113 : vector<8x128xf32>
      %115 = arith.negf %114 : vector<8x128xf32>
      %116 = math.exp %115 : vector<8x128xf32>
      %cst_37 = arith.constant 1.000000e+00 : f32
      %117 = vector.broadcast %cst_37 : f32 to vector<8x128xf32>
      %118 = arith.addf %117, %116 : vector<8x128xf32>
      %119 = arith.divf %117, %118 : vector<8x128xf32>
      %120 = vector.extract_strided_slice %109 {offsets = [0, 128], sizes = [8, 128], strides = [1, 1]} : vector<8x384xf32> to vector<8x128xf32>
      %121 = vector.extract_strided_slice %111 {offsets = [0, 128], sizes = [8, 128], strides = [1, 1]} : vector<8x384xf32> to vector<8x128xf32>
      %122 = arith.addf %120, %121 : vector<8x128xf32>
      %123 = arith.negf %122 : vector<8x128xf32>
      %124 = math.exp %123 : vector<8x128xf32>
      %cst_38 = arith.constant 1.000000e+00 : f32
      %125 = vector.broadcast %cst_38 : f32 to vector<8x128xf32>
      %126 = arith.addf %125, %124 : vector<8x128xf32>
      %127 = arith.divf %125, %126 : vector<8x128xf32>
      %128 = vector.extract_strided_slice %109 {offsets = [0, 256], sizes = [8, 128], strides = [1, 1]} : vector<8x384xf32> to vector<8x128xf32>
      %129 = vector.extract_strided_slice %111 {offsets = [0, 256], sizes = [8, 128], strides = [1, 1]} : vector<8x384xf32> to vector<8x128xf32>
      %130 = vector.broadcast %23 : vector<1x128xf32> to vector<8x128xf32>
      %131 = arith.addf %129, %130 : vector<8x128xf32>
      %132 = arith.mulf %119, %131 : vector<8x128xf32>
      %133 = arith.addf %128, %132 : vector<8x128xf32>
      %134 = math.tanh %133 : vector<8x128xf32>
      %cst_39 = arith.constant 1.000000e+00 : f32
      %135 = vector.broadcast %cst_39 : f32 to vector<8x128xf32>
      %136 = arith.subf %135, %127 : vector<8x128xf32>
      %137 = arith.mulf %136, %134 : vector<8x128xf32>
      %138 = arith.mulf %127, %105 : vector<8x128xf32>
      %139 = arith.addf %137, %138 : vector<8x128xf32>
      %140 = arith.addi %0, %c2_i32 : i32
      %141 = vector.broadcast %140 : i32 to vector<8x1xi32>
      %142 = arith.cmpi slt, %141, %24 : vector<8x1xi32>
      %143 = vector.shape_cast %142 : vector<8x1xi1> to vector<8x1xi1>
      %144 = vector.broadcast %143 : vector<8x1xi1> to vector<8x128xi1>
      %145 = arith.select %144, %139, %105 : vector<8x128xi1>, vector<8x128xf32>
      %c3_i32 = arith.constant 3 : i32
      %146 = arith.index_cast %c3_i32 : i32 to index
      %c0_40 = arith.constant 0 : index
      %c0_41 = arith.constant 0 : index
      %147 = vector.load %arg13[%146, %c0_40, %c0_41] : memref<8x8x384xbf16, #tpu.memory_space<vmem>>, vector<1x8x384xbf16>
      %148 = vector.shape_cast %147 : vector<1x8x384xbf16> to vector<8x384xbf16>
      %149 = arith.extf %148 : vector<8x384xbf16> to vector<8x384xf32>
      %150 = arith.truncf %145 : vector<8x128xf32> to vector<8x128xbf16>
      %cst_42 = arith.constant dense<0.000000e+00> : vector<8x384xf32>
      %151 = tpu.matmul %150, %22, %cst_42 {dimension_numbers = #tpu.dot_dimension_numbers<[1], [0], [0], [1], [0, 0, 1, 1], [], []>} : vector<8x128xbf16>, vector<128x384xbf16>, vector<8x384xf32> -> vector<8x384xf32>
      %152 = vector.extract_strided_slice %149 {offsets = [0, 0], sizes = [8, 128], strides = [1, 1]} : vector<8x384xf32> to vector<8x128xf32>
      %153 = vector.extract_strided_slice %151 {offsets = [0, 0], sizes = [8, 128], strides = [1, 1]} : vector<8x384xf32> to vector<8x128xf32>
      %154 = arith.addf %152, %153 : vector<8x128xf32>
      %155 = arith.negf %154 : vector<8x128xf32>
      %156 = math.exp %155 : vector<8x128xf32>
      %cst_43 = arith.constant 1.000000e+00 : f32
      %157 = vector.broadcast %cst_43 : f32 to vector<8x128xf32>
      %158 = arith.addf %157, %156 : vector<8x128xf32>
      %159 = arith.divf %157, %158 : vector<8x128xf32>
      %160 = vector.extract_strided_slice %149 {offsets = [0, 128], sizes = [8, 128], strides = [1, 1]} : vector<8x384xf32> to vector<8x128xf32>
      %161 = vector.extract_strided_slice %151 {offsets = [0, 128], sizes = [8, 128], strides = [1, 1]} : vector<8x384xf32> to vector<8x128xf32>
      %162 = arith.addf %160, %161 : vector<8x128xf32>
      %163 = arith.negf %162 : vector<8x128xf32>
      %164 = math.exp %163 : vector<8x128xf32>
      %cst_44 = arith.constant 1.000000e+00 : f32
      %165 = vector.broadcast %cst_44 : f32 to vector<8x128xf32>
      %166 = arith.addf %165, %164 : vector<8x128xf32>
      %167 = arith.divf %165, %166 : vector<8x128xf32>
      %168 = vector.extract_strided_slice %149 {offsets = [0, 256], sizes = [8, 128], strides = [1, 1]} : vector<8x384xf32> to vector<8x128xf32>
      %169 = vector.extract_strided_slice %151 {offsets = [0, 256], sizes = [8, 128], strides = [1, 1]} : vector<8x384xf32> to vector<8x128xf32>
      %170 = vector.broadcast %23 : vector<1x128xf32> to vector<8x128xf32>
      %171 = arith.addf %169, %170 : vector<8x128xf32>
      %172 = arith.mulf %159, %171 : vector<8x128xf32>
      %173 = arith.addf %168, %172 : vector<8x128xf32>
      %174 = math.tanh %173 : vector<8x128xf32>
      %cst_45 = arith.constant 1.000000e+00 : f32
      %175 = vector.broadcast %cst_45 : f32 to vector<8x128xf32>
      %176 = arith.subf %175, %167 : vector<8x128xf32>
      %177 = arith.mulf %176, %174 : vector<8x128xf32>
      %178 = arith.mulf %167, %145 : vector<8x128xf32>
      %179 = arith.addf %177, %178 : vector<8x128xf32>
      %180 = arith.addi %0, %c3_i32 : i32
      %181 = vector.broadcast %180 : i32 to vector<8x1xi32>
      %182 = arith.cmpi slt, %181, %24 : vector<8x1xi32>
      %183 = vector.shape_cast %182 : vector<8x1xi1> to vector<8x1xi1>
      %184 = vector.broadcast %183 : vector<8x1xi1> to vector<8x128xi1>
      %185 = arith.select %184, %179, %145 : vector<8x128xi1>, vector<8x128xf32>
      %c4_i32 = arith.constant 4 : i32
      %186 = arith.index_cast %c4_i32 : i32 to index
      %c0_46 = arith.constant 0 : index
      %c0_47 = arith.constant 0 : index
      %187 = vector.load %arg13[%186, %c0_46, %c0_47] : memref<8x8x384xbf16, #tpu.memory_space<vmem>>, vector<1x8x384xbf16>
      %188 = vector.shape_cast %187 : vector<1x8x384xbf16> to vector<8x384xbf16>
      %189 = arith.extf %188 : vector<8x384xbf16> to vector<8x384xf32>
      %190 = arith.truncf %185 : vector<8x128xf32> to vector<8x128xbf16>
      %cst_48 = arith.constant dense<0.000000e+00> : vector<8x384xf32>
      %191 = tpu.matmul %190, %22, %cst_48 {dimension_numbers = #tpu.dot_dimension_numbers<[1], [0], [0], [1], [0, 0, 1, 1], [], []>} : vector<8x128xbf16>, vector<128x384xbf16>, vector<8x384xf32> -> vector<8x384xf32>
      %192 = vector.extract_strided_slice %189 {offsets = [0, 0], sizes = [8, 128], strides = [1, 1]} : vector<8x384xf32> to vector<8x128xf32>
      %193 = vector.extract_strided_slice %191 {offsets = [0, 0], sizes = [8, 128], strides = [1, 1]} : vector<8x384xf32> to vector<8x128xf32>
      %194 = arith.addf %192, %193 : vector<8x128xf32>
      %195 = arith.negf %194 : vector<8x128xf32>
      %196 = math.exp %195 : vector<8x128xf32>
      %cst_49 = arith.constant 1.000000e+00 : f32
      %197 = vector.broadcast %cst_49 : f32 to vector<8x128xf32>
      %198 = arith.addf %197, %196 : vector<8x128xf32>
      %199 = arith.divf %197, %198 : vector<8x128xf32>
      %200 = vector.extract_strided_slice %189 {offsets = [0, 128], sizes = [8, 128], strides = [1, 1]} : vector<8x384xf32> to vector<8x128xf32>
      %201 = vector.extract_strided_slice %191 {offsets = [0, 128], sizes = [8, 128], strides = [1, 1]} : vector<8x384xf32> to vector<8x128xf32>
      %202 = arith.addf %200, %201 : vector<8x128xf32>
      %203 = arith.negf %202 : vector<8x128xf32>
      %204 = math.exp %203 : vector<8x128xf32>
      %cst_50 = arith.constant 1.000000e+00 : f32
      %205 = vector.broadcast %cst_50 : f32 to vector<8x128xf32>
      %206 = arith.addf %205, %204 : vector<8x128xf32>
      %207 = arith.divf %205, %206 : vector<8x128xf32>
      %208 = vector.extract_strided_slice %189 {offsets = [0, 256], sizes = [8, 128], strides = [1, 1]} : vector<8x384xf32> to vector<8x128xf32>
      %209 = vector.extract_strided_slice %191 {offsets = [0, 256], sizes = [8, 128], strides = [1, 1]} : vector<8x384xf32> to vector<8x128xf32>
      %210 = vector.broadcast %23 : vector<1x128xf32> to vector<8x128xf32>
      %211 = arith.addf %209, %210 : vector<8x128xf32>
      %212 = arith.mulf %199, %211 : vector<8x128xf32>
      %213 = arith.addf %208, %212 : vector<8x128xf32>
      %214 = math.tanh %213 : vector<8x128xf32>
      %cst_51 = arith.constant 1.000000e+00 : f32
      %215 = vector.broadcast %cst_51 : f32 to vector<8x128xf32>
      %216 = arith.subf %215, %207 : vector<8x128xf32>
      %217 = arith.mulf %216, %214 : vector<8x128xf32>
      %218 = arith.mulf %207, %185 : vector<8x128xf32>
      %219 = arith.addf %217, %218 : vector<8x128xf32>
      %220 = arith.addi %0, %c4_i32 : i32
      %221 = vector.broadcast %220 : i32 to vector<8x1xi32>
      %222 = arith.cmpi slt, %221, %24 : vector<8x1xi32>
      %223 = vector.shape_cast %222 : vector<8x1xi1> to vector<8x1xi1>
      %224 = vector.broadcast %223 : vector<8x1xi1> to vector<8x128xi1>
      %225 = arith.select %224, %219, %185 : vector<8x128xi1>, vector<8x128xf32>
      %c5_i32 = arith.constant 5 : i32
      %226 = arith.index_cast %c5_i32 : i32 to index
      %c0_52 = arith.constant 0 : index
      %c0_53 = arith.constant 0 : index
      %227 = vector.load %arg13[%226, %c0_52, %c0_53] : memref<8x8x384xbf16, #tpu.memory_space<vmem>>, vector<1x8x384xbf16>
      %228 = vector.shape_cast %227 : vector<1x8x384xbf16> to vector<8x384xbf16>
      %229 = arith.extf %228 : vector<8x384xbf16> to vector<8x384xf32>
      %230 = arith.truncf %225 : vector<8x128xf32> to vector<8x128xbf16>
      %cst_54 = arith.constant dense<0.000000e+00> : vector<8x384xf32>
      %231 = tpu.matmul %230, %22, %cst_54 {dimension_numbers = #tpu.dot_dimension_numbers<[1], [0], [0], [1], [0, 0, 1, 1], [], []>} : vector<8x128xbf16>, vector<128x384xbf16>, vector<8x384xf32> -> vector<8x384xf32>
      %232 = vector.extract_strided_slice %229 {offsets = [0, 0], sizes = [8, 128], strides = [1, 1]} : vector<8x384xf32> to vector<8x128xf32>
      %233 = vector.extract_strided_slice %231 {offsets = [0, 0], sizes = [8, 128], strides = [1, 1]} : vector<8x384xf32> to vector<8x128xf32>
      %234 = arith.addf %232, %233 : vector<8x128xf32>
      %235 = arith.negf %234 : vector<8x128xf32>
      %236 = math.exp %235 : vector<8x128xf32>
      %cst_55 = arith.constant 1.000000e+00 : f32
      %237 = vector.broadcast %cst_55 : f32 to vector<8x128xf32>
      %238 = arith.addf %237, %236 : vector<8x128xf32>
      %239 = arith.divf %237, %238 : vector<8x128xf32>
      %240 = vector.extract_strided_slice %229 {offsets = [0, 128], sizes = [8, 128], strides = [1, 1]} : vector<8x384xf32> to vector<8x128xf32>
      %241 = vector.extract_strided_slice %231 {offsets = [0, 128], sizes = [8, 128], strides = [1, 1]} : vector<8x384xf32> to vector<8x128xf32>
      %242 = arith.addf %240, %241 : vector<8x128xf32>
      %243 = arith.negf %242 : vector<8x128xf32>
      %244 = math.exp %243 : vector<8x128xf32>
      %cst_56 = arith.constant 1.000000e+00 : f32
      %245 = vector.broadcast %cst_56 : f32 to vector<8x128xf32>
      %246 = arith.addf %245, %244 : vector<8x128xf32>
      %247 = arith.divf %245, %246 : vector<8x128xf32>
      %248 = vector.extract_strided_slice %229 {offsets = [0, 256], sizes = [8, 128], strides = [1, 1]} : vector<8x384xf32> to vector<8x128xf32>
      %249 = vector.extract_strided_slice %231 {offsets = [0, 256], sizes = [8, 128], strides = [1, 1]} : vector<8x384xf32> to vector<8x128xf32>
      %250 = vector.broadcast %23 : vector<1x128xf32> to vector<8x128xf32>
      %251 = arith.addf %249, %250 : vector<8x128xf32>
      %252 = arith.mulf %239, %251 : vector<8x128xf32>
      %253 = arith.addf %248, %252 : vector<8x128xf32>
      %254 = math.tanh %253 : vector<8x128xf32>
      %cst_57 = arith.constant 1.000000e+00 : f32
      %255 = vector.broadcast %cst_57 : f32 to vector<8x128xf32>
      %256 = arith.subf %255, %247 : vector<8x128xf32>
      %257 = arith.mulf %256, %254 : vector<8x128xf32>
      %258 = arith.mulf %247, %225 : vector<8x128xf32>
      %259 = arith.addf %257, %258 : vector<8x128xf32>
      %260 = arith.addi %0, %c5_i32 : i32
      %261 = vector.broadcast %260 : i32 to vector<8x1xi32>
      %262 = arith.cmpi slt, %261, %24 : vector<8x1xi32>
      %263 = vector.shape_cast %262 : vector<8x1xi1> to vector<8x1xi1>
      %264 = vector.broadcast %263 : vector<8x1xi1> to vector<8x128xi1>
      %265 = arith.select %264, %259, %225 : vector<8x128xi1>, vector<8x128xf32>
      %c6_i32 = arith.constant 6 : i32
      %266 = arith.index_cast %c6_i32 : i32 to index
      %c0_58 = arith.constant 0 : index
      %c0_59 = arith.constant 0 : index
      %267 = vector.load %arg13[%266, %c0_58, %c0_59] : memref<8x8x384xbf16, #tpu.memory_space<vmem>>, vector<1x8x384xbf16>
      %268 = vector.shape_cast %267 : vector<1x8x384xbf16> to vector<8x384xbf16>
      %269 = arith.extf %268 : vector<8x384xbf16> to vector<8x384xf32>
      %270 = arith.truncf %265 : vector<8x128xf32> to vector<8x128xbf16>
      %cst_60 = arith.constant dense<0.000000e+00> : vector<8x384xf32>
      %271 = tpu.matmul %270, %22, %cst_60 {dimension_numbers = #tpu.dot_dimension_numbers<[1], [0], [0], [1], [0, 0, 1, 1], [], []>} : vector<8x128xbf16>, vector<128x384xbf16>, vector<8x384xf32> -> vector<8x384xf32>
      %272 = vector.extract_strided_slice %269 {offsets = [0, 0], sizes = [8, 128], strides = [1, 1]} : vector<8x384xf32> to vector<8x128xf32>
      %273 = vector.extract_strided_slice %271 {offsets = [0, 0], sizes = [8, 128], strides = [1, 1]} : vector<8x384xf32> to vector<8x128xf32>
      %274 = arith.addf %272, %273 : vector<8x128xf32>
      %275 = arith.negf %274 : vector<8x128xf32>
      %276 = math.exp %275 : vector<8x128xf32>
      %cst_61 = arith.constant 1.000000e+00 : f32
      %277 = vector.broadcast %cst_61 : f32 to vector<8x128xf32>
      %278 = arith.addf %277, %276 : vector<8x128xf32>
      %279 = arith.divf %277, %278 : vector<8x128xf32>
      %280 = vector.extract_strided_slice %269 {offsets = [0, 128], sizes = [8, 128], strides = [1, 1]} : vector<8x384xf32> to vector<8x128xf32>
      %281 = vector.extract_strided_slice %271 {offsets = [0, 128], sizes = [8, 128], strides = [1, 1]} : vector<8x384xf32> to vector<8x128xf32>
      %282 = arith.addf %280, %281 : vector<8x128xf32>
      %283 = arith.negf %282 : vector<8x128xf32>
      %284 = math.exp %283 : vector<8x128xf32>
      %cst_62 = arith.constant 1.000000e+00 : f32
      %285 = vector.broadcast %cst_62 : f32 to vector<8x128xf32>
      %286 = arith.addf %285, %284 : vector<8x128xf32>
      %287 = arith.divf %285, %286 : vector<8x128xf32>
      %288 = vector.extract_strided_slice %269 {offsets = [0, 256], sizes = [8, 128], strides = [1, 1]} : vector<8x384xf32> to vector<8x128xf32>
      %289 = vector.extract_strided_slice %271 {offsets = [0, 256], sizes = [8, 128], strides = [1, 1]} : vector<8x384xf32> to vector<8x128xf32>
      %290 = vector.broadcast %23 : vector<1x128xf32> to vector<8x128xf32>
      %291 = arith.addf %289, %290 : vector<8x128xf32>
      %292 = arith.mulf %279, %291 : vector<8x128xf32>
      %293 = arith.addf %288, %292 : vector<8x128xf32>
      %294 = math.tanh %293 : vector<8x128xf32>
      %cst_63 = arith.constant 1.000000e+00 : f32
      %295 = vector.broadcast %cst_63 : f32 to vector<8x128xf32>
      %296 = arith.subf %295, %287 : vector<8x128xf32>
      %297 = arith.mulf %296, %294 : vector<8x128xf32>
      %298 = arith.mulf %287, %265 : vector<8x128xf32>
      %299 = arith.addf %297, %298 : vector<8x128xf32>
      %300 = arith.addi %0, %c6_i32 : i32
      %301 = vector.broadcast %300 : i32 to vector<8x1xi32>
      %302 = arith.cmpi slt, %301, %24 : vector<8x1xi32>
      %303 = vector.shape_cast %302 : vector<8x1xi1> to vector<8x1xi1>
      %304 = vector.broadcast %303 : vector<8x1xi1> to vector<8x128xi1>
      %305 = arith.select %304, %299, %265 : vector<8x128xi1>, vector<8x128xf32>
      %c7_i32 = arith.constant 7 : i32
      %306 = arith.index_cast %c7_i32 : i32 to index
      %c0_64 = arith.constant 0 : index
      %c0_65 = arith.constant 0 : index
      %307 = vector.load %arg13[%306, %c0_64, %c0_65] : memref<8x8x384xbf16, #tpu.memory_space<vmem>>, vector<1x8x384xbf16>
      %308 = vector.shape_cast %307 : vector<1x8x384xbf16> to vector<8x384xbf16>
      %309 = arith.extf %308 : vector<8x384xbf16> to vector<8x384xf32>
      %310 = arith.truncf %305 : vector<8x128xf32> to vector<8x128xbf16>
      %cst_66 = arith.constant dense<0.000000e+00> : vector<8x384xf32>
      %311 = tpu.matmul %310, %22, %cst_66 {dimension_numbers = #tpu.dot_dimension_numbers<[1], [0], [0], [1], [0, 0, 1, 1], [], []>} : vector<8x128xbf16>, vector<128x384xbf16>, vector<8x384xf32> -> vector<8x384xf32>
      %312 = vector.extract_strided_slice %309 {offsets = [0, 0], sizes = [8, 128], strides = [1, 1]} : vector<8x384xf32> to vector<8x128xf32>
      %313 = vector.extract_strided_slice %311 {offsets = [0, 0], sizes = [8, 128], strides = [1, 1]} : vector<8x384xf32> to vector<8x128xf32>
      %314 = arith.addf %312, %313 : vector<8x128xf32>
      %315 = arith.negf %314 : vector<8x128xf32>
      %316 = math.exp %315 : vector<8x128xf32>
      %cst_67 = arith.constant 1.000000e+00 : f32
      %317 = vector.broadcast %cst_67 : f32 to vector<8x128xf32>
      %318 = arith.addf %317, %316 : vector<8x128xf32>
      %319 = arith.divf %317, %318 : vector<8x128xf32>
      %320 = vector.extract_strided_slice %309 {offsets = [0, 128], sizes = [8, 128], strides = [1, 1]} : vector<8x384xf32> to vector<8x128xf32>
      %321 = vector.extract_strided_slice %311 {offsets = [0, 128], sizes = [8, 128], strides = [1, 1]} : vector<8x384xf32> to vector<8x128xf32>
      %322 = arith.addf %320, %321 : vector<8x128xf32>
      %323 = arith.negf %322 : vector<8x128xf32>
      %324 = math.exp %323 : vector<8x128xf32>
      %cst_68 = arith.constant 1.000000e+00 : f32
      %325 = vector.broadcast %cst_68 : f32 to vector<8x128xf32>
      %326 = arith.addf %325, %324 : vector<8x128xf32>
      %327 = arith.divf %325, %326 : vector<8x128xf32>
      %328 = vector.extract_strided_slice %309 {offsets = [0, 256], sizes = [8, 128], strides = [1, 1]} : vector<8x384xf32> to vector<8x128xf32>
      %329 = vector.extract_strided_slice %311 {offsets = [0, 256], sizes = [8, 128], strides = [1, 1]} : vector<8x384xf32> to vector<8x128xf32>
      %330 = vector.broadcast %23 : vector<1x128xf32> to vector<8x128xf32>
      %331 = arith.addf %329, %330 : vector<8x128xf32>
      %332 = arith.mulf %319, %331 : vector<8x128xf32>
      %333 = arith.addf %328, %332 : vector<8x128xf32>
      %334 = math.tanh %333 : vector<8x128xf32>
      %cst_69 = arith.constant 1.000000e+00 : f32
      %335 = vector.broadcast %cst_69 : f32 to vector<8x128xf32>
      %336 = arith.subf %335, %327 : vector<8x128xf32>
      %337 = arith.mulf %336, %334 : vector<8x128xf32>
      %338 = arith.mulf %327, %305 : vector<8x128xf32>
      %339 = arith.addf %337, %338 : vector<8x128xf32>
      %340 = arith.addi %0, %c7_i32 : i32
      %341 = vector.broadcast %340 : i32 to vector<8x1xi32>
      %342 = arith.cmpi slt, %341, %24 : vector<8x1xi32>
      %343 = vector.shape_cast %342 : vector<8x1xi1> to vector<8x1xi1>
      %344 = vector.broadcast %343 : vector<8x1xi1> to vector<8x128xi1>
      %345 = arith.select %344, %339, %305 : vector<8x128xi1>, vector<8x128xf32>
      %c8_i32_70 = arith.constant 8 : i32
      %c0_71 = arith.constant 0 : index
      %c0_72 = arith.constant 0 : index
      %346 = vector.load %arg12[%c0_71, %c0_72] : memref<8x128xf32, #tpu.memory_space<vmem>>, vector<8x128xf32>
      tpu.vector_store %arg12[%c0_71, %c0_72], %345 {strides = array<i32>} : memref<8x128xf32, #tpu.memory_space<vmem>>, vector<8x128xf32>,
    } else {
    }
    %c0_i32_2 = arith.constant 0 : i32
    %9 = arith.cmpi eq, %arg1, %c0_i32_2 : i32
    %10 = arith.extui %9 : i1 to i32
    %c0_i32_3 = arith.constant 0 : i32
    %11 = arith.cmpi ne, %10, %c0_i32_3 : i32
    scf.if %11 {
      %c0 = arith.constant 0 : index
      %c0_4 = arith.constant 0 : index
      %12 = vector.load %arg12[%c0, %c0_4] : memref<8x128xf32, #tpu.memory_space<vmem>>, vector<8x128xf32>
      %13 = arith.truncf %12 : vector<8x128xf32> to vector<8x128xbf16>
      %c0_5 = arith.constant 0 : index
      %c0_6 = arith.constant 0 : index
      %14 = vector.load %arg9[%c0_5, %c0_6] : memref<128x128xbf16, #tpu.memory_space<vmem>>, vector<128x128xbf16>
      %cst = arith.constant dense<0.000000e+00> : vector<8x128xf32>
      %15 = tpu.matmul %13, %14, %cst {dimension_numbers = #tpu.dot_dimension_numbers<[1], [0], [0], [1], [0, 0, 1, 1], [], []>} : vector<8x128xbf16>, vector<128x128xbf16>, vector<8x128xf32> -> vector<8x128xf32>
      %c0_7 = arith.constant 0 : index
      %c0_8 = arith.constant 0 : index
      %16 = vector.load %arg10[%c0_7, %c0_8] : memref<1x128xf32, #tpu.memory_space<vmem>>, vector<1x128xf32>
      %17 = vector.broadcast %16 : vector<1x128xf32> to vector<8x128xf32>
      %18 = arith.addf %15, %17 : vector<8x128xf32>
      %19 = arith.mulf %18, %18 : vector<8x128xf32>
      %cst_9 = arith.constant dense<0.000000e+00> : vector<8xf32>
      %20 = vector.multi_reduction <add>, %19, %cst_9 [1] : vector<8x128xf32> to vector<8xf32>
      %21 = vector.shape_cast %20 : vector<8xf32> to vector<8x1xf32>
      %22 = math.sqrt %21 : vector<8x1xf32>
      %cst_10 = arith.constant 9.99999971E-10 : f32
      %23 = vector.broadcast %cst_10 : f32 to vector<8x1xf32>
      %24 = arith.addf %22, %23 : vector<8x1xf32>
      %25 = tpu.reciprocal %24 {approx = true} : vector<8x1xf32> -> vector<8x1xf32>
      %26 = vector.broadcast %25 : vector<8x1xf32> to vector<8x128xf32>
      %27 = arith.mulf %18, %26 : vector<8x128xf32>
      %c0_11 = arith.constant 0 : index
      %c0_12 = arith.constant 0 : index
      %28 = vector.load %arg4[%c0_11, %c0_12] : memref<8x1xi32, #tpu.memory_space<vmem>>, vector<8x1xi32>
      %c0_i32_13 = arith.constant 0 : i32
      %29 = vector.broadcast %c0_i32_13 : i32 to vector<8x1xi32>
      %30 = arith.cmpi sgt, %28, %29 : vector<8x1xi32>
      %cst_14 = arith.constant 0.000000e+00 : f32
      %31 = vector.shape_cast %30 : vector<8x1xi1> to vector<8x1xi1>
      %32 = vector.broadcast %31 : vector<8x1xi1> to vector<8x128xi1>
      %33 = vector.broadcast %cst_14 : f32 to vector<8x128xf32>
      %34 = arith.select %32, %27, %33 : vector<8x128xi1>, vector<8x128xf32>
      %c0_15 = arith.constant 0 : index
      %c0_16 = arith.constant 0 : index
      %35 = vector.load %arg11[%c0_15, %c0_16] : memref<8x128xf32, #tpu.memory_space<vmem>>, vector<8x128xf32>
      tpu.vector_store %arg11[%c0_15, %c0_16], %34 {strides = array<i32>} : memref<8x128xf32, #tpu.memory_space<vmem>>, vector<8x128xf32>,
    } else {
    }
    return
  }
  func.func @transform_0(%arg0: i32, %arg1: i32, %arg2: memref<2xi32, #tpu.memory_space<smem>>) -> (i32, i32, i32) {
    %c0_i32 = arith.constant 0 : i32
    %c0_i32_0 = arith.constant 0 : i32
    return %arg1, %arg0, %c0_i32 : i32, i32, i32
  }
  func.func @transform_1(%arg0: i32, %arg1: i32, %arg2: memref<2xi32, #tpu.memory_space<smem>>) -> (i32, i32) {
    %c0_i32 = arith.constant 0 : i32
    %c0_i32_0 = arith.constant 0 : i32
    return %arg0, %c0_i32 : i32, i32
  }
  func.func @transform_2(%arg0: i32, %arg1: i32, %arg2: memref<2xi32, #tpu.memory_space<smem>>) -> (i32, i32) {
    %c0_i32 = arith.constant 0 : i32
    %c0_i32_0 = arith.constant 0 : i32
    %c0_i32_1 = arith.constant 0 : i32
    return %c0_i32, %c0_i32_0 : i32, i32
  }
  func.func @transform_3(%arg0: i32, %arg1: i32, %arg2: memref<2xi32, #tpu.memory_space<smem>>) -> (i32, i32) {
    %c0_i32 = arith.constant 0 : i32
    %c0_i32_0 = arith.constant 0 : i32
    %c0_i32_1 = arith.constant 0 : i32
    return %c0_i32, %c0_i32_0 : i32, i32
  }
  func.func @transform_4(%arg0: i32, %arg1: i32, %arg2: memref<2xi32, #tpu.memory_space<smem>>) -> (i32, i32) {
    %c0_i32 = arith.constant 0 : i32
    %c0_i32_0 = arith.constant 0 : i32
    %c0_i32_1 = arith.constant 0 : i32
    return %c0_i32, %c0_i32_0 : i32, i32
  }
  func.func @transform_5(%arg0: i32, %arg1: i32, %arg2: memref<2xi32, #tpu.memory_space<smem>>) -> (i32, i32) {
    %c0_i32 = arith.constant 0 : i32
    %c0_i32_0 = arith.constant 0 : i32
    %c0_i32_1 = arith.constant 0 : i32
    return %c0_i32, %c0_i32_0 : i32, i32
  }
  func.func @transform_6(%arg0: i32, %arg1: i32, %arg2: memref<2xi32, #tpu.memory_space<smem>>) -> (i32, i32) {
    %c0_i32 = arith.constant 0 : i32
    %c0_i32_0 = arith.constant 0 : i32
    %c0_i32_1 = arith.constant 0 : i32
    return %c0_i32, %c0_i32_0 : i32, i32
  }
  func.func @transform_7(%arg0: i32, %arg1: i32, %arg2: memref<2xi32, #tpu.memory_space<smem>>) -> (i32, i32) {
    %c0_i32 = arith.constant 0 : i32
    %c0_i32_0 = arith.constant 0 : i32
    %c0_i32_1 = arith.constant 0 : i32
    return %c0_i32, %c0_i32_0 : i32, i32
  }
  func.func @transform_8(%arg0: i32, %arg1: i32, %arg2: memref<2xi32, #tpu.memory_space<smem>>) -> (i32, i32) {
    %c0_i32 = arith.constant 0 : i32
    %c0_i32_0 = arith.constant 0 : i32
    return %arg0, %c0_i32 : i32, i32
  }
}

module attributes {stable_mosaic.version = 11 : i64} {
  func.func @_rnn_listener_kernel(%arg0: i32, %arg1: i32, %arg2: memref<2xi32, #tpu.memory_space<smem>>, %arg3: memref<8x8x128xbf16, #tpu.memory_space<vmem>>, %arg4: memref<8x1xi32, #tpu.memory_space<vmem>>, %arg5: memref<128x384xbf16, #tpu.memory_space<vmem>>, %arg6: memref<128x384xbf16, #tpu.memory_space<vmem>>, %arg7: memref<1x384xf32, #tpu.memory_space<vmem>>, %arg8: memref<1x128xf32, #tpu.memory_space<vmem>>, %arg9: memref<128x128xbf16, #tpu.memory_space<vmem>>, %arg10: memref<1x128xf32, #tpu.memory_space<vmem>>, %arg11: memref<8x128xf32, #tpu.memory_space<vmem>>, %arg12: memref<8x128xf32, #tpu.memory_space<vmem>>, %arg13: memref<8x8x384xbf16, #tpu.memory_space<vmem>>) attributes {dimension_semantics = [#tpu.dimension_semantics<parallel>, #tpu.dimension_semantics<arbitrary>], iteration_bounds = array<i64: 2, 1>, scalar_prefetch = 1 : i64, scratch_operands = 2 : i64, tpu.core_type = #tpu.core_type<tc>, window_params = [{transform_indices = @transform_0, window_bounds = array<i64: 8, 8, 128>}, {transform_indices = @transform_1, window_bounds = array<i64: 8, 1>}, {pipeline_mode = #tpu.pipeline_mode<synchronous>, transform_indices = @transform_2, window_bounds = array<i64: 128, 384>}, {pipeline_mode = #tpu.pipeline_mode<synchronous>, transform_indices = @transform_3, window_bounds = array<i64: 128, 384>}, {pipeline_mode = #tpu.pipeline_mode<synchronous>, transform_indices = @transform_4, window_bounds = array<i64: 1, 384>}, {pipeline_mode = #tpu.pipeline_mode<synchronous>, transform_indices = @transform_5, window_bounds = array<i64: 1, 128>}, {pipeline_mode = #tpu.pipeline_mode<synchronous>, transform_indices = @transform_6, window_bounds = array<i64: 128, 128>}, {pipeline_mode = #tpu.pipeline_mode<synchronous>, transform_indices = @transform_7, window_bounds = array<i64: 1, 128>}, {transform_indices = @transform_8, window_bounds = array<i64: 8, 128>}]} {
    %c8_i32 = arith.constant 8 : i32
    %0 = arith.muli %arg1, %c8_i32 : i32
    %c0_i32 = arith.constant 0 : i32
    %1 = arith.cmpi eq, %arg1, %c0_i32 : i32
    %2 = arith.extui %1 : i1 to i32
    %c0_i32_0 = arith.constant 0 : i32
    %3 = arith.cmpi ne, %2, %c0_i32_0 : i32
    scf.if %3 {
      %cst = arith.constant 0.000000e+00 : f32
      %12 = vector.broadcast %cst : f32 to vector<8x128xf32>
      %c0 = arith.constant 0 : index
      %c0_4 = arith.constant 0 : index
      %13 = vector.load %arg12[%c0, %c0_4] : memref<8x128xf32, #tpu.memory_space<vmem>>, vector<8x128xf32>
      tpu.vector_store %arg12[%c0, %c0_4], %12 {strides = array<i32>} : memref<8x128xf32, #tpu.memory_space<vmem>>, vector<8x128xf32>,
    } else {
    }
    %4 = arith.index_cast %arg0 : i32 to index
    %5 = memref.load %arg2[%4] : memref<2xi32, #tpu.memory_space<smem>>
    %6 = arith.cmpi slt, %0, %5 : i32
    %7 = arith.extui %6 : i1 to i32
    %c0_i32_1 = arith.constant 0 : i32
    %8 = arith.cmpi ne, %7, %c0_i32_1 : i32
    scf.if %8 {
      %c0 = arith.constant 0 : index
      %c0_4 = arith.constant 0 : index
      %c0_5 = arith.constant 0 : index
      %12 = vector.load %arg3[%c0, %c0_4, %c0_5] : memref<8x8x128xbf16, #tpu.memory_space<vmem>>, vector<8x8x128xbf16>
      %13 = vector.shape_cast %12 : vector<8x8x128xbf16> to vector<64x128xbf16>
      %c0_6 = arith.constant 0 : index
      %c0_7 = arith.constant 0 : index
      %14 = vector.load %arg5[%c0_6, %c0_7] : memref<128x384xbf16, #tpu.memory_space<vmem>>, vector<128x384xbf16>
      %cst = arith.constant dense<0.000000e+00> : vector<64x384xf32>
      %15 = tpu.matmul %13, %14, %cst {dimension_numbers = #tpu.dot_dimension_numbers<[1], [0], [0], [1], [0, 0, 1, 1], [], []>} : vector<64x128xbf16>, vector<128x384xbf16>, vector<64x384xf32> -> vector<64x384xf32>
      %c0_8 = arith.constant 0 : index
      %c0_9 = arith.constant 0 : index
      %16 = vector.load %arg7[%c0_8, %c0_9] : memref<1x384xf32, #tpu.memory_space<vmem>>, vector<1x384xf32>
      %17 = vector.broadcast %16 : vector<1x384xf32> to vector<64x384xf32>
      %18 = arith.addf %15, %17 : vector<64x384xf32>
      %19 = vector.shape_cast %18 : vector<64x384xf32> to vector<8x8x384xf32>
      %20 = arith.truncf %19 : vector<8x8x384xf32> to vector<8x8x384xbf16>
      %c0_10 = arith.constant 0 : index
      %c0_11 = arith.constant 0 : index
      %c0_12 = arith.constant 0 : index
      %21 = vector.load %arg13[%c0_10, %c0_11, %c0_12] : memref<8x8x384xbf16, #tpu.memory_space<vmem>>, vector<8x8x384xbf16>
      tpu.vector_store %arg13[%c0_10, %c0_11, %c0_12], %20 {strides = array<i32>} : memref<8x8x384xbf16, #tpu.memory_space<vmem>>, vector<8x8x384xbf16>,
      %c0_13 = arith.constant 0 : index
      %c0_14 = arith.constant 0 : index
      %22 = vector.load %arg6[%c0_13, %c0_14] : memref<128x384xbf16, #tpu.memory_space<vmem>>, vector<128x384xbf16>
      %c0_15 = arith.constant 0 : index
      %c0_16 = arith.constant 0 : index
      %23 = vector.load %arg8[%c0_15, %c0_16] : memref<1x128xf32, #tpu.memory_space<vmem>>, vector<1x128xf32>
      %c0_17 = arith.constant 0 : index
      %c0_18 = arith.constant 0 : index
      %24 = vector.load %arg4[%c0_17, %c0_18] : memref<8x1xi32, #tpu.memory_space<vmem>>, vector<8x1xi32>
      %c0_19 = arith.constant 0 : index
      %c0_20 = arith.constant 0 : index
      %25 = vector.load %arg12[%c0_19, %c0_20] : memref<8x128xf32, #tpu.memory_space<vmem>>, vector<8x128xf32>
      %c0_i32_21 = arith.constant 0 : i32
      %26 = arith.index_cast %c0_i32_21 : i32 to index
      %c0_22 = arith.constant 0 : index
      %c0_23 = arith.constant 0 : index
      %27 = vector.load %arg13[%26, %c0_22, %c0_23] : memref<8x8x384xbf16, #tpu.memory_space<vmem>>, vector<1x8x384xbf16>
      %28 = vector.shape_cast %27 : vector<1x8x384xbf16> to vector<8x384xbf16>
      %29 = arith.extf %28 : vector<8x384xbf16> to vector<8x384xf32>
      %30 = arith.truncf %25 : vector<8x128xf32> to vector<8x128xbf16>
      %cst_24 = arith.constant dense<0.000000e+00> : vector<8x384xf32>
      %31 = tpu.matmul %30, %22, %cst_24 {dimension_numbers = #tpu.dot_dimension_numbers<[1], [0], [0], [1], [0, 0, 1, 1], [], []>} : vector<8x128xbf16>, vector<128x384xbf16>, vector<8x384xf32> -> vector<8x384xf32>
      %32 = vector.extract_strided_slice %29 {offsets = [0, 0], sizes = [8, 128], strides = [1, 1]} : vector<8x384xf32> to vector<8x128xf32>
      %33 = vector.extract_strided_slice %31 {offsets = [0, 0], sizes = [8, 128], strides = [1, 1]} : vector<8x384xf32> to vector<8x128xf32>
      %34 = arith.addf %32, %33 : vector<8x128xf32>
      %35 = arith.negf %34 : vector<8x128xf32>
      %36 = math.exp %35 : vector<8x128xf32>
      %cst_25 = arith.constant 1.000000e+00 : f32
      %37 = vector.broadcast %cst_25 : f32 to vector<8x128xf32>
      %38 = arith.addf %37, %36 : vector<8x128xf32>
      %39 = arith.divf %37, %38 : vector<8x128xf32>
      %40 = vector.extract_strided_slice %29 {offsets = [0, 128], sizes = [8, 128], strides = [1, 1]} : vector<8x384xf32> to vector<8x128xf32>
      %41 = vector.extract_strided_slice %31 {offsets = [0, 128], sizes = [8, 128], strides = [1, 1]} : vector<8x384xf32> to vector<8x128xf32>
      %42 = arith.addf %40, %41 : vector<8x128xf32>
      %43 = arith.negf %42 : vector<8x128xf32>
      %44 = math.exp %43 : vector<8x128xf32>
      %cst_26 = arith.constant 1.000000e+00 : f32
      %45 = vector.broadcast %cst_26 : f32 to vector<8x128xf32>
      %46 = arith.addf %45, %44 : vector<8x128xf32>
      %47 = arith.divf %45, %46 : vector<8x128xf32>
      %48 = vector.extract_strided_slice %29 {offsets = [0, 256], sizes = [8, 128], strides = [1, 1]} : vector<8x384xf32> to vector<8x128xf32>
      %49 = vector.extract_strided_slice %31 {offsets = [0, 256], sizes = [8, 128], strides = [1, 1]} : vector<8x384xf32> to vector<8x128xf32>
      %50 = vector.broadcast %23 : vector<1x128xf32> to vector<8x128xf32>
      %51 = arith.addf %49, %50 : vector<8x128xf32>
      %52 = arith.mulf %39, %51 : vector<8x128xf32>
      %53 = arith.addf %48, %52 : vector<8x128xf32>
      %54 = math.tanh %53 : vector<8x128xf32>
      %cst_27 = arith.constant 1.000000e+00 : f32
      %55 = vector.broadcast %cst_27 : f32 to vector<8x128xf32>
      %56 = arith.subf %55, %47 : vector<8x128xf32>
      %57 = arith.mulf %56, %54 : vector<8x128xf32>
      %58 = arith.mulf %47, %25 : vector<8x128xf32>
      %59 = arith.addf %57, %58 : vector<8x128xf32>
      %60 = arith.addi %0, %c0_i32_21 : i32
      %61 = vector.broadcast %60 : i32 to vector<8x1xi32>
      %62 = arith.cmpi slt, %61, %24 : vector<8x1xi32>
      %63 = vector.shape_cast %62 : vector<8x1xi1> to vector<8x1xi1>
      %64 = vector.broadcast %63 : vector<8x1xi1> to vector<8x128xi1>
      %65 = arith.select %64, %59, %25 : vector<8x128xi1>, vector<8x128xf32>
      %c1_i32 = arith.constant 1 : i32
      %66 = arith.index_cast %c1_i32 : i32 to index
      %c0_28 = arith.constant 0 : index
      %c0_29 = arith.constant 0 : index
      %67 = vector.load %arg13[%66, %c0_28, %c0_29] : memref<8x8x384xbf16, #tpu.memory_space<vmem>>, vector<1x8x384xbf16>
      %68 = vector.shape_cast %67 : vector<1x8x384xbf16> to vector<8x384xbf16>
      %69 = arith.extf %68 : vector<8x384xbf16> to vector<8x384xf32>
      %70 = arith.truncf %65 : vector<8x128xf32> to vector<8x128xbf16>
      %cst_30 = arith.constant dense<0.000000e+00> : vector<8x384xf32>
      %71 = tpu.matmul %70, %22, %cst_30 {dimension_numbers = #tpu.dot_dimension_numbers<[1], [0], [0], [1], [0, 0, 1, 1], [], []>} : vector<8x128xbf16>, vector<128x384xbf16>, vector<8x384xf32> -> vector<8x384xf32>
      %72 = vector.extract_strided_slice %69 {offsets = [0, 0], sizes = [8, 128], strides = [1, 1]} : vector<8x384xf32> to vector<8x128xf32>
      %73 = vector.extract_strided_slice %71 {offsets = [0, 0], sizes = [8, 128], strides = [1, 1]} : vector<8x384xf32> to vector<8x128xf32>
      %74 = arith.addf %72, %73 : vector<8x128xf32>
      %75 = arith.negf %74 : vector<8x128xf32>
      %76 = math.exp %75 : vector<8x128xf32>
      %cst_31 = arith.constant 1.000000e+00 : f32
      %77 = vector.broadcast %cst_31 : f32 to vector<8x128xf32>
      %78 = arith.addf %77, %76 : vector<8x128xf32>
      %79 = arith.divf %77, %78 : vector<8x128xf32>
      %80 = vector.extract_strided_slice %69 {offsets = [0, 128], sizes = [8, 128], strides = [1, 1]} : vector<8x384xf32> to vector<8x128xf32>
      %81 = vector.extract_strided_slice %71 {offsets = [0, 128], sizes = [8, 128], strides = [1, 1]} : vector<8x384xf32> to vector<8x128xf32>
      %82 = arith.addf %80, %81 : vector<8x128xf32>
      %83 = arith.negf %82 : vector<8x128xf32>
      %84 = math.exp %83 : vector<8x128xf32>
      %cst_32 = arith.constant 1.000000e+00 : f32
      %85 = vector.broadcast %cst_32 : f32 to vector<8x128xf32>
      %86 = arith.addf %85, %84 : vector<8x128xf32>
      %87 = arith.divf %85, %86 : vector<8x128xf32>
      %88 = vector.extract_strided_slice %69 {offsets = [0, 256], sizes = [8, 128], strides = [1, 1]} : vector<8x384xf32> to vector<8x128xf32>
      %89 = vector.extract_strided_slice %71 {offsets = [0, 256], sizes = [8, 128], strides = [1, 1]} : vector<8x384xf32> to vector<8x128xf32>
      %90 = vector.broadcast %23 : vector<1x128xf32> to vector<8x128xf32>
      %91 = arith.addf %89, %90 : vector<8x128xf32>
      %92 = arith.mulf %79, %91 : vector<8x128xf32>
      %93 = arith.addf %88, %92 : vector<8x128xf32>
      %94 = math.tanh %93 : vector<8x128xf32>
      %cst_33 = arith.constant 1.000000e+00 : f32
      %95 = vector.broadcast %cst_33 : f32 to vector<8x128xf32>
      %96 = arith.subf %95, %87 : vector<8x128xf32>
      %97 = arith.mulf %96, %94 : vector<8x128xf32>
      %98 = arith.mulf %87, %65 : vector<8x128xf32>
      %99 = arith.addf %97, %98 : vector<8x128xf32>
      %100 = arith.addi %0, %c1_i32 : i32
      %101 = vector.broadcast %100 : i32 to vector<8x1xi32>
      %102 = arith.cmpi slt, %101, %24 : vector<8x1xi32>
      %103 = vector.shape_cast %102 : vector<8x1xi1> to vector<8x1xi1>
      %104 = vector.broadcast %103 : vector<8x1xi1> to vector<8x128xi1>
      %105 = arith.select %104, %99, %65 : vector<8x128xi1>, vector<8x128xf32>
      %c2_i32 = arith.constant 2 : i32
      %106 = arith.index_cast %c2_i32 : i32 to index
      %c0_34 = arith.constant 0 : index
      %c0_35 = arith.constant 0 : index
      %107 = vector.load %arg13[%106, %c0_34, %c0_35] : memref<8x8x384xbf16, #tpu.memory_space<vmem>>, vector<1x8x384xbf16>
      %108 = vector.shape_cast %107 : vector<1x8x384xbf16> to vector<8x384xbf16>
      %109 = arith.extf %108 : vector<8x384xbf16> to vector<8x384xf32>
      %110 = arith.truncf %105 : vector<8x128xf32> to vector<8x128xbf16>
      %cst_36 = arith.constant dense<0.000000e+00> : vector<8x384xf32>
      %111 = tpu.matmul %110, %22, %cst_36 {dimension_numbers = #tpu.dot_dimension_numbers<[1], [0], [0], [1], [0, 0, 1, 1], [], []>} : vector<8x128xbf16>, vector<128x384xbf16>, vector<8x384xf32> -> vector<8x384xf32>
      %112 = vector.extract_strided_slice %109 {offsets = [0, 0], sizes = [8, 128], strides = [1, 1]} : vector<8x384xf32> to vector<8x128xf32>
      %113 = vector.extract_strided_slice %111 {offsets = [0, 0], sizes = [8, 128], strides = [1, 1]} : vector<8x384xf32> to vector<8x128xf32>
      %114 = arith.addf %112, %113 : vector<8x128xf32>
      %115 = arith.negf %114 : vector<8x128xf32>
      %116 = math.exp %115 : vector<8x128xf32>
      %cst_37 = arith.constant 1.000000e+00 : f32
      %117 = vector.broadcast %cst_37 : f32 to vector<8x128xf32>
      %118 = arith.addf %117, %116 : vector<8x128xf32>
      %119 = arith.divf %117, %118 : vector<8x128xf32>
      %120 = vector.extract_strided_slice %109 {offsets = [0, 128], sizes = [8, 128], strides = [1, 1]} : vector<8x384xf32> to vector<8x128xf32>
      %121 = vector.extract_strided_slice %111 {offsets = [0, 128], sizes = [8, 128], strides = [1, 1]} : vector<8x384xf32> to vector<8x128xf32>
      %122 = arith.addf %120, %121 : vector<8x128xf32>
      %123 = arith.negf %122 : vector<8x128xf32>
      %124 = math.exp %123 : vector<8x128xf32>
      %cst_38 = arith.constant 1.000000e+00 : f32
      %125 = vector.broadcast %cst_38 : f32 to vector<8x128xf32>
      %126 = arith.addf %125, %124 : vector<8x128xf32>
      %127 = arith.divf %125, %126 : vector<8x128xf32>
      %128 = vector.extract_strided_slice %109 {offsets = [0, 256], sizes = [8, 128], strides = [1, 1]} : vector<8x384xf32> to vector<8x128xf32>
      %129 = vector.extract_strided_slice %111 {offsets = [0, 256], sizes = [8, 128], strides = [1, 1]} : vector<8x384xf32> to vector<8x128xf32>
      %130 = vector.broadcast %23 : vector<1x128xf32> to vector<8x128xf32>
      %131 = arith.addf %129, %130 : vector<8x128xf32>
      %132 = arith.mulf %119, %131 : vector<8x128xf32>
      %133 = arith.addf %128, %132 : vector<8x128xf32>
      %134 = math.tanh %133 : vector<8x128xf32>
      %cst_39 = arith.constant 1.000000e+00 : f32
      %135 = vector.broadcast %cst_39 : f32 to vector<8x128xf32>
      %136 = arith.subf %135, %127 : vector<8x128xf32>
      %137 = arith.mulf %136, %134 : vector<8x128xf32>
      %138 = arith.mulf %127, %105 : vector<8x128xf32>
      %139 = arith.addf %137, %138 : vector<8x128xf32>
      %140 = arith.addi %0, %c2_i32 : i32
      %141 = vector.broadcast %140 : i32 to vector<8x1xi32>
      %142 = arith.cmpi slt, %141, %24 : vector<8x1xi32>
      %143 = vector.shape_cast %142 : vector<8x1xi1> to vector<8x1xi1>
      %144 = vector.broadcast %143 : vector<8x1xi1> to vector<8x128xi1>
      %145 = arith.select %144, %139, %105 : vector<8x128xi1>, vector<8x128xf32>
      %c3_i32 = arith.constant 3 : i32
      %146 = arith.index_cast %c3_i32 : i32 to index
      %c0_40 = arith.constant 0 : index
      %c0_41 = arith.constant 0 : index
      %147 = vector.load %arg13[%146, %c0_40, %c0_41] : memref<8x8x384xbf16, #tpu.memory_space<vmem>>, vector<1x8x384xbf16>
      %148 = vector.shape_cast %147 : vector<1x8x384xbf16> to vector<8x384xbf16>
      %149 = arith.extf %148 : vector<8x384xbf16> to vector<8x384xf32>
      %150 = arith.truncf %145 : vector<8x128xf32> to vector<8x128xbf16>
      %cst_42 = arith.constant dense<0.000000e+00> : vector<8x384xf32>
      %151 = tpu.matmul %150, %22, %cst_42 {dimension_numbers = #tpu.dot_dimension_numbers<[1], [0], [0], [1], [0, 0, 1, 1], [], []>} : vector<8x128xbf16>, vector<128x384xbf16>, vector<8x384xf32> -> vector<8x384xf32>
      %152 = vector.extract_strided_slice %149 {offsets = [0, 0], sizes = [8, 128], strides = [1, 1]} : vector<8x384xf32> to vector<8x128xf32>
      %153 = vector.extract_strided_slice %151 {offsets = [0, 0], sizes = [8, 128], strides = [1, 1]} : vector<8x384xf32> to vector<8x128xf32>
      %154 = arith.addf %152, %153 : vector<8x128xf32>
      %155 = arith.negf %154 : vector<8x128xf32>
      %156 = math.exp %155 : vector<8x128xf32>
      %cst_43 = arith.constant 1.000000e+00 : f32
      %157 = vector.broadcast %cst_43 : f32 to vector<8x128xf32>
      %158 = arith.addf %157, %156 : vector<8x128xf32>
      %159 = arith.divf %157, %158 : vector<8x128xf32>
      %160 = vector.extract_strided_slice %149 {offsets = [0, 128], sizes = [8, 128], strides = [1, 1]} : vector<8x384xf32> to vector<8x128xf32>
      %161 = vector.extract_strided_slice %151 {offsets = [0, 128], sizes = [8, 128], strides = [1, 1]} : vector<8x384xf32> to vector<8x128xf32>
      %162 = arith.addf %160, %161 : vector<8x128xf32>
      %163 = arith.negf %162 : vector<8x128xf32>
      %164 = math.exp %163 : vector<8x128xf32>
      %cst_44 = arith.constant 1.000000e+00 : f32
      %165 = vector.broadcast %cst_44 : f32 to vector<8x128xf32>
      %166 = arith.addf %165, %164 : vector<8x128xf32>
      %167 = arith.divf %165, %166 : vector<8x128xf32>
      %168 = vector.extract_strided_slice %149 {offsets = [0, 256], sizes = [8, 128], strides = [1, 1]} : vector<8x384xf32> to vector<8x128xf32>
      %169 = vector.extract_strided_slice %151 {offsets = [0, 256], sizes = [8, 128], strides = [1, 1]} : vector<8x384xf32> to vector<8x128xf32>
      %170 = vector.broadcast %23 : vector<1x128xf32> to vector<8x128xf32>
      %171 = arith.addf %169, %170 : vector<8x128xf32>
      %172 = arith.mulf %159, %171 : vector<8x128xf32>
      %173 = arith.addf %168, %172 : vector<8x128xf32>
      %174 = math.tanh %173 : vector<8x128xf32>
      %cst_45 = arith.constant 1.000000e+00 : f32
      %175 = vector.broadcast %cst_45 : f32 to vector<8x128xf32>
      %176 = arith.subf %175, %167 : vector<8x128xf32>
      %177 = arith.mulf %176, %174 : vector<8x128xf32>
      %178 = arith.mulf %167, %145 : vector<8x128xf32>
      %179 = arith.addf %177, %178 : vector<8x128xf32>
      %180 = arith.addi %0, %c3_i32 : i32
      %181 = vector.broadcast %180 : i32 to vector<8x1xi32>
      %182 = arith.cmpi slt, %181, %24 : vector<8x1xi32>
      %183 = vector.shape_cast %182 : vector<8x1xi1> to vector<8x1xi1>
      %184 = vector.broadcast %183 : vector<8x1xi1> to vector<8x128xi1>
      %185 = arith.select %184, %179, %145 : vector<8x128xi1>, vector<8x128xf32>
      %c4_i32 = arith.constant 4 : i32
      %186 = arith.index_cast %c4_i32 : i32 to index
      %c0_46 = arith.constant 0 : index
      %c0_47 = arith.constant 0 : index
      %187 = vector.load %arg13[%186, %c0_46, %c0_47] : memref<8x8x384xbf16, #tpu.memory_space<vmem>>, vector<1x8x384xbf16>
      %188 = vector.shape_cast %187 : vector<1x8x384xbf16> to vector<8x384xbf16>
      %189 = arith.extf %188 : vector<8x384xbf16> to vector<8x384xf32>
      %190 = arith.truncf %185 : vector<8x128xf32> to vector<8x128xbf16>
      %cst_48 = arith.constant dense<0.000000e+00> : vector<8x384xf32>
      %191 = tpu.matmul %190, %22, %cst_48 {dimension_numbers = #tpu.dot_dimension_numbers<[1], [0], [0], [1], [0, 0, 1, 1], [], []>} : vector<8x128xbf16>, vector<128x384xbf16>, vector<8x384xf32> -> vector<8x384xf32>
      %192 = vector.extract_strided_slice %189 {offsets = [0, 0], sizes = [8, 128], strides = [1, 1]} : vector<8x384xf32> to vector<8x128xf32>
      %193 = vector.extract_strided_slice %191 {offsets = [0, 0], sizes = [8, 128], strides = [1, 1]} : vector<8x384xf32> to vector<8x128xf32>
      %194 = arith.addf %192, %193 : vector<8x128xf32>
      %195 = arith.negf %194 : vector<8x128xf32>
      %196 = math.exp %195 : vector<8x128xf32>
      %cst_49 = arith.constant 1.000000e+00 : f32
      %197 = vector.broadcast %cst_49 : f32 to vector<8x128xf32>
      %198 = arith.addf %197, %196 : vector<8x128xf32>
      %199 = arith.divf %197, %198 : vector<8x128xf32>
      %200 = vector.extract_strided_slice %189 {offsets = [0, 128], sizes = [8, 128], strides = [1, 1]} : vector<8x384xf32> to vector<8x128xf32>
      %201 = vector.extract_strided_slice %191 {offsets = [0, 128], sizes = [8, 128], strides = [1, 1]} : vector<8x384xf32> to vector<8x128xf32>
      %202 = arith.addf %200, %201 : vector<8x128xf32>
      %203 = arith.negf %202 : vector<8x128xf32>
      %204 = math.exp %203 : vector<8x128xf32>
      %cst_50 = arith.constant 1.000000e+00 : f32
      %205 = vector.broadcast %cst_50 : f32 to vector<8x128xf32>
      %206 = arith.addf %205, %204 : vector<8x128xf32>
      %207 = arith.divf %205, %206 : vector<8x128xf32>
      %208 = vector.extract_strided_slice %189 {offsets = [0, 256], sizes = [8, 128], strides = [1, 1]} : vector<8x384xf32> to vector<8x128xf32>
      %209 = vector.extract_strided_slice %191 {offsets = [0, 256], sizes = [8, 128], strides = [1, 1]} : vector<8x384xf32> to vector<8x128xf32>
      %210 = vector.broadcast %23 : vector<1x128xf32> to vector<8x128xf32>
      %211 = arith.addf %209, %210 : vector<8x128xf32>
      %212 = arith.mulf %199, %211 : vector<8x128xf32>
      %213 = arith.addf %208, %212 : vector<8x128xf32>
      %214 = math.tanh %213 : vector<8x128xf32>
      %cst_51 = arith.constant 1.000000e+00 : f32
      %215 = vector.broadcast %cst_51 : f32 to vector<8x128xf32>
      %216 = arith.subf %215, %207 : vector<8x128xf32>
      %217 = arith.mulf %216, %214 : vector<8x128xf32>
      %218 = arith.mulf %207, %185 : vector<8x128xf32>
      %219 = arith.addf %217, %218 : vector<8x128xf32>
      %220 = arith.addi %0, %c4_i32 : i32
      %221 = vector.broadcast %220 : i32 to vector<8x1xi32>
      %222 = arith.cmpi slt, %221, %24 : vector<8x1xi32>
      %223 = vector.shape_cast %222 : vector<8x1xi1> to vector<8x1xi1>
      %224 = vector.broadcast %223 : vector<8x1xi1> to vector<8x128xi1>
      %225 = arith.select %224, %219, %185 : vector<8x128xi1>, vector<8x128xf32>
      %c5_i32 = arith.constant 5 : i32
      %226 = arith.index_cast %c5_i32 : i32 to index
      %c0_52 = arith.constant 0 : index
      %c0_53 = arith.constant 0 : index
      %227 = vector.load %arg13[%226, %c0_52, %c0_53] : memref<8x8x384xbf16, #tpu.memory_space<vmem>>, vector<1x8x384xbf16>
      %228 = vector.shape_cast %227 : vector<1x8x384xbf16> to vector<8x384xbf16>
      %229 = arith.extf %228 : vector<8x384xbf16> to vector<8x384xf32>
      %230 = arith.truncf %225 : vector<8x128xf32> to vector<8x128xbf16>
      %cst_54 = arith.constant dense<0.000000e+00> : vector<8x384xf32>
      %231 = tpu.matmul %230, %22, %cst_54 {dimension_numbers = #tpu.dot_dimension_numbers<[1], [0], [0], [1], [0, 0, 1, 1], [], []>} : vector<8x128xbf16>, vector<128x384xbf16>, vector<8x384xf32> -> vector<8x384xf32>
      %232 = vector.extract_strided_slice %229 {offsets = [0, 0], sizes = [8, 128], strides = [1, 1]} : vector<8x384xf32> to vector<8x128xf32>
      %233 = vector.extract_strided_slice %231 {offsets = [0, 0], sizes = [8, 128], strides = [1, 1]} : vector<8x384xf32> to vector<8x128xf32>
      %234 = arith.addf %232, %233 : vector<8x128xf32>
      %235 = arith.negf %234 : vector<8x128xf32>
      %236 = math.exp %235 : vector<8x128xf32>
      %cst_55 = arith.constant 1.000000e+00 : f32
      %237 = vector.broadcast %cst_55 : f32 to vector<8x128xf32>
      %238 = arith.addf %237, %236 : vector<8x128xf32>
      %239 = arith.divf %237, %238 : vector<8x128xf32>
      %240 = vector.extract_strided_slice %229 {offsets = [0, 128], sizes = [8, 128], strides = [1, 1]} : vector<8x384xf32> to vector<8x128xf32>
      %241 = vector.extract_strided_slice %231 {offsets = [0, 128], sizes = [8, 128], strides = [1, 1]} : vector<8x384xf32> to vector<8x128xf32>
      %242 = arith.addf %240, %241 : vector<8x128xf32>
      %243 = arith.negf %242 : vector<8x128xf32>
      %244 = math.exp %243 : vector<8x128xf32>
      %cst_56 = arith.constant 1.000000e+00 : f32
      %245 = vector.broadcast %cst_56 : f32 to vector<8x128xf32>
      %246 = arith.addf %245, %244 : vector<8x128xf32>
      %247 = arith.divf %245, %246 : vector<8x128xf32>
      %248 = vector.extract_strided_slice %229 {offsets = [0, 256], sizes = [8, 128], strides = [1, 1]} : vector<8x384xf32> to vector<8x128xf32>
      %249 = vector.extract_strided_slice %231 {offsets = [0, 256], sizes = [8, 128], strides = [1, 1]} : vector<8x384xf32> to vector<8x128xf32>
      %250 = vector.broadcast %23 : vector<1x128xf32> to vector<8x128xf32>
      %251 = arith.addf %249, %250 : vector<8x128xf32>
      %252 = arith.mulf %239, %251 : vector<8x128xf32>
      %253 = arith.addf %248, %252 : vector<8x128xf32>
      %254 = math.tanh %253 : vector<8x128xf32>
      %cst_57 = arith.constant 1.000000e+00 : f32
      %255 = vector.broadcast %cst_57 : f32 to vector<8x128xf32>
      %256 = arith.subf %255, %247 : vector<8x128xf32>
      %257 = arith.mulf %256, %254 : vector<8x128xf32>
      %258 = arith.mulf %247, %225 : vector<8x128xf32>
      %259 = arith.addf %257, %258 : vector<8x128xf32>
      %260 = arith.addi %0, %c5_i32 : i32
      %261 = vector.broadcast %260 : i32 to vector<8x1xi32>
      %262 = arith.cmpi slt, %261, %24 : vector<8x1xi32>
      %263 = vector.shape_cast %262 : vector<8x1xi1> to vector<8x1xi1>
      %264 = vector.broadcast %263 : vector<8x1xi1> to vector<8x128xi1>
      %265 = arith.select %264, %259, %225 : vector<8x128xi1>, vector<8x128xf32>
      %c6_i32 = arith.constant 6 : i32
      %266 = arith.index_cast %c6_i32 : i32 to index
      %c0_58 = arith.constant 0 : index
      %c0_59 = arith.constant 0 : index
      %267 = vector.load %arg13[%266, %c0_58, %c0_59] : memref<8x8x384xbf16, #tpu.memory_space<vmem>>, vector<1x8x384xbf16>
      %268 = vector.shape_cast %267 : vector<1x8x384xbf16> to vector<8x384xbf16>
      %269 = arith.extf %268 : vector<8x384xbf16> to vector<8x384xf32>
      %270 = arith.truncf %265 : vector<8x128xf32> to vector<8x128xbf16>
      %cst_60 = arith.constant dense<0.000000e+00> : vector<8x384xf32>
      %271 = tpu.matmul %270, %22, %cst_60 {dimension_numbers = #tpu.dot_dimension_numbers<[1], [0], [0], [1], [0, 0, 1, 1], [], []>} : vector<8x128xbf16>, vector<128x384xbf16>, vector<8x384xf32> -> vector<8x384xf32>
      %272 = vector.extract_strided_slice %269 {offsets = [0, 0], sizes = [8, 128], strides = [1, 1]} : vector<8x384xf32> to vector<8x128xf32>
      %273 = vector.extract_strided_slice %271 {offsets = [0, 0], sizes = [8, 128], strides = [1, 1]} : vector<8x384xf32> to vector<8x128xf32>
      %274 = arith.addf %272, %273 : vector<8x128xf32>
      %275 = arith.negf %274 : vector<8x128xf32>
      %276 = math.exp %275 : vector<8x128xf32>
      %cst_61 = arith.constant 1.000000e+00 : f32
      %277 = vector.broadcast %cst_61 : f32 to vector<8x128xf32>
      %278 = arith.addf %277, %276 : vector<8x128xf32>
      %279 = arith.divf %277, %278 : vector<8x128xf32>
      %280 = vector.extract_strided_slice %269 {offsets = [0, 128], sizes = [8, 128], strides = [1, 1]} : vector<8x384xf32> to vector<8x128xf32>
      %281 = vector.extract_strided_slice %271 {offsets = [0, 128], sizes = [8, 128], strides = [1, 1]} : vector<8x384xf32> to vector<8x128xf32>
      %282 = arith.addf %280, %281 : vector<8x128xf32>
      %283 = arith.negf %282 : vector<8x128xf32>
      %284 = math.exp %283 : vector<8x128xf32>
      %cst_62 = arith.constant 1.000000e+00 : f32
      %285 = vector.broadcast %cst_62 : f32 to vector<8x128xf32>
      %286 = arith.addf %285, %284 : vector<8x128xf32>
      %287 = arith.divf %285, %286 : vector<8x128xf32>
      %288 = vector.extract_strided_slice %269 {offsets = [0, 256], sizes = [8, 128], strides = [1, 1]} : vector<8x384xf32> to vector<8x128xf32>
      %289 = vector.extract_strided_slice %271 {offsets = [0, 256], sizes = [8, 128], strides = [1, 1]} : vector<8x384xf32> to vector<8x128xf32>
      %290 = vector.broadcast %23 : vector<1x128xf32> to vector<8x128xf32>
      %291 = arith.addf %289, %290 : vector<8x128xf32>
      %292 = arith.mulf %279, %291 : vector<8x128xf32>
      %293 = arith.addf %288, %292 : vector<8x128xf32>
      %294 = math.tanh %293 : vector<8x128xf32>
      %cst_63 = arith.constant 1.000000e+00 : f32
      %295 = vector.broadcast %cst_63 : f32 to vector<8x128xf32>
      %296 = arith.subf %295, %287 : vector<8x128xf32>
      %297 = arith.mulf %296, %294 : vector<8x128xf32>
      %298 = arith.mulf %287, %265 : vector<8x128xf32>
      %299 = arith.addf %297, %298 : vector<8x128xf32>
      %300 = arith.addi %0, %c6_i32 : i32
      %301 = vector.broadcast %300 : i32 to vector<8x1xi32>
      %302 = arith.cmpi slt, %301, %24 : vector<8x1xi32>
      %303 = vector.shape_cast %302 : vector<8x1xi1> to vector<8x1xi1>
      %304 = vector.broadcast %303 : vector<8x1xi1> to vector<8x128xi1>
      %305 = arith.select %304, %299, %265 : vector<8x128xi1>, vector<8x128xf32>
      %c7_i32 = arith.constant 7 : i32
      %306 = arith.index_cast %c7_i32 : i32 to index
      %c0_64 = arith.constant 0 : index
      %c0_65 = arith.constant 0 : index
      %307 = vector.load %arg13[%306, %c0_64, %c0_65] : memref<8x8x384xbf16, #tpu.memory_space<vmem>>, vector<1x8x384xbf16>
      %308 = vector.shape_cast %307 : vector<1x8x384xbf16> to vector<8x384xbf16>
      %309 = arith.extf %308 : vector<8x384xbf16> to vector<8x384xf32>
      %310 = arith.truncf %305 : vector<8x128xf32> to vector<8x128xbf16>
      %cst_66 = arith.constant dense<0.000000e+00> : vector<8x384xf32>
      %311 = tpu.matmul %310, %22, %cst_66 {dimension_numbers = #tpu.dot_dimension_numbers<[1], [0], [0], [1], [0, 0, 1, 1], [], []>} : vector<8x128xbf16>, vector<128x384xbf16>, vector<8x384xf32> -> vector<8x384xf32>
      %312 = vector.extract_strided_slice %309 {offsets = [0, 0], sizes = [8, 128], strides = [1, 1]} : vector<8x384xf32> to vector<8x128xf32>
      %313 = vector.extract_strided_slice %311 {offsets = [0, 0], sizes = [8, 128], strides = [1, 1]} : vector<8x384xf32> to vector<8x128xf32>
      %314 = arith.addf %312, %313 : vector<8x128xf32>
      %315 = arith.negf %314 : vector<8x128xf32>
      %316 = math.exp %315 : vector<8x128xf32>
      %cst_67 = arith.constant 1.000000e+00 : f32
      %317 = vector.broadcast %cst_67 : f32 to vector<8x128xf32>
      %318 = arith.addf %317, %316 : vector<8x128xf32>
      %319 = arith.divf %317, %318 : vector<8x128xf32>
      %320 = vector.extract_strided_slice %309 {offsets = [0, 128], sizes = [8, 128], strides = [1, 1]} : vector<8x384xf32> to vector<8x128xf32>
      %321 = vector.extract_strided_slice %311 {offsets = [0, 128], sizes = [8, 128], strides = [1, 1]} : vector<8x384xf32> to vector<8x128xf32>
      %322 = arith.addf %320, %321 : vector<8x128xf32>
      %323 = arith.negf %322 : vector<8x128xf32>
      %324 = math.exp %323 : vector<8x128xf32>
      %cst_68 = arith.constant 1.000000e+00 : f32
      %325 = vector.broadcast %cst_68 : f32 to vector<8x128xf32>
      %326 = arith.addf %325, %324 : vector<8x128xf32>
      %327 = arith.divf %325, %326 : vector<8x128xf32>
      %328 = vector.extract_strided_slice %309 {offsets = [0, 256], sizes = [8, 128], strides = [1, 1]} : vector<8x384xf32> to vector<8x128xf32>
      %329 = vector.extract_strided_slice %311 {offsets = [0, 256], sizes = [8, 128], strides = [1, 1]} : vector<8x384xf32> to vector<8x128xf32>
      %330 = vector.broadcast %23 : vector<1x128xf32> to vector<8x128xf32>
      %331 = arith.addf %329, %330 : vector<8x128xf32>
      %332 = arith.mulf %319, %331 : vector<8x128xf32>
      %333 = arith.addf %328, %332 : vector<8x128xf32>
      %334 = math.tanh %333 : vector<8x128xf32>
      %cst_69 = arith.constant 1.000000e+00 : f32
      %335 = vector.broadcast %cst_69 : f32 to vector<8x128xf32>
      %336 = arith.subf %335, %327 : vector<8x128xf32>
      %337 = arith.mulf %336, %334 : vector<8x128xf32>
      %338 = arith.mulf %327, %305 : vector<8x128xf32>
      %339 = arith.addf %337, %338 : vector<8x128xf32>
      %340 = arith.addi %0, %c7_i32 : i32
      %341 = vector.broadcast %340 : i32 to vector<8x1xi32>
      %342 = arith.cmpi slt, %341, %24 : vector<8x1xi32>
      %343 = vector.shape_cast %342 : vector<8x1xi1> to vector<8x1xi1>
      %344 = vector.broadcast %343 : vector<8x1xi1> to vector<8x128xi1>
      %345 = arith.select %344, %339, %305 : vector<8x128xi1>, vector<8x128xf32>
      %c8_i32_70 = arith.constant 8 : i32
      %c0_71 = arith.constant 0 : index
      %c0_72 = arith.constant 0 : index
      %346 = vector.load %arg12[%c0_71, %c0_72] : memref<8x128xf32, #tpu.memory_space<vmem>>, vector<8x128xf32>
      tpu.vector_store %arg12[%c0_71, %c0_72], %345 {strides = array<i32>} : memref<8x128xf32, #tpu.memory_space<vmem>>, vector<8x128xf32>,
    } else {
    }
    %c0_i32_2 = arith.constant 0 : i32
    %9 = arith.cmpi eq, %arg1, %c0_i32_2 : i32
    %10 = arith.extui %9 : i1 to i32
    %c0_i32_3 = arith.constant 0 : i32
    %11 = arith.cmpi ne, %10, %c0_i32_3 : i32
    scf.if %11 {
      %c0 = arith.constant 0 : index
      %c0_4 = arith.constant 0 : index
      %12 = vector.load %arg12[%c0, %c0_4] : memref<8x128xf32, #tpu.memory_space<vmem>>, vector<8x128xf32>
      %13 = arith.truncf %12 : vector<8x128xf32> to vector<8x128xbf16>
      %c0_5 = arith.constant 0 : index
      %c0_6 = arith.constant 0 : index
      %14 = vector.load %arg9[%c0_5, %c0_6] : memref<128x128xbf16, #tpu.memory_space<vmem>>, vector<128x128xbf16>
      %cst = arith.constant dense<0.000000e+00> : vector<8x128xf32>
      %15 = tpu.matmul %13, %14, %cst {dimension_numbers = #tpu.dot_dimension_numbers<[1], [0], [0], [1], [0, 0, 1, 1], [], []>} : vector<8x128xbf16>, vector<128x128xbf16>, vector<8x128xf32> -> vector<8x128xf32>
      %c0_7 = arith.constant 0 : index
      %c0_8 = arith.constant 0 : index
      %16 = vector.load %arg10[%c0_7, %c0_8] : memref<1x128xf32, #tpu.memory_space<vmem>>, vector<1x128xf32>
      %17 = vector.broadcast %16 : vector<1x128xf32> to vector<8x128xf32>
      %18 = arith.addf %15, %17 : vector<8x128xf32>
      %19 = arith.mulf %18, %18 : vector<8x128xf32>
      %cst_9 = arith.constant dense<0.000000e+00> : vector<8xf32>
      %20 = vector.multi_reduction <add>, %19, %cst_9 [1] : vector<8x128xf32> to vector<8xf32>
      %21 = vector.shape_cast %20 : vector<8xf32> to vector<8x1xf32>
      %22 = math.sqrt %21 : vector<8x1xf32>
      %cst_10 = arith.constant 9.99999971E-10 : f32
      %23 = vector.broadcast %cst_10 : f32 to vector<8x1xf32>
      %24 = arith.addf %22, %23 : vector<8x1xf32>
      %25 = tpu.reciprocal %24 {approx = true} : vector<8x1xf32> -> vector<8x1xf32>
      %26 = vector.broadcast %25 : vector<8x1xf32> to vector<8x128xf32>
      %27 = arith.mulf %18, %26 : vector<8x128xf32>
      %c0_11 = arith.constant 0 : index
      %c0_12 = arith.constant 0 : index
      %28 = vector.load %arg4[%c0_11, %c0_12] : memref<8x1xi32, #tpu.memory_space<vmem>>, vector<8x1xi32>
      %c0_i32_13 = arith.constant 0 : i32
      %29 = vector.broadcast %c0_i32_13 : i32 to vector<8x1xi32>
      %30 = arith.cmpi sgt, %28, %29 : vector<8x1xi32>
      %cst_14 = arith.constant 0.000000e+00 : f32
      %31 = vector.shape_cast %30 : vector<8x1xi1> to vector<8x1xi1>
      %32 = vector.broadcast %31 : vector<8x1xi1> to vector<8x128xi1>
      %33 = vector.broadcast %cst_14 : f32 to vector<8x128xf32>
      %34 = arith.select %32, %27, %33 : vector<8x128xi1>, vector<8x128xf32>
      %c0_15 = arith.constant 0 : index
      %c0_16 = arith.constant 0 : index
      %35 = vector.load %arg11[%c0_15, %c0_16] : memref<8x128xf32, #tpu.memory_space<vmem>>, vector<8x128xf32>
      tpu.vector_store %arg11[%c0_15, %c0_16], %34 {strides = array<i32>} : memref<8x128xf32, #tpu.memory_space<vmem>>, vector<8x128xf32>,
    } else {
    }
    return
  }
  func.func @transform_0(%arg0: i32, %arg1: i32, %arg2: memref<2xi32, #tpu.memory_space<smem>>) -> (i32, i32, i32) {
    %c0_i32 = arith.constant 0 : i32
    %c0_i32_0 = arith.constant 0 : i32
    return %arg1, %arg0, %c0_i32 : i32, i32, i32
  }
  func.func @transform_1(%arg0: i32, %arg1: i32, %arg2: memref<2xi32, #tpu.memory_space<smem>>) -> (i32, i32) {
    %c0_i32 = arith.constant 0 : i32
    %c0_i32_0 = arith.constant 0 : i32
    return %arg0, %c0_i32 : i32, i32
  }
  func.func @transform_2(%arg0: i32, %arg1: i32, %arg2: memref<2xi32, #tpu.memory_space<smem>>) -> (i32, i32) {
    %c0_i32 = arith.constant 0 : i32
    %c0_i32_0 = arith.constant 0 : i32
    %c0_i32_1 = arith.constant 0 : i32
    return %c0_i32, %c0_i32_0 : i32, i32
  }
  func.func @transform_3(%arg0: i32, %arg1: i32, %arg2: memref<2xi32, #tpu.memory_space<smem>>) -> (i32, i32) {
    %c0_i32 = arith.constant 0 : i32
    %c0_i32_0 = arith.constant 0 : i32
    %c0_i32_1 = arith.constant 0 : i32
    return %c0_i32, %c0_i32_0 : i32, i32
  }
  func.func @transform_4(%arg0: i32, %arg1: i32, %arg2: memref<2xi32, #tpu.memory_space<smem>>) -> (i32, i32) {
    %c0_i32 = arith.constant 0 : i32
    %c0_i32_0 = arith.constant 0 : i32
    %c0_i32_1 = arith.constant 0 : i32
    return %c0_i32, %c0_i32_0 : i32, i32
  }
  func.func @transform_5(%arg0: i32, %arg1: i32, %arg2: memref<2xi32, #tpu.memory_space<smem>>) -> (i32, i32) {
    %c0_i32 = arith.constant 0 : i32
    %c0_i32_0 = arith.constant 0 : i32
    %c0_i32_1 = arith.constant 0 : i32
    return %c0_i32, %c0_i32_0 : i32, i32
  }
  func.func @transform_6(%arg0: i32, %arg1: i32, %arg2: memref<2xi32, #tpu.memory_space<smem>>) -> (i32, i32) {
    %c0_i32 = arith.constant 0 : i32
    %c0_i32_0 = arith.constant 0 : i32
    %c0_i32_1 = arith.constant 0 : i32
    return %c0_i32, %c0_i32_0 : i32, i32
  }
  func.func @transform_7(%arg0: i32, %arg1: i32, %arg2: memref<2xi32, #tpu.memory_space<smem>>) -> (i32, i32) {
    %c0_i32 = arith.constant 0 : i32
    %c0_i32_0 = arith.constant 0 : i32
    %c0_i32_1 = arith.constant 0 : i32
    return %c0_i32, %c0_i32_0 : i32, i32
  }
  func.func @transform_8(%arg0: i32, %arg1: i32, %arg2: memref<2xi32, #tpu.memory_space<smem>>) -> (i32, i32) {
    %c0_i32 = arith.constant 0 : i32
    %c0_i32_0 = arith.constant 0 : i32
    return %arg0, %c0_i32 : i32, i32
  }
}

</mosaic_0001>

<llo_original>
// kernel: tpu_custom_call.1
$region0: #{tpu_custom_call.1}
  #allocation0 [shape = 'u32[]', space=smem, size = 0x4, offset = 0x4, fixed_abs, tag = 'smem constant byte address 0x4 - core index']
  #allocation1 [shape = 'u32[144,128]{1,0:T(1,128)}', space=vmem, size = 0x12000, scoped, tag = 'internal scratch']
  #allocation2 [shape = 'f32[8,128]{1,0:T(8,128)}', space=vmem, size = 0x1000, scoped, tag = 'scratch operand']
  #allocation3 [shape = 'bf16[8,8,384]{2,1,0:T(8,128)(2,1)}', space=vmem, size = 0xc000, scoped, tag = 'scratch operand']
  #allocation4 [shape = 's32[1]{0}', space=sflag, size = 0x4, scoped, tag = 'scoped memory for tpu_custom_call.1']
  #allocation5 [shape = 'u8[512]{0}', space=smem, size = 0x200, scoped, tag = 'prefetched SMEM operand 0']
  %s0 = inlined_call_operand.vmem [shape: s32[2], index: 0, kind: input, shape index: {}]
  %s1 = inlined_call_operand.hbm [shape: bf16[8,16,128], index: 1, kind: input, shape index: {}]
  %s2 = inlined_call_operand.vmem [shape: s32[16,1], index: 2, kind: input, shape index: {}]
  %s3 = inlined_call_operand.hbm [shape: bf16[128,384], index: 3, kind: input, shape index: {}]
  %s4 = inlined_call_operand.hbm [shape: bf16[128,384], index: 4, kind: input, shape index: {}]
  %s5 = inlined_call_operand.vmem [shape: f32[1,384], index: 5, kind: input, shape index: {}]
  %s6 = inlined_call_operand.vmem [shape: f32[1,128], index: 6, kind: input, shape index: {}]
  %s7 = inlined_call_operand.hbm [shape: bf16[128,128], index: 7, kind: input, shape index: {}]
  %s8 = inlined_call_operand.vmem [shape: f32[1,128], index: 8, kind: input, shape index: {}]
  %s9 = inlined_call_operand.hbm [shape: f32[16,128], index: 9, kind: output, shape index: {}]
  %s10 = sld [smem:[#allocation0]]
  $region93: #{tpu_custom_call.1} parent=0
    _
  %s12 = ssub.s32 1, %s10
  %s13 = scalar_select 0, %s12, %s10
  %s14 = sshll.u32 %s0, 4
  %s15 = int_to_ptr.vmem [resolvable:$true] %s14
  %17 = dma.vmem_to_smem %s15, 16, [#allocation5], [#allocation4]
  %18 = dma.done [#allocation4], 16
  %19 = sfence
  $region1: #{tpu_custom_call.1} parent=0
    #allocation6 [shape = 'u8[32768]{0}', space=vmem, size = 0x8000, scoped, tag = 'input window, operand 1']
    #allocation7 [shape = 's32[2]{0}', space=sflag, size = 0x8, scoped, tag = 'scoped memory for tpu_custom_call.1']
    #allocation8 [shape = 's32[2]{0}', space=sflag, size = 0x8, scoped, tag = 'scoped memory for tpu_custom_call.1']
    #allocation9 [shape = 'u8[98304]{0}', space=vmem, size = 0x18000, scoped, tag = 'input window, operand 3, single buffered']
    #allocation10 [shape = 's32[1]{0}', space=sflag, size = 0x4, scoped, tag = 'scoped memory for tpu_custom_call.1']
    #allocation11 [shape = 'u8[98304]{0}', space=vmem, size = 0x18000, scoped, tag = 'input window, operand 4, single buffered']
    #allocation12 [shape = 'u8[32768]{0}', space=vmem, size = 0x8000, scoped, tag = 'input window, operand 7, single buffered']
    #allocation13 [shape = 's32[1]{0}', space=sflag, size = 0x4, scoped, tag = 'scoped memory for tpu_custom_call.1']
    #allocation14 [shape = 'u8[8192]{0}', space=vmem, size = 0x2000, scoped, tag = 'output window, operand 0']
    %20 = vsyncpa [#allocation7], 0
    %s21 = scalar_lea.sflag [#allocation7], 1
    %22 = vsyncpa %s21, 0
    %23 = vsyncpa [#allocation10], 0
    %24 = vsyncpa [#allocation13], 0
    %25 = vsyncpa [#allocation8], 0
    %s26 = scalar_lea.sflag [#allocation8], 1
    %27 = vsyncpa %s26, 0
    loop: start=0, step=1, limit=4
    $region2: #{tpu_custom_call.1} parent=1 // loop_pre_header
      _
    $region3: #{tpu_custom_call.1} parent=1 // loop_header
      %s29 = sphi 0, %s33
      %p30 = scmp.ge.s32.totalorder %s29, 4
      %s36 = sphi 0, %s48
      %s37 = sphi 0, %s44
      %s38 = sphi 0, %s36
      %s39 = sphi 0, %s37
      %s40 = sphi 0, %s38
      %s41 = sphi 0, %s39
      %s53 = sphi 0, %s55
      %s56 = sphi 0, %s53
      %s57 = sphi 0, %s56
      %s73 = sphi 0, %s57
      %s79 = sphi 0, %s81
      %s82 = sphi 0, %s79
      %s83 = sphi 0, %s82
      %s99 = sphi 0, %s83
      %s103 = sphi 0, %s103
      %s105 = sphi 0, %s103
      %s106 = sphi 0, %s105
      %s120 = sphi 0, %s106
      %s124 = sphi 0, %s124
      %s126 = sphi 0, %s124
      %s127 = sphi 0, %s126
      %s141 = sphi 0, %s127
      %s145 = sphi 0, %s145
      %s147 = sphi 0, %s145
      %s148 = sphi 0, %s147
      %s162 = sphi 0, %s148
      %s166 = sphi 0, %s166
      %s168 = sphi 0, %s166
      %s169 = sphi 0, %s168
      %s183 = sphi 0, %s169
      %s187 = sphi 0, %s187
      %s189 = sphi 0, %s187
      %s190 = sphi 0, %s189
      %s204 = sphi 0, %s190
      %s208 = sphi 0, %s208
      %s210 = sphi 0, %s208
      %s211 = sphi 0, %s210
      %s225 = sphi 0, %s211
      %s231 = sphi 0, %s233
      %s234 = sphi 0, %s231
      %s235 = sphi 0, %s234
      %s251 = sphi 0, %s235
    $region4: #{tpu_custom_call.1} parent=1 // loop_header_branch
      %32 = sbr.rel (%p30) target = $region8
    $region5: #{tpu_custom_call.1} parent=1 // loop_body
      %s34 = ssub.s32 %s29, 1
      %s35 = ssub.s32 %s29, 2
      %s42 = sadd.s32 1, %s37
      %p43 = scmp.ge.s32.totalorder %s42, 1
      %s44 = scalar_select %p43, 0, %s42
      %s45 = sadd.s32 1, %s36
      %s46 = scalar_select %p43, %s45, %s36
      %p47 = scmp.ge.s32.totalorder %s46, 2
      %s48 = scalar_select %p47, 0, %s46
      %s49 = ssub.s32 %s37, %s44
      %s50 = ssub.s32 %s36, %s48
      %s51 = sor.u32 %s49, %s50
      %p52 = scmp.eq.s32.totalorder %s51, 0
      %s54 = sadd.s32 %s53, 1
      %s55 = scalar_select %p52, %s53, %s54
      %p58 = pneg %p52
      %p59 = scmp.eq.s32.totalorder %s29, 1
      %p60 = por %p58, %p59
      %p61 = scmp.ne.s32.totalorder %s53, %s56
      %p62 = scmp.eq.s32.totalorder %s29, 0
      %p63 = por %p61, %p62
      %p64 = scmp.ne.s32.totalorder %s53, %s56
      %p65 = scmp.eq.s32.totalorder %s34, 1
      %p66 = por %p64, %p65
      %p67 = scmp.ne.s32.totalorder %s56, %s57
      %p68 = scmp.eq.s32.totalorder %s34, 0
      %p69 = por %p67, %p68
      %p70 = scmp.ne.s32.totalorder %s56, %s57
      %p71 = scmp.eq.s32.totalorder %s35, 1
      %p72 = por %p70, %p71
      %p74 = scmp.ne.s32.totalorder %s57, %s73
      %p75 = scmp.eq.s32.totalorder %s35, 0
      %p76 = por %p74, %p75
      %s77 = ssub.s32 %s36, %s48
      %p78 = scmp.eq.s32.totalorder %s77, 0
      %s80 = sadd.s32 %s79, 1
      %s81 = scalar_select %p78, %s79, %s80
      %p84 = pneg %p78
      %p85 = scmp.eq.s32.totalorder %s29, 1
      %p86 = por %p84, %p85
      %p87 = scmp.ne.s32.totalorder %s79, %s82
      %p88 = scmp.eq.s32.totalorder %s29, 0
      %p89 = por %p87, %p88
      %p90 = scmp.ne.s32.totalorder %s79, %s82
      %p91 = scmp.eq.s32.totalorder %s34, 1
      %p92 = por %p90, %p91
      %p93 = scmp.ne.s32.totalorder %s82, %s83
      %p94 = scmp.eq.s32.totalorder %s34, 0
      %p95 = por %p93, %p94
      %p96 = scmp.ne.s32.totalorder %s82, %s83
      %p97 = scmp.eq.s32.totalorder %s35, 1
      %p98 = por %p96, %p97
      %p100 = scmp.ne.s32.totalorder %s83, %s99
      %p101 = scmp.eq.s32.totalorder %s35, 0
      %p102 = por %p100, %p101
      %s104 = sadd.s32 %s103, 1
      %p107 = scmp.eq.s32.totalorder %s29, 1
      %p108 = scmp.ne.s32.totalorder %s103, %s105
      %p109 = scmp.eq.s32.totalorder %s29, 0
      %p110 = por %p108, %p109
      %p111 = scmp.ne.s32.totalorder %s103, %s105
      %p112 = scmp.eq.s32.totalorder %s34, 1
      %p113 = por %p111, %p112
      %p114 = scmp.ne.s32.totalorder %s105, %s106
      %p115 = scmp.eq.s32.totalorder %s34, 0
      %p116 = por %p114, %p115
      %p117 = scmp.ne.s32.totalorder %s105, %s106
      %p118 = scmp.eq.s32.totalorder %s35, 1
      %p119 = por %p117, %p118
      %p121 = scmp.ne.s32.totalorder %s106, %s120
      %p122 = scmp.eq.s32.totalorder %s35, 0
      %p123 = por %p121, %p122
      %s125 = sadd.s32 %s124, 1
      %p128 = scmp.eq.s32.totalorder %s29, 1
      %p129 = scmp.ne.s32.totalorder %s124, %s126
      %p130 = scmp.eq.s32.totalorder %s29, 0
      %p131 = por %p129, %p130
      %p132 = scmp.ne.s32.totalorder %s124, %s126
      %p133 = scmp.eq.s32.totalorder %s34, 1
      %p134 = por %p132, %p133
      %p135 = scmp.ne.s32.totalorder %s126, %s127
      %p136 = scmp.eq.s32.totalorder %s34, 0
      %p137 = por %p135, %p136
      %p138 = scmp.ne.s32.totalorder %s126, %s127
      %p139 = scmp.eq.s32.totalorder %s35, 1
      %p140 = por %p138, %p139
      %p142 = scmp.ne.s32.totalorder %s127, %s141
      %p143 = scmp.eq.s32.totalorder %s35, 0
      %p144 = por %p142, %p143
      %s146 = sadd.s32 %s145, 1
      %p149 = scmp.eq.s32.totalorder %s29, 1
      %p150 = scmp.ne.s32.totalorder %s145, %s147
      %p151 = scmp.eq.s32.totalorder %s29, 0
      %p152 = por %p150, %p151
      %p153 = scmp.ne.s32.totalorder %s145, %s147
      %p154 = scmp.eq.s32.totalorder %s34, 1
      %p155 = por %p153, %p154
      %p156 = scmp.ne.s32.totalorder %s147, %s148
      %p157 = scmp.eq.s32.totalorder %s34, 0
      %p158 = por %p156, %p157
      %p159 = scmp.ne.s32.totalorder %s147, %s148
      %p160 = scmp.eq.s32.totalorder %s35, 1
      %p161 = por %p159, %p160
      %p163 = scmp.ne.s32.totalorder %s148, %s162
      %p164 = scmp.eq.s32.totalorder %s35, 0
      %p165 = por %p163, %p164
      %s167 = sadd.s32 %s166, 1
      %p170 = scmp.eq.s32.totalorder %s29, 1
      %p171 = scmp.ne.s32.totalorder %s166, %s168
      %p172 = scmp.eq.s32.totalorder %s29, 0
      %p173 = por %p171, %p172
      %p174 = scmp.ne.s32.totalorder %s166, %s168
      %p175 = scmp.eq.s32.totalorder %s34, 1
      %p176 = por %p174, %p175
      %p177 = scmp.ne.s32.totalorder %s168, %s169
      %p178 = scmp.eq.s32.totalorder %s34, 0
      %p179 = por %p177, %p178
      %p180 = scmp.ne.s32.totalorder %s168, %s169
      %p181 = scmp.eq.s32.totalorder %s35, 1
      %p182 = por %p180, %p181
      %p184 = scmp.ne.s32.totalorder %s169, %s183
      %p185 = scmp.eq.s32.totalorder %s35, 0
      %p186 = por %p184, %p185
      %s188 = sadd.s32 %s187, 1
      %p191 = scmp.eq.s32.totalorder %s29, 1
      %p192 = scmp.ne.s32.totalorder %s187, %s189
      %p193 = scmp.eq.s32.totalorder %s29, 0
      %p194 = por %p192, %p193
      %p195 = scmp.ne.s32.totalorder %s187, %s189
      %p196 = scmp.eq.s32.totalorder %s34, 1
      %p197 = por %p195, %p196
      %p198 = scmp.ne.s32.totalorder %s189, %s190
      %p199 = scmp.eq.s32.totalorder %s34, 0
      %p200 = por %p198, %p199
      %p201 = scmp.ne.s32.totalorder %s189, %s190
      %p202 = scmp.eq.s32.totalorder %s35, 1
      %p203 = por %p201, %p202
      %p205 = scmp.ne.s32.totalorder %s190, %s204
      %p206 = scmp.eq.s32.totalorder %s35, 0
      %p207 = por %p205, %p206
      %s209 = sadd.s32 %s208, 1
      %p212 = scmp.eq.s32.totalorder %s29, 1
      %p213 = scmp.ne.s32.totalorder %s208, %s210
      %p214 = scmp.eq.s32.totalorder %s29, 0
      %p215 = por %p213, %p214
      %p216 = scmp.ne.s32.totalorder %s208, %s210
      %p217 = scmp.eq.s32.totalorder %s34, 1
      %p218 = por %p216, %p217
      %p219 = scmp.ne.s32.totalorder %s210, %s211
      %p220 = scmp.eq.s32.totalorder %s34, 0
      %p221 = por %p219, %p220
      %p222 = scmp.ne.s32.totalorder %s210, %s211
      %p223 = scmp.eq.s32.totalorder %s35, 1
      %p224 = por %p222, %p223
      %p226 = scmp.ne.s32.totalorder %s211, %s225
      %p227 = scmp.eq.s32.totalorder %s35, 0
      %p228 = por %p226, %p227
      %s229 = ssub.s32 %s36, %s48
      %p230 = scmp.eq.s32.totalorder %s229, 0
      %s232 = sadd.s32 %s231, 1
      %s233 = scalar_select %p230, %s231, %s232
      %p236 = pneg %p230
      %p237 = scmp.eq.s32.totalorder %s29, 1
      %p238 = por %p236, %p237
      %p239 = scmp.ne.s32.totalorder %s231, %s234
      %p240 = scmp.eq.s32.totalorder %s29, 0
      %p241 = por %p239, %p240
      %p242 = scmp.ne.s32.totalorder %s231, %s234
      %p243 = scmp.eq.s32.totalorder %s34, 1
      %p244 = por %p242, %p243
      %p245 = scmp.ne.s32.totalorder %s234, %s235
      %p246 = scmp.eq.s32.totalorder %s34, 0
      %p247 = por %p245, %p246
      %p248 = scmp.ne.s32.totalorder %s234, %s235
      %p249 = scmp.eq.s32.totalorder %s35, 1
      %p250 = por %p248, %p249
      %p252 = scmp.ne.s32.totalorder %s235, %s251
      %p253 = scmp.eq.s32.totalorder %s35, 0
      %p254 = por %p252, %p253
      %p255 = scmp.le.s32.totalorder 1, %s29
      %p256 = scmp.lt.s32.totalorder %s29, 3
      %p257 = pnand %p255, %p256
      %p258 = pneg %p257
      // Predicated region
      $region9: #{tpu_custom_call.1} parent=5 // pred_check
        _
      $region10: #{tpu_custom_call.1} parent=5 // pred_check_branch
        %260 = sbr.rel (%p257) target = $region12
      $region11: #{tpu_custom_call.1} parent=5 // pred_region
        %s261 = ssub.s32 %s29, 1
        // Predicated region
        $region13: #{tpu_custom_call.1} parent=11 // pred_check
          %p262 = pneg %p116
        $region14: #{tpu_custom_call.1} parent=11 // pred_check_branch
          %264 = sbr.rel (%p262) target = $region16
        $region15: #{tpu_custom_call.1} parent=11 // pred_region
          %s266 = ssub.s32 3072, 3072
          %267 = vsyncadd [#allocation10], %s266
          %s268 = sshll.u32 [#allocation9], 4
          %s269 = int_to_ptr.vmem [resolvable:$true] %s268
          %274 = dma.hbm_to_vmem [thread:$0]  %s3, 3072, %s269, [#allocation10], 192, 192, 12
        $region16: #{tpu_custom_call.1} parent=11 // pred_fallthru
          _
        // Predicated region
        $region17: #{tpu_custom_call.1} parent=11 // pred_check
          %p275 = pneg %p137
        $region18: #{tpu_custom_call.1} parent=11 // pred_check_branch
          %277 = sbr.rel (%p275) target = $region20
        $region19: #{tpu_custom_call.1} parent=11 // pred_region
          %s279 = ssub.s32 3072, 3072
          %280 = vsyncadd [#allocation10], %s279
          %s281 = sshll.u32 [#allocation11], 4
          %s282 = int_to_ptr.vmem [resolvable:$true] %s281
          %287 = dma.hbm_to_vmem [thread:$0]  %s4, 3072, %s282, [#allocation10], 192, 192, 12
        $region20: #{tpu_custom_call.1} parent=11 // pred_fallthru
          _
        // Predicated region
        $region21: #{tpu_custom_call.1} parent=11 // pred_check
          %p288 = pneg %p158
        $region22: #{tpu_custom_call.1} parent=11 // pred_check_branch
          %290 = sbr.rel (%p288) target = $region24
        $region23: #{tpu_custom_call.1} parent=11 // pred_region
          _
        $region24: #{tpu_custom_call.1} parent=11 // pred_fallthru
          _
        // Predicated region
        $region25: #{tpu_custom_call.1} parent=11 // pred_check
          %p291 = pneg %p179
        $region26: #{tpu_custom_call.1} parent=11 // pred_check_branch
          %293 = sbr.rel (%p291) target = $region28
        $region27: #{tpu_custom_call.1} parent=11 // pred_region
          _
        $region28: #{tpu_custom_call.1} parent=11 // pred_fallthru
          _
        // Predicated region
        $region29: #{tpu_custom_call.1} parent=11 // pred_check
          %p294 = pneg %p200
        $region30: #{tpu_custom_call.1} parent=11 // pred_check_branch
          %296 = sbr.rel (%p294) target = $region32
        $region31: #{tpu_custom_call.1} parent=11 // pred_region
          %s298 = ssub.s32 1024, 1024
          %299 = vsyncadd [#allocation13], %s298
          %s300 = sshll.u32 [#allocation12], 4
          %s301 = int_to_ptr.vmem [resolvable:$true] %s300
          %306 = dma.hbm_to_vmem [thread:$0]  %s7, 1024, %s301, [#allocation13], 64, 64, 4
        $region32: #{tpu_custom_call.1} parent=11 // pred_fallthru
          _
        // Predicated region
        $region33: #{tpu_custom_call.1} parent=11 // pred_check
          %p307 = pneg %p221
        $region34: #{tpu_custom_call.1} parent=11 // pred_check_branch
          %309 = sbr.rel (%p307) target = $region36
        $region35: #{tpu_custom_call.1} parent=11 // pred_region
          _
        $region36: #{tpu_custom_call.1} parent=11 // pred_fallthru
          _
      $region12: #{tpu_custom_call.1} parent=5 // pred_fallthru
        _
      %p310 = scmp.lt.s32.totalorder %s29, 2
      // Predicated region
      $region37: #{tpu_custom_call.1} parent=5 // pred_check
        %p311 = pneg %p310
      $region38: #{tpu_custom_call.1} parent=5 // pred_check_branch
        %313 = sbr.rel (%p311) target = $region40
      $region39: #{tpu_custom_call.1} parent=5 // pred_region
        // Predicated region
        $region41: #{tpu_custom_call.1} parent=39 // pred_check
          %p314 = pneg %p63
        $region42: #{tpu_custom_call.1} parent=39 // pred_check_branch
          %316 = sbr.rel (%p314) target = $region44
        $region43: #{tpu_custom_call.1} parent=39 // pred_region
          %s317 = sand.u32 %s53, 1
          %s318 = scalar_lea.sflag [#allocation7], %s317
          %s319 = sand.u32 %s53, 1
          %s320 = smul.addr %s319, 32
          %s321 = scalar_lea.vmem [#allocation6], %s320
          %s322 = smul.u32 8, %s37
          %s324 = ssub.s32 512, 512
          %325 = vsyncadd %s318, %s324
          %s326 = smul.addr %s322, 2
          %s327 = sadd.s32 %s36, %s326
          %s328 = smul.addr %s327, 64
          %s329 = scalar_lea.hbm %s1, %s328
          %s330 = sshll.u32 %s321, 4
          %s331 = int_to_ptr.vmem [resolvable:$true] %s330
          %336 = dma.hbm_to_vmem [thread:$0]  %s329, 512, %s331, %s318, 128, 64, 4
        $region44: #{tpu_custom_call.1} parent=39 // pred_fallthru
          _
        // Predicated region
        $region45: #{tpu_custom_call.1} parent=39 // pred_check
          %p337 = pneg %p89
        $region46: #{tpu_custom_call.1} parent=39 // pred_check_branch
          %339 = sbr.rel (%p337) target = $region48
        $region47: #{tpu_custom_call.1} parent=39 // pred_region
          %p340 = scmp.lt.s32.totalorder %s36, 1
          %s341 = scalar_select %p340, %s36, 1
          %s342 = smul.addr %s341, 8
          %s343 = scalar_lea.vmem %s2, %s342
        $region48: #{tpu_custom_call.1} parent=39 // pred_fallthru
          _
      $region40: #{tpu_custom_call.1} parent=5 // pred_fallthru
        _
      %p344 = scmp.le.s32.totalorder 1, %s29
      %p345 = scmp.lt.s32.totalorder %s29, 3
      %p346 = pnand %p344, %p345
      %p347 = pneg %p346
      // Predicated region
      $region49: #{tpu_custom_call.1} parent=5 // pred_check
        _
      $region50: #{tpu_custom_call.1} parent=5 // pred_check_branch
        %349 = sbr.rel (%p346) target = $region52
      $region51: #{tpu_custom_call.1} parent=5 // pred_region
        %s350 = ssub.s32 %s29, 1
        %s351 = sand.u32 %s56, 1
        %s352 = scalar_lea.sflag [#allocation7], %s351
        %s353 = sand.u32 %s56, 1
        %s354 = smul.addr %s353, 32
        %s355 = scalar_lea.vmem [#allocation6], %s354
        // Predicated region
        $region53: #{tpu_custom_call.1} parent=51 // pred_check
          %p356 = pneg %p69
        $region54: #{tpu_custom_call.1} parent=51 // pred_check_branch
          %358 = sbr.rel (%p356) target = $region56
        $region55: #{tpu_custom_call.1} parent=51 // pred_region
          %359 = dma.done %s352, 512
        $region56: #{tpu_custom_call.1} parent=51 // pred_fallthru
          _
        // Predicated region
        $region57: #{tpu_custom_call.1} parent=51 // pred_check
          %p360 = pneg %p116
        $region58: #{tpu_custom_call.1} parent=51 // pred_check_branch
          %362 = sbr.rel (%p360) target = $region60
        $region59: #{tpu_custom_call.1} parent=51 // pred_region
          %363 = dma.done [#allocation10], 3072
        $region60: #{tpu_custom_call.1} parent=51 // pred_fallthru
          _
        // Predicated region
        $region61: #{tpu_custom_call.1} parent=51 // pred_check
          %p364 = pneg %p137
        $region62: #{tpu_custom_call.1} parent=51 // pred_check_branch
          %366 = sbr.rel (%p364) target = $region64
        $region63: #{tpu_custom_call.1} parent=51 // pred_region
          %367 = dma.done [#allocation10], 3072
        $region64: #{tpu_custom_call.1} parent=51 // pred_fallthru
          _
        // Predicated region
        $region65: #{tpu_custom_call.1} parent=51 // pred_check
          %p368 = pneg %p200
        $region66: #{tpu_custom_call.1} parent=51 // pred_check_branch
          %370 = sbr.rel (%p368) target = $region68
        $region67: #{tpu_custom_call.1} parent=51 // pred_region
          %371 = dma.done [#allocation13], 1024
        $region68: #{tpu_custom_call.1} parent=51 // pred_fallthru
          _
        %s372 = sand.u32 %s56, 1
        %s373 = scalar_lea.sflag [#allocation7], %s372
        %s374 = sand.u32 %s56, 1
        %s375 = smul.addr %s374, 32
        %s376 = scalar_lea.vmem [#allocation6], %s375
        %p377 = pneg %p69
        %p378 = pneg %p66
        %p379 = scmp.lt.s32.totalorder %s38, 1
        %s380 = scalar_select %p379, %s38, 1
        %s381 = smul.addr %s380, 8
        %s382 = scalar_lea.vmem %s2, %s381
        %p383 = pneg %p95
        %p384 = pneg %p92
        %p385 = pneg %p116
        %p386 = pneg %p113
        %p387 = pneg %p137
        %p388 = pneg %p134
        %p389 = pneg %p158
        %p390 = pneg %p155
        %p391 = pneg %p179
        %p392 = pneg %p176
        %p393 = pneg %p200
        %p394 = pneg %p197
        %p395 = pneg %p221
        %p396 = pneg %p218
        %p397 = pneg %p247
        %p398 = pneg %p244
        %s399 = sand.u32 %s234, 1
        %s400 = scalar_lea.sflag [#allocation8], %s399
        %s401 = sand.u32 %s234, 1
        %s402 = smul.addr %s401, 8
        %s403 = scalar_lea.vmem [#allocation14], %s402
        %s404 = smul.u32 8, %s39
        %p405 = scmp.lt.s32.totalorder %s38, 1
        %s406 = scalar_select %p405, %s38, 1
        %s407 = smul.addr %s406, 8
        %s408 = scalar_lea.vmem %s2, %s407
        %s410 = smul.u32 %s39, 8
        %p411 = scmp.eq.s32.totalorder %s39, 0
        // Predicated region
        $region69: #{tpu_custom_call.1} parent=51 // pred_check
          %p412 = pneg %p411
        $region70: #{tpu_custom_call.1} parent=51 // pred_check_branch
          %414 = sbr.rel (%p412) target = $region72
        $region71: #{tpu_custom_call.1} parent=51 // pred_region
          %415 = vst [vmem:[#allocation2] sm:$0xff] 0.0
        $region72: #{tpu_custom_call.1} parent=51 // pred_fallthru
          _
        %s416 = sld [smem:[#allocation5 + %s38]]
        %p417 = scmp.lt.s32.totalorder %s410, %s416
        // Predicated region
        $region73: #{tpu_custom_call.1} parent=51 // pred_check
          %p418 = pneg %p417
        $region74: #{tpu_custom_call.1} parent=51 // pred_check_branch
          %420 = sbr.rel (%p418) target = $region76
        $region75: #{tpu_custom_call.1} parent=51 // pred_region
          %v421 = vld [vmem:[%s355] sm:$0xf]
          %v422 = vld [vmem:[%s355 + $0x4] sm:$0xf]
          %v423 = vld [vmem:[%s355 + $0x8] sm:$0xf]
          %v424 = vld [vmem:[%s355 + $0xc] sm:$0xf]
          %v425 = vld [vmem:[%s355 + $0x10] sm:$0xf]
          %v426 = vld [vmem:[%s355 + $0x14] sm:$0xf]
          %v427 = vld [vmem:[%s355 + $0x18] sm:$0xf]
          %v428 = vld [vmem:[%s355 + $0x1c] sm:$0xf]
          %v429 = vld [vmem:[#allocation9] sm:$0xff]
          %v430 = vld [vmem:[#allocation9 + $0x8] sm:$0xf]
          %v431 = vld [vmem:[#allocation9 + $0xc] sm:$0xff]
          %v432 = vld [vmem:[#allocation9 + $0x14] sm:$0xf]
          %v433 = vld [vmem:[#allocation9 + $0x18] sm:$0xff]
          %v434 = vld [vmem:[#allocation9 + $0x20] sm:$0xf]
          %v435 = vld [vmem:[#allocation9 + $0x24] sm:$0xff]
          %v436 = vld [vmem:[#allocation9 + $0x2c] sm:$0xf]
          %v437 = vld [vmem:[#allocation9 + $0x30] sm:$0xff]
          %v438 = vld [vmem:[#allocation9 + $0x38] sm:$0xf]
          %v439 = vld [vmem:[#allocation9 + $0x3c] sm:$0xff]
          %v440 = vld [vmem:[#allocation9 + $0x44] sm:$0xf]
          %v441 = vld [vmem:[#allocation9 + $0x48] sm:$0xff]
          %v442 = vld [vmem:[#allocation9 + $0x50] sm:$0xf]
          %v443 = vld [vmem:[#allocation9 + $0x54] sm:$0xff]
          %v444 = vld [vmem:[#allocation9 + $0x5c] sm:$0xf]
          %v445 = vld [vmem:[#allocation9 + $0x60] sm:$0xff]
          %v446 = vld [vmem:[#allocation9 + $0x68] sm:$0xf]
          %v447 = vld [vmem:[#allocation9 + $0x6c] sm:$0xff]
          %v448 = vld [vmem:[#allocation9 + $0x74] sm:$0xf]
          %v449 = vld [vmem:[#allocation9 + $0x78] sm:$0xff]
          %v450 = vld [vmem:[#allocation9 + $0x80] sm:$0xf]
          %v451 = vld [vmem:[#allocation9 + $0x84] sm:$0xff]
          %v452 = vld [vmem:[#allocation9 + $0x8c] sm:$0xf]
          %v453 = vld [vmem:[#allocation9 + $0x90] sm:$0xff]
          %v454 = vld [vmem:[#allocation9 + $0x98] sm:$0xf]
          %v455 = vld [vmem:[#allocation9 + $0x9c] sm:$0xff]
          %v456 = vld [vmem:[#allocation9 + $0xa4] sm:$0xf]
          %v457 = vld [vmem:[#allocation9 + $0xa8] sm:$0xff]
          %v458 = vld [vmem:[#allocation9 + $0xb0] sm:$0xf]
          %v459 = vld [vmem:[#allocation9 + $0xb4] sm:$0xff]
          %v460 = vld [vmem:[#allocation9 + $0xbc] sm:$0xf]
          %v461 = vld [vmem:[%s5] sm:$0x7]
          %v463 = vlaneseq
          %v464 = vshrl.u32 %v463, 7
          %v465 = vsub.s32 0, %v464
          %v466 = vrot.slane %v461, %v465
          %v467 = vlaneseq
          %v468 = vshrl.u32 %v467, 7
          %v469 = vsub.s32 1, %v468
          %v470 = vrot.slane %v461, %v469
          %v471 = vlaneseq
          %v472 = vshrl.u32 %v471, 7
          %v473 = vsub.s32 2, %v472
          %v474 = vrot.slane %v461, %v473
          %v486 = vunpack.c.l.b16 %v421
          %v487 = vunpack.c.l.b16 %v422
          %v488 = vunpack.c.l.b16 %v423
          %v489 = vunpack.c.l.b16 %v424
          %v490 = vunpack.c.l.b16 %v425
          %v491 = vunpack.c.l.b16 %v426
          %v492 = vunpack.c.l.b16 %v427
          %v493 = vunpack.c.l.b16 %v428
          %v494 = vpack.c.b16 %v487, %v486
          %v495 = vpack.c.b16 %v489, %v488
          %v496 = vpack.c.b16 %v491, %v490
          %v497 = vpack.c.b16 %v493, %v492
          %v534 = vunpack.c.l.b16 %v429
          %v535 = vunpack.c.h.b16 %v429
          %v536 = vunpack.c.l.b16 %v430
          %v537 = vunpack.c.l.b16 %v431
          %v538 = vunpack.c.h.b16 %v431
          %v539 = vunpack.c.l.b16 %v432
          %v540 = vunpack.c.l.b16 %v433
          %v541 = vunpack.c.h.b16 %v433
          %v542 = vunpack.c.l.b16 %v434
          %v543 = vunpack.c.l.b16 %v435
          %v544 = vunpack.c.h.b16 %v435
          %v545 = vunpack.c.l.b16 %v436
          %v546 = vunpack.c.l.b16 %v437
          %v547 = vunpack.c.h.b16 %v437
          %v548 = vunpack.c.l.b16 %v438
          %v549 = vunpack.c.l.b16 %v439
          %v550 = vunpack.c.h.b16 %v439
          %v551 = vunpack.c.l.b16 %v440
          %v552 = vunpack.c.l.b16 %v441
          %v553 = vunpack.c.h.b16 %v441
          %v554 = vunpack.c.l.b16 %v442
          %v555 = vunpack.c.l.b16 %v443
          %v556 = vunpack.c.h.b16 %v443
          %v557 = vunpack.c.l.b16 %v444
          %v558 = vunpack.c.l.b16 %v445
          %v559 = vunpack.c.h.b16 %v445
          %v560 = vunpack.c.l.b16 %v446
          %v561 = vunpack.c.l.b16 %v447
          %v562 = vunpack.c.h.b16 %v447
          %v563 = vunpack.c.l.b16 %v448
          %v564 = vunpack.c.l.b16 %v449
          %v565 = vunpack.c.h.b16 %v449
          %v566 = vunpack.c.l.b16 %v450
          %v567 = vunpack.c.l.b16 %v451
          %v568 = vunpack.c.h.b16 %v451
          %v569 = vunpack.c.l.b16 %v452
          %v570 = vunpack.c.l.b16 %v453
          %v571 = vunpack.c.h.b16 %v453
          %v572 = vunpack.c.l.b16 %v454
          %v573 = vunpack.c.l.b16 %v455
          %v574 = vunpack.c.h.b16 %v455
          %v575 = vunpack.c.l.b16 %v456
          %v576 = vunpack.c.l.b16 %v457
          %v577 = vunpack.c.h.b16 %v457
          %v578 = vunpack.c.l.b16 %v458
          %v579 = vunpack.c.l.b16 %v459
          %v580 = vunpack.c.h.b16 %v459
          %v581 = vunpack.c.l.b16 %v460
          %v582 = vpack.c.b16 %v537, %v534
          %v583 = vpack.c.b16 %v538, %v535
          %v584 = vpack.c.b16 %v539, %v536
          %v585 = vpack.c.b16 %v543, %v540
          %v586 = vpack.c.b16 %v544, %v541
          %v587 = vpack.c.b16 %v545, %v542
          %v588 = vpack.c.b16 %v549, %v546
          %v589 = vpack.c.b16 %v550, %v547
          %v590 = vpack.c.b16 %v551, %v548
          %v591 = vpack.c.b16 %v555, %v552
          %v592 = vpack.c.b16 %v556, %v553
          %v593 = vpack.c.b16 %v557, %v554
          %v594 = vpack.c.b16 %v561, %v558
          %v595 = vpack.c.b16 %v562, %v559
          %v596 = vpack.c.b16 %v563, %v560
          %v597 = vpack.c.b16 %v567, %v564
          %v598 = vpack.c.b16 %v568, %v565
          %v599 = vpack.c.b16 %v569, %v566
          %v600 = vpack.c.b16 %v573, %v570
          %v601 = vpack.c.b16 %v574, %v571
          %v602 = vpack.c.b16 %v575, %v572
          %v603 = vpack.c.b16 %v579, %v576
          %v604 = vpack.c.b16 %v580, %v577
          %v605 = vpack.c.b16 %v581, %v578
          %630 = vmatprep.subr.bf16.mxu0 %v604
          %631 = vmatpush1.bf16.msra.mxu0 %v603
          %632 = vmatprep.subr.bf16.mxu0 %v601
          %633 = vmatpush1.bf16.msra.mxu0 %v600
          %634 = vmatprep.subr.bf16.mxu0 %v598
          %635 = vmatpush1.bf16.msra.mxu0 %v597
          %636 = vmatprep.subr.bf16.mxu0 %v595
          %637 = vmatpush1.bf16.msra.mxu0 %v594
          %638 = vmatprep.subr.bf16.mxu0 %v592
          %639 = vmatpush1.bf16.msra.mxu0 %v591
          %640 = vmatprep.subr.bf16.mxu0 %v589
          %641 = vmatpush1.bf16.msra.mxu0 %v588
          %642 = vmatprep.subr.bf16.mxu0 %v586
          %643 = vmatpush1.bf16.msra.mxu0 %v585
          %644 = vmatprep.subr.bf16.mxu0 %v583
          %645 = vmatpush1.bf16.msra.mxu0 %v582
          %646 = vmatprep.subr.bf16.mxu0 0
          %647 = vmatpush2.bf16.msra.mxu0 0
          %648 = vmatprep.subr.bf16.mxu0 0
          %649 = vmatpush2.bf16.msra.mxu0 0
          %650 = vmatprep.subr.bf16.mxu0 0
          %651 = vmatpush2.bf16.msra.mxu0 0
          %652 = vmatprep.subr.bf16.mxu0 0
          %653 = vmatpush2.bf16.msra.mxu0 0
          %654 = vmatprep.subr.bf16.mxu0 0
          %655 = vmatpush2.bf16.msra.mxu0 0
          %656 = vmatprep.subr.bf16.mxu0 0
          %657 = vmatpush2.bf16.msra.mxu0 0
          %658 = vmatprep.subr.bf16.mxu0 0
          %659 = vmatpush2.bf16.msra.mxu0 0
          %660 = vmatprep.subr.bf16.mxu0 0
          %661 = vmatpush2.bf16.msra.mxu0 0
          %662 = vmatprep.mubr.bf16.mxu0 0
          %663 = vmatmul.mubr.bf16.gmra.mxu0 %v494
          %v664 = vpop.f32.mrf.mxu0
          %v665 = vadd.f32 %v466, %v664
          %v666 = vpop.f32.mrf.mxu0
          %v667 = vadd.f32 %v470, %v666
          %v668 = vpop.f32.mrf.mxu0
          %v669 = vadd.f32 %v466, %v668
          %v670 = vpop.f32.mrf.mxu0
          %v671 = vadd.f32 %v470, %v670
          %672 = vmatprep.mubr.bf16.mxu0 0
          %673 = vmatmul.mubr.bf16.gmra.mxu0 %v495
          %v674 = vpop.f32.mrf.mxu0
          %v675 = vadd.f32 %v466, %v674
          %v676 = vpop.f32.mrf.mxu0
          %v677 = vadd.f32 %v470, %v676
          %v678 = vpop.f32.mrf.mxu0
          %v679 = vadd.f32 %v466, %v678
          %v680 = vpop.f32.mrf.mxu0
          %v681 = vadd.f32 %v470, %v680
          %682 = vmatprep.mubr.bf16.mxu0 0
          %683 = vmatmul.mubr.bf16.gmra.mxu0 %v496
          %v684 = vpop.f32.mrf.mxu0
          %v685 = vadd.f32 %v466, %v684
          %v686 = vpop.f32.mrf.mxu0
          %v687 = vadd.f32 %v470, %v686
          %v688 = vpop.f32.mrf.mxu0
          %v689 = vadd.f32 %v466, %v688
          %v690 = vpop.f32.mrf.mxu0
          %v691 = vadd.f32 %v470, %v690
          %692 = vmatprep.mubr.bf16.mxu0 0
          %693 = vmatmul.mubr.bf16.gmra.mxu0 %v497
          %v694 = vpop.f32.mrf.mxu0
          %v695 = vadd.f32 %v466, %v694
          %v696 = vpop.f32.mrf.mxu0
          %v697 = vadd.f32 %v470, %v696
          %v698 = vpop.f32.mrf.mxu0
          %v699 = vadd.f32 %v466, %v698
          %v700 = vpop.f32.mrf.mxu0
          %v701 = vadd.f32 %v470, %v700
          %702 = vdwg.mxu0
          %703 = vmatprep.subr.bf16.mxu0 0
          %704 = vmatpush1.bf16.msra.mxu0 %v605
          %705 = vmatprep.subr.bf16.mxu0 0
          %706 = vmatpush1.bf16.msra.mxu0 %v602
          %707 = vmatprep.subr.bf16.mxu0 0
          %708 = vmatpush1.bf16.msra.mxu0 %v599
          %709 = vmatprep.subr.bf16.mxu0 0
          %710 = vmatpush1.bf16.msra.mxu0 %v596
          %711 = vmatprep.subr.bf16.mxu0 0
          %712 = vmatpush1.bf16.msra.mxu0 %v593
          %713 = vmatprep.subr.bf16.mxu0 0
          %714 = vmatpush1.bf16.msra.mxu0 %v590
          %715 = vmatprep.subr.bf16.mxu0 0
          %716 = vmatpush1.bf16.msra.mxu0 %v587
          %717 = vmatprep.subr.bf16.mxu0 0
          %718 = vmatpush1.bf16.msra.mxu0 %v584
          %719 = vmatprep.subr.bf16.mxu0 0
          %720 = vmatpush2.bf16.msra.mxu0 0
          %721 = vmatprep.subr.bf16.mxu0 0
          %722 = vmatpush2.bf16.msra.mxu0 0
          %723 = vmatprep.subr.bf16.mxu0 0
          %724 = vmatpush2.bf16.msra.mxu0 0
          %725 = vmatprep.subr.bf16.mxu0 0
          %726 = vmatpush2.bf16.msra.mxu0 0
          %727 = vmatprep.subr.bf16.mxu0 0
          %728 = vmatpush2.bf16.msra.mxu0 0
          %729 = vmatprep.subr.bf16.mxu0 0
          %730 = vmatpush2.bf16.msra.mxu0 0
          %731 = vmatprep.subr.bf16.mxu0 0
          %732 = vmatpush2.bf16.msra.mxu0 0
          %733 = vmatprep.subr.bf16.mxu0 0
          %734 = vmatpush2.bf16.msra.mxu0 0
          %735 = vmatprep.mubr.bf16.mxu0 0
          %736 = vmatmul.mubr.bf16.gmra.mxu0 %v494
          %v737 = vpop.f32.mrf.mxu0
          %v738 = vadd.f32 %v474, %v737
          %v739 = vpop.f32.mrf.mxu0
          %v740 = vpop.f32.mrf.mxu0
          %v741 = vadd.f32 %v474, %v740
          %v742 = vpop.f32.mrf.mxu0
          %743 = vmatprep.mubr.bf16.mxu0 0
          %744 = vmatmul.mubr.bf16.gmra.mxu0 %v495
          %v745 = vpop.f32.mrf.mxu0
          %v746 = vadd.f32 %v474, %v745
          %v747 = vpop.f32.mrf.mxu0
          %v748 = vpop.f32.mrf.mxu0
          %v749 = vadd.f32 %v474, %v748
          %v750 = vpop.f32.mrf.mxu0
          %751 = vmatprep.mubr.bf16.mxu0 0
          %752 = vmatmul.mubr.bf16.gmra.mxu0 %v496
          %v753 = vpop.f32.mrf.mxu0
          %v754 = vadd.f32 %v474, %v753
          %v755 = vpop.f32.mrf.mxu0
          %v756 = vpop.f32.mrf.mxu0
          %v757 = vadd.f32 %v474, %v756
          %v758 = vpop.f32.mrf.mxu0
          %759 = vmatprep.mubr.bf16.mxu0 0
          %760 = vmatmul.mubr.bf16.gmra.mxu0 %v497
          %v761 = vpop.f32.mrf.mxu0
          %v762 = vadd.f32 %v474, %v761
          %v763 = vpop.f32.mrf.mxu0
          %v764 = vpop.f32.mrf.mxu0
          %v765 = vadd.f32 %v474, %v764
          %v766 = vpop.f32.mrf.mxu0
          %767 = vdwg.mxu0
          %v768 = vpack.c.bf16 %v665, %v665
          %v769 = vpack.c.bf16 %v667, %v667
          %v770 = vpack.c.bf16 %v738, %v738
          %v771 = vpack.c.bf16 %v669, %v669
          %v772 = vpack.c.bf16 %v671, %v671
          %v773 = vpack.c.bf16 %v741, %v741
          %v774 = vpack.c.bf16 %v675, %v675
          %v775 = vpack.c.bf16 %v677, %v677
          %v776 = vpack.c.bf16 %v746, %v746
          %v777 = vpack.c.bf16 %v679, %v679
          %v778 = vpack.c.bf16 %v681, %v681
          %v779 = vpack.c.bf16 %v749, %v749
          %v780 = vpack.c.bf16 %v685, %v685
          %v781 = vpack.c.bf16 %v687, %v687
          %v782 = vpack.c.bf16 %v754, %v754
          %v783 = vpack.c.bf16 %v689, %v689
          %v784 = vpack.c.bf16 %v691, %v691
          %v785 = vpack.c.bf16 %v757, %v757
          %v786 = vpack.c.bf16 %v695, %v695
          %v787 = vpack.c.bf16 %v697, %v697
          %v788 = vpack.c.bf16 %v762, %v762
          %v789 = vpack.c.bf16 %v699, %v699
          %v790 = vpack.c.bf16 %v701, %v701
          %v791 = vpack.c.bf16 %v765, %v765
          %v816 = vunpack.c.l.b16 %v768
          %v817 = vunpack.c.l.b16 %v769
          %v818 = vunpack.c.l.b16 %v770
          %v819 = vunpack.c.l.b16 %v771
          %v820 = vunpack.c.l.b16 %v772
          %v821 = vunpack.c.l.b16 %v773
          %v822 = vunpack.c.l.b16 %v774
          %v823 = vunpack.c.l.b16 %v775
          %v824 = vunpack.c.l.b16 %v776
          %v825 = vunpack.c.l.b16 %v777
          %v826 = vunpack.c.l.b16 %v778
          %v827 = vunpack.c.l.b16 %v779
          %v828 = vunpack.c.l.b16 %v780
          %v829 = vunpack.c.l.b16 %v781
          %v830 = vunpack.c.l.b16 %v782
          %v831 = vunpack.c.l.b16 %v783
          %v832 = vunpack.c.l.b16 %v784
          %v833 = vunpack.c.l.b16 %v785
          %v834 = vunpack.c.l.b16 %v786
          %v835 = vunpack.c.l.b16 %v787
          %v836 = vunpack.c.l.b16 %v788
          %v837 = vunpack.c.l.b16 %v789
          %v838 = vunpack.c.l.b16 %v790
          %v839 = vunpack.c.l.b16 %v791
          %v840 = vpack.c.b16 %v817, %v816
          %v841 = vpack.c.b16 %v818, %v818
          %v842 = vpack.c.b16 %v820, %v819
          %v843 = vpack.c.b16 %v821, %v821
          %v844 = vpack.c.b16 %v823, %v822
          %v845 = vpack.c.b16 %v824, %v824
          %v846 = vpack.c.b16 %v826, %v825
          %v847 = vpack.c.b16 %v827, %v827
          %v848 = vpack.c.b16 %v829, %v828
          %v849 = vpack.c.b16 %v830, %v830
          %v850 = vpack.c.b16 %v832, %v831
          %v851 = vpack.c.b16 %v833, %v833
          %v852 = vpack.c.b16 %v835, %v834
          %v853 = vpack.c.b16 %v836, %v836
          %v854 = vpack.c.b16 %v838, %v837
          %v855 = vpack.c.b16 %v839, %v839
          %872 = vst [vmem:[#allocation3] sm:$0xff] %v840
          %873 = vst [vmem:[#allocation3 + $0x8] sm:$0xf] %v841
          %874 = vst [vmem:[#allocation3 + $0xc] sm:$0xff] %v842
          %875 = vst [vmem:[#allocation3 + $0x14] sm:$0xf] %v843
          %876 = vst [vmem:[#allocation3 + $0x18] sm:$0xff] %v844
          %877 = vst [vmem:[#allocation3 + $0x20] sm:$0xf] %v845
          %878 = vst [vmem:[#allocation3 + $0x24] sm:$0xff] %v846
          %879 = vst [vmem:[#allocation3 + $0x2c] sm:$0xf] %v847
          %880 = vst [vmem:[#allocation3 + $0x30] sm:$0xff] %v848
          %881 = vst [vmem:[#allocation3 + $0x38] sm:$0xf] %v849
          %882 = vst [vmem:[#allocation3 + $0x3c] sm:$0xff] %v850
          %883 = vst [vmem:[#allocation3 + $0x44] sm:$0xf] %v851
          %884 = vst [vmem:[#allocation3 + $0x48] sm:$0xff] %v852
          %885 = vst [vmem:[#allocation3 + $0x50] sm:$0xf] %v853
          %886 = vst [vmem:[#allocation3 + $0x54] sm:$0xff] %v854
          %887 = vst [vmem:[#allocation3 + $0x5c] sm:$0xf] %v855
          %v888 = vld [vmem:[#allocation11] sm:$0xff]
          %v889 = vld [vmem:[#allocation11 + $0x8] sm:$0xf]
          %v890 = vld [vmem:[#allocation11 + $0xc] sm:$0xff]
          %v891 = vld [vmem:[#allocation11 + $0x14] sm:$0xf]
          %v892 = vld [vmem:[#allocation11 + $0x18] sm:$0xff]
          %v893 = vld [vmem:[#allocation11 + $0x20] sm:$0xf]
          %v894 = vld [vmem:[#allocation11 + $0x24] sm:$0xff]
          %v895 = vld [vmem:[#allocation11 + $0x2c] sm:$0xf]
          %v896 = vld [vmem:[#allocation11 + $0x30] sm:$0xff]
          %v897 = vld [vmem:[#allocation11 + $0x38] sm:$0xf]
          %v898 = vld [vmem:[#allocation11 + $0x3c] sm:$0xff]
          %v899 = vld [vmem:[#allocation11 + $0x44] sm:$0xf]
          %v900 = vld [vmem:[#allocation11 + $0x48] sm:$0xff]
          %v901 = vld [vmem:[#allocation11 + $0x50] sm:$0xf]
          %v902 = vld [vmem:[#allocation11 + $0x54] sm:$0xff]
          %v903 = vld [vmem:[#allocation11 + $0x5c] sm:$0xf]
          %v904 = vld [vmem:[#allocation11 + $0x60] sm:$0xff]
          %v905 = vld [vmem:[#allocation11 + $0x68] sm:$0xf]
          %v906 = vld [vmem:[#allocation11 + $0x6c] sm:$0xff]
          %v907 = vld [vmem:[#allocation11 + $0x74] sm:$0xf]
          %v908 = vld [vmem:[#allocation11 + $0x78] sm:$0xff]
          %v909 = vld [vmem:[#allocation11 + $0x80] sm:$0xf]
          %v910 = vld [vmem:[#allocation11 + $0x84] sm:$0xff]
          %v911 = vld [vmem:[#allocation11 + $0x8c] sm:$0xf]
          %v912 = vld [vmem:[#allocation11 + $0x90] sm:$0xff]
          %v913 = vld [vmem:[#allocation11 + $0x98] sm:$0xf]
          %v914 = vld [vmem:[#allocation11 + $0x9c] sm:$0xff]
          %v915 = vld [vmem:[#allocation11 + $0xa4] sm:$0xf]
          %v916 = vld [vmem:[#allocation11 + $0xa8] sm:$0xff]
          %v917 = vld [vmem:[#allocation11 + $0xb0] sm:$0xf]
          %v918 = vld [vmem:[#allocation11 + $0xb4] sm:$0xff]
          %v919 = vld [vmem:[#allocation11 + $0xbc] sm:$0xf]
          %v920 = vld [vmem:[%s6] sm:$0x1]
          %v921 = vld [vmem:[%s408] sm:$0xff]
          %v922 = vld [vmem:[#allocation2] sm:$0xff]
          %v923 = vld [vmem:[#allocation3] sm:$0xff]
          %v924 = vld [vmem:[#allocation3 + $0x8] sm:$0xf]
          %v925 = vunpack.c.l.bf16 %v923
          %v926 = vunpack.c.h.bf16 %v923
          %v927 = vunpack.c.l.bf16 %v924
          %v928 = vpack.c.bf16 %v922, %v922
          %v961 = vunpack.c.l.b16 %v888
          %v962 = vunpack.c.h.b16 %v888
          %v963 = vunpack.c.l.b16 %v889
          %v964 = vunpack.c.l.b16 %v890
          %v965 = vunpack.c.h.b16 %v890
          %v966 = vunpack.c.l.b16 %v891
          %v967 = vunpack.c.l.b16 %v892
          %v968 = vunpack.c.h.b16 %v892
          %v969 = vunpack.c.l.b16 %v893
          %v970 = vunpack.c.l.b16 %v894
          %v971 = vunpack.c.h.b16 %v894
          %v972 = vunpack.c.l.b16 %v895
          %v973 = vunpack.c.l.b16 %v896
          %v974 = vunpack.c.h.b16 %v896
          %v975 = vunpack.c.l.b16 %v897
          %v976 = vunpack.c.l.b16 %v898
          %v977 = vunpack.c.h.b16 %v898
          %v978 = vunpack.c.l.b16 %v899
          %v979 = vunpack.c.l.b16 %v900
          %v980 = vunpack.c.h.b16 %v900
          %v981 = vunpack.c.l.b16 %v901
          %v982 = vunpack.c.l.b16 %v902
          %v983 = vunpack.c.h.b16 %v902
          %v984 = vunpack.c.l.b16 %v903
          %v985 = vunpack.c.l.b16 %v904
          %v986 = vunpack.c.h.b16 %v904
          %v987 = vunpack.c.l.b16 %v905
          %v988 = vunpack.c.l.b16 %v906
          %v989 = vunpack.c.h.b16 %v906
          %v990 = vunpack.c.l.b16 %v907
          %v991 = vunpack.c.l.b16 %v908
          %v992 = vunpack.c.h.b16 %v908
          %v993 = vunpack.c.l.b16 %v909
          %v994 = vunpack.c.l.b16 %v910
          %v995 = vunpack.c.h.b16 %v910
          %v996 = vunpack.c.l.b16 %v911
          %v997 = vunpack.c.l.b16 %v912
          %v998 = vunpack.c.h.b16 %v912
          %v999 = vunpack.c.l.b16 %v913
          %v1000 = vunpack.c.l.b16 %v914
          %v1001 = vunpack.c.h.b16 %v914
          %v1002 = vunpack.c.l.b16 %v915
          %v1003 = vunpack.c.l.b16 %v916
          %v1004 = vunpack.c.h.b16 %v916
          %v1005 = vunpack.c.l.b16 %v917
          %v1006 = vunpack.c.l.b16 %v918
          %v1007 = vunpack.c.h.b16 %v918
          %v1008 = vunpack.c.l.b16 %v919
          %v1009 = vpack.c.b16 %v964, %v961
          %v1010 = vpack.c.b16 %v965, %v962
          %v1011 = vpack.c.b16 %v966, %v963
          %v1012 = vpack.c.b16 %v970, %v967
          %v1013 = vpack.c.b16 %v971, %v968
          %v1014 = vpack.c.b16 %v972, %v969
          %v1015 = vpack.c.b16 %v976, %v973
          %v1016 = vpack.c.b16 %v977, %v974
          %v1017 = vpack.c.b16 %v978, %v975
          %v1018 = vpack.c.b16 %v982, %v979
          %v1019 = vpack.c.b16 %v983, %v980
          %v1020 = vpack.c.b16 %v984, %v981
          %v1021 = vpack.c.b16 %v988, %v985
          %v1022 = vpack.c.b16 %v989, %v986
          %v1023 = vpack.c.b16 %v990, %v987
          %v1024 = vpack.c.b16 %v994, %v991
          %v1025 = vpack.c.b16 %v995, %v992
          %v1026 = vpack.c.b16 %v996, %v993
          %v1027 = vpack.c.b16 %v1000, %v997
          %v1028 = vpack.c.b16 %v1001, %v998
          %v1029 = vpack.c.b16 %v1002, %v999
          %v1030 = vpack.c.b16 %v1006, %v1003
          %v1031 = vpack.c.b16 %v1007, %v1004
          %v1032 = vpack.c.b16 %v1008, %v1005
          %1057 = vmatprep.subr.bf16.mxu0 %v1031
          %1058 = vmatpush1.bf16.msra.mxu0 %v1030
          %1059 = vmatprep.subr.bf16.mxu0 %v1028
          %1060 = vmatpush1.bf16.msra.mxu0 %v1027
          %1061 = vmatprep.subr.bf16.mxu0 %v1025
          %1062 = vmatpush1.bf16.msra.mxu0 %v1024
          %1063 = vmatprep.subr.bf16.mxu0 %v1022
          %1064 = vmatpush1.bf16.msra.mxu0 %v1021
          %1065 = vmatprep.subr.bf16.mxu0 %v1019
          %1066 = vmatpush1.bf16.msra.mxu0 %v1018
          %1067 = vmatprep.subr.bf16.mxu0 %v1016
          %1068 = vmatpush1.bf16.msra.mxu0 %v1015
          %1069 = vmatprep.subr.bf16.mxu0 %v1013
          %1070 = vmatpush1.bf16.msra.mxu0 %v1012
          %1071 = vmatprep.subr.bf16.mxu0 %v1010
          %1072 = vmatpush1.bf16.msra.mxu0 %v1009
          %1073 = vmatprep.subr.bf16.mxu0 0
          %1074 = vmatpush2.bf16.msra.mxu0 0
          %1075 = vmatprep.subr.bf16.mxu0 0
          %1076 = vmatpush2.bf16.msra.mxu0 0
          %1077 = vmatprep.subr.bf16.mxu0 0
          %1078 = vmatpush2.bf16.msra.mxu0 0
          %1079 = vmatprep.subr.bf16.mxu0 0
          %1080 = vmatpush2.bf16.msra.mxu0 0
          %1081 = vmatprep.subr.bf16.mxu0 0
          %1082 = vmatpush2.bf16.msra.mxu0 0
          %1083 = vmatprep.subr.bf16.mxu0 0
          %1084 = vmatpush2.bf16.msra.mxu0 0
          %1085 = vmatprep.subr.bf16.mxu0 0
          %1086 = vmatpush2.bf16.msra.mxu0 0
          %1087 = vmatprep.subr.bf16.mxu0 0
          %1088 = vmatpush2.bf16.msra.mxu0 0
          %1089 = vmatprep.mubr.bf16.mxu0 0
          %1090 = vmatmul.mubr.bf16.gmra.mxu0 %v928
          %v1091 = vpop.f32.mrf.mxu0
          %v1092 = vadd.f32 0.0, %v1091
          %v1093 = vpop.f32.mrf.mxu0
          %v1094 = vadd.f32 0.0, %v1093
          %v1095 = vpop.f32.mrf.mxu0
          %v1096 = vpop.f32.mrf.mxu0
          %1097 = vdwg.mxu0
          %1098 = vmatprep.subr.bf16.mxu0 0
          %1099 = vmatpush1.bf16.msra.mxu0 %v1032
          %1100 = vmatprep.subr.bf16.mxu0 0
          %1101 = vmatpush1.bf16.msra.mxu0 %v1029
          %1102 = vmatprep.subr.bf16.mxu0 0
          %1103 = vmatpush1.bf16.msra.mxu0 %v1026
          %1104 = vmatprep.subr.bf16.mxu0 0
          %1105 = vmatpush1.bf16.msra.mxu0 %v1023
          %1106 = vmatprep.subr.bf16.mxu0 0
          %1107 = vmatpush1.bf16.msra.mxu0 %v1020
          %1108 = vmatprep.subr.bf16.mxu0 0
          %1109 = vmatpush1.bf16.msra.mxu0 %v1017
          %1110 = vmatprep.subr.bf16.mxu0 0
          %1111 = vmatpush1.bf16.msra.mxu0 %v1014
          %1112 = vmatprep.subr.bf16.mxu0 0
          %1113 = vmatpush1.bf16.msra.mxu0 %v1011
          %1114 = vmatprep.subr.bf16.mxu0 0
          %1115 = vmatpush2.bf16.msra.mxu0 0
          %1116 = vmatprep.subr.bf16.mxu0 0
          %1117 = vmatpush2.bf16.msra.mxu0 0
          %1118 = vmatprep.subr.bf16.mxu0 0
          %1119 = vmatpush2.bf16.msra.mxu0 0
          %1120 = vmatprep.subr.bf16.mxu0 0
          %1121 = vmatpush2.bf16.msra.mxu0 0
          %1122 = vmatprep.subr.bf16.mxu0 0
          %1123 = vmatpush2.bf16.msra.mxu0 0
          %1124 = vmatprep.subr.bf16.mxu0 0
          %1125 = vmatpush2.bf16.msra.mxu0 0
          %1126 = vmatprep.subr.bf16.mxu0 0
          %1127 = vmatpush2.bf16.msra.mxu0 0
          %1128 = vmatprep.subr.bf16.mxu0 0
          %1129 = vmatpush2.bf16.msra.mxu0 0
          %1130 = vmatprep.mubr.bf16.mxu0 0
          %1131 = vmatmul.mubr.bf16.gmra.mxu0 %v928
          %v1132 = vpop.f32.mrf.mxu0
          %v1133 = vadd.f32 0.0, %v1132
          %v1134 = vpop.f32.mrf.mxu0
          %v1135 = vpop.f32.mrf.mxu0
          %v1136 = vpop.f32.mrf.mxu0
          %1137 = vdwg.mxu0
          %v1138 = vadd.f32 %v925, %v1092
          %v1139 = vxor.u32 %v1138, 2147483648
          %v1140 = vmul.f32 %v1139, 1.442695
          %v1141 = vpow.pop %v1140
          %v1142 = vadd.f32 %v1141, 1.0
          %v1143 = vrcp.pop %v1142
          %v1144 = vmul.f32 1.0, %v1143
          %v1145 = vadd.f32 %v926, %v1094
          %v1146 = vxor.u32 %v1145, 2147483648
          %v1147 = vmul.f32 %v1146, 1.442695
          %v1148 = vpow.pop %v1147
          %v1149 = vadd.f32 %v1148, 1.0
          %v1150 = vrcp.pop %v1149
          %v1151 = vmul.f32 1.0, %v1150
          %v1153 = vlaneseq
          %v1154 = vshrl.u32 %v1153, 7
          %v1155 = vsub.s32 0, %v1154
          %v1156 = vrot.slane %v920, %v1155
          %v1158 = vadd.f32 %v1133, %v1156
          %v1159 = vmul.f32 %v1144, %v1158
          %v1160 = vadd.f32 %v927, %v1159
          %v1161 = vtanh.pop %v1160
          %v1162 = vsub.f32 1.0, %v1151
          %v1163 = vmul.f32 %v1162, %v1161
          %v1164 = vmul.f32 %v1151, %v922
          %v1165 = vadd.f32 %v1163, %v1164
          %v1166 = vstv %s410
          %vm1167 = vcmp.lt.s32.totalorder %v1166, %v921
          %v1168 = vsel %vm1167, 1, 0
          %1169 = vset.pattern.permute.xlu0 0
          %1170 = vperm.xlu0 %1169, %v1168
          %v1171 = vpop.permute.xlu0 %1170
          %vm1172 = vcmp.eq.s32.totalorder %v1171, 1
          %v1173 = vsel %vm1172, %v1165, %v922
          %s1174 = scalar_lea.vmem [#allocation3], 12
          %v1175 = vld [vmem:[%s1174] sm:$0xff]
          %v1176 = vld [vmem:[%s1174 + $0x8] sm:$0xf]
          %v1177 = vunpack.c.l.bf16 %v1175
          %v1178 = vunpack.c.h.bf16 %v1175
          %v1179 = vunpack.c.l.bf16 %v1176
          %v1180 = vpack.c.bf16 %v1173, %v1173
          %1181 = vmatprep.subr.bf16.mxu0 %v1031
          %1182 = vmatpush1.bf16.msra.mxu0 %v1030
          %1183 = vmatprep.subr.bf16.mxu0 %v1028
          %1184 = vmatpush1.bf16.msra.mxu0 %v1027
          %1185 = vmatprep.subr.bf16.mxu0 %v1025
          %1186 = vmatpush1.bf16.msra.mxu0 %v1024
          %1187 = vmatprep.subr.bf16.mxu0 %v1022
          %1188 = vmatpush1.bf16.msra.mxu0 %v1021
          %1189 = vmatprep.subr.bf16.mxu0 %v1019
          %1190 = vmatpush1.bf16.msra.mxu0 %v1018
          %1191 = vmatprep.subr.bf16.mxu0 %v1016
          %1192 = vmatpush1.bf16.msra.mxu0 %v1015
          %1193 = vmatprep.subr.bf16.mxu0 %v1013
          %1194 = vmatpush1.bf16.msra.mxu0 %v1012
          %1195 = vmatprep.subr.bf16.mxu0 %v1010
          %1196 = vmatpush1.bf16.msra.mxu0 %v1009
          %1197 = vmatprep.subr.bf16.mxu0 0
          %1198 = vmatpush2.bf16.msra.mxu0 0
          %1199 = vmatprep.subr.bf16.mxu0 0
          %1200 = vmatpush2.bf16.msra.mxu0 0
          %1201 = vmatprep.subr.bf16.mxu0 0
          %1202 = vmatpush2.bf16.msra.mxu0 0
          %1203 = vmatprep.subr.bf16.mxu0 0
          %1204 = vmatpush2.bf16.msra.mxu0 0
          %1205 = vmatprep.subr.bf16.mxu0 0
          %1206 = vmatpush2.bf16.msra.mxu0 0
          %1207 = vmatprep.subr.bf16.mxu0 0
          %1208 = vmatpush2.bf16.msra.mxu0 0
          %1209 = vmatprep.subr.bf16.mxu0 0
          %1210 = vmatpush2.bf16.msra.mxu0 0
          %1211 = vmatprep.subr.bf16.mxu0 0
          %1212 = vmatpush2.bf16.msra.mxu0 0
          %1213 = vmatprep.mubr.bf16.mxu0 0
          %1214 = vmatmul.mubr.bf16.gmra.mxu0 %v1180
          %v1215 = vpop.f32.mrf.mxu0
          %v1216 = vadd.f32 0.0, %v1215
          %v1217 = vpop.f32.mrf.mxu0
          %v1218 = vadd.f32 0.0, %v1217
          %v1219 = vpop.f32.mrf.mxu0
          %v1220 = vpop.f32.mrf.mxu0
          %1221 = vdwg.mxu0
          %1222 = vmatprep.subr.bf16.mxu0 0
          %1223 = vmatpush1.bf16.msra.mxu0 %v1032
          %1224 = vmatprep.subr.bf16.mxu0 0
          %1225 = vmatpush1.bf16.msra.mxu0 %v1029
          %1226 = vmatprep.subr.bf16.mxu0 0
          %1227 = vmatpush1.bf16.msra.mxu0 %v1026
          %1228 = vmatprep.subr.bf16.mxu0 0
          %1229 = vmatpush1.bf16.msra.mxu0 %v1023
          %1230 = vmatprep.subr.bf16.mxu0 0
          %1231 = vmatpush1.bf16.msra.mxu0 %v1020
          %1232 = vmatprep.subr.bf16.mxu0 0
          %1233 = vmatpush1.bf16.msra.mxu0 %v1017
          %1234 = vmatprep.subr.bf16.mxu0 0
          %1235 = vmatpush1.bf16.msra.mxu0 %v1014
          %1236 = vmatprep.subr.bf16.mxu0 0
          %1237 = vmatpush1.bf16.msra.mxu0 %v1011
          %1238 = vmatprep.subr.bf16.mxu0 0
          %1239 = vmatpush2.bf16.msra.mxu0 0
          %1240 = vmatprep.subr.bf16.mxu0 0
          %1241 = vmatpush2.bf16.msra.mxu0 0
          %1242 = vmatprep.subr.bf16.mxu0 0
          %1243 = vmatpush2.bf16.msra.mxu0 0
          %1244 = vmatprep.subr.bf16.mxu0 0
          %1245 = vmatpush2.bf16.msra.mxu0 0
          %1246 = vmatprep.subr.bf16.mxu0 0
          %1247 = vmatpush2.bf16.msra.mxu0 0
          %1248 = vmatprep.subr.bf16.mxu0 0
          %1249 = vmatpush2.bf16.msra.mxu0 0
          %1250 = vmatprep.subr.bf16.mxu0 0
          %1251 = vmatpush2.bf16.msra.mxu0 0
          %1252 = vmatprep.subr.bf16.mxu0 0
          %1253 = vmatpush2.bf16.msra.mxu0 0
          %1254 = vmatprep.mubr.bf16.mxu0 0
          %1255 = vmatmul.mubr.bf16.gmra.mxu0 %v1180
          %v1256 = vpop.f32.mrf.mxu0
          %v1257 = vadd.f32 0.0, %v1256
          %v1258 = vpop.f32.mrf.mxu0
          %v1259 = vpop.f32.mrf.mxu0
          %v1260 = vpop.f32.mrf.mxu0
          %1261 = vdwg.mxu0
          %v1262 = vadd.f32 %v1177, %v1216
          %v1263 = vxor.u32 %v1262, 2147483648
          %v1264 = vmul.f32 %v1263, 1.442695
          %v1265 = vpow.pop %v1264
          %v1266 = vadd.f32 %v1265, 1.0
          %v1267 = vrcp.pop %v1266
          %v1268 = vmul.f32 1.0, %v1267
          %v1269 = vadd.f32 %v1178, %v1218
          %v1270 = vxor.u32 %v1269, 2147483648
          %v1271 = vmul.f32 %v1270, 1.442695
          %v1272 = vpow.pop %v1271
          %v1273 = vadd.f32 %v1272, 1.0
          %v1274 = vrcp.pop %v1273
          %v1275 = vmul.f32 1.0, %v1274
          %v1276 = vadd.f32 %v1257, %v1156
          %v1277 = vmul.f32 %v1268, %v1276
          %v1278 = vadd.f32 %v1179, %v1277
          %v1279 = vtanh.pop %v1278
          %v1280 = vsub.f32 1.0, %v1275
          %v1281 = vmul.f32 %v1280, %v1279
          %v1282 = vmul.f32 %v1275, %v1173
          %v1283 = vadd.f32 %v1281, %v1282
          %s1284 = sadd.s32 %s410, 1
          %v1285 = vstv %s1284
          %vm1286 = vcmp.lt.s32.totalorder %v1285, %v921
          %v1287 = vsel %vm1286, 1, 0
          %1288 = vset.pattern.permute.xlu0 0
          %1289 = vperm.xlu0 %1288, %v1287
          %v1290 = vpop.permute.xlu0 %1289
          %vm1291 = vcmp.eq.s32.totalorder %v1290, 1
          %v1292 = vsel %vm1291, %v1283, %v1173
          %s1293 = scalar_lea.vmem [#allocation3], 24
          %v1294 = vld [vmem:[%s1293] sm:$0xff]
          %v1295 = vld [vmem:[%s1293 + $0x8] sm:$0xf]
          %v1296 = vunpack.c.l.bf16 %v1294
          %v1297 = vunpack.c.h.bf16 %v1294
          %v1298 = vunpack.c.l.bf16 %v1295
          %v1299 = vpack.c.bf16 %v1292, %v1292
          %1300 = vmatprep.subr.bf16.mxu0 %v1031
          %1301 = vmatpush1.bf16.msra.mxu0 %v1030
          %1302 = vmatprep.subr.bf16.mxu0 %v1028
          %1303 = vmatpush1.bf16.msra.mxu0 %v1027
          %1304 = vmatprep.subr.bf16.mxu0 %v1025
          %1305 = vmatpush1.bf16.msra.mxu0 %v1024
          %1306 = vmatprep.subr.bf16.mxu0 %v1022
          %1307 = vmatpush1.bf16.msra.mxu0 %v1021
          %1308 = vmatprep.subr.bf16.mxu0 %v1019
          %1309 = vmatpush1.bf16.msra.mxu0 %v1018
          %1310 = vmatprep.subr.bf16.mxu0 %v1016
          %1311 = vmatpush1.bf16.msra.mxu0 %v1015
          %1312 = vmatprep.subr.bf16.mxu0 %v1013
          %1313 = vmatpush1.bf16.msra.mxu0 %v1012
          %1314 = vmatprep.subr.bf16.mxu0 %v1010
          %1315 = vmatpush1.bf16.msra.mxu0 %v1009
          %1316 = vmatprep.subr.bf16.mxu0 0
          %1317 = vmatpush2.bf16.msra.mxu0 0
          %1318 = vmatprep.subr.bf16.mxu0 0
          %1319 = vmatpush2.bf16.msra.mxu0 0
          %1320 = vmatprep.subr.bf16.mxu0 0
          %1321 = vmatpush2.bf16.msra.mxu0 0
          %1322 = vmatprep.subr.bf16.mxu0 0
          %1323 = vmatpush2.bf16.msra.mxu0 0
          %1324 = vmatprep.subr.bf16.mxu0 0
          %1325 = vmatpush2.bf16.msra.mxu0 0
          %1326 = vmatprep.subr.bf16.mxu0 0
          %1327 = vmatpush2.bf16.msra.mxu0 0
          %1328 = vmatprep.subr.bf16.mxu0 0
          %1329 = vmatpush2.bf16.msra.mxu0 0
          %1330 = vmatprep.subr.bf16.mxu0 0
          %1331 = vmatpush2.bf16.msra.mxu0 0
          %1332 = vmatprep.mubr.bf16.mxu0 0
          %1333 = vmatmul.mubr.bf16.gmra.mxu0 %v1299
          %v1334 = vpop.f32.mrf.mxu0
          %v1335 = vadd.f32 0.0, %v1334
          %v1336 = vpop.f32.mrf.mxu0
          %v1337 = vadd.f32 0.0, %v1336
          %v1338 = vpop.f32.mrf.mxu0
          %v1339 = vpop.f32.mrf.mxu0
          %1340 = vdwg.mxu0
          %1341 = vmatprep.subr.bf16.mxu0 0
          %1342 = vmatpush1.bf16.msra.mxu0 %v1032
          %1343 = vmatprep.subr.bf16.mxu0 0
          %1344 = vmatpush1.bf16.msra.mxu0 %v1029
          %1345 = vmatprep.subr.bf16.mxu0 0
          %1346 = vmatpush1.bf16.msra.mxu0 %v1026
          %1347 = vmatprep.subr.bf16.mxu0 0
          %1348 = vmatpush1.bf16.msra.mxu0 %v1023
          %1349 = vmatprep.subr.bf16.mxu0 0
          %1350 = vmatpush1.bf16.msra.mxu0 %v1020
          %1351 = vmatprep.subr.bf16.mxu0 0
          %1352 = vmatpush1.bf16.msra.mxu0 %v1017
          %1353 = vmatprep.subr.bf16.mxu0 0
          %1354 = vmatpush1.bf16.msra.mxu0 %v1014
          %1355 = vmatprep.subr.bf16.mxu0 0
          %1356 = vmatpush1.bf16.msra.mxu0 %v1011
          %1357 = vmatprep.subr.bf16.mxu0 0
          %1358 = vmatpush2.bf16.msra.mxu0 0
          %1359 = vmatprep.subr.bf16.mxu0 0
          %1360 = vmatpush2.bf16.msra.mxu0 0
          %1361 = vmatprep.subr.bf16.mxu0 0
          %1362 = vmatpush2.bf16.msra.mxu0 0
          %1363 = vmatprep.subr.bf16.mxu0 0
          %1364 = vmatpush2.bf16.msra.mxu0 0
          %1365 = vmatprep.subr.bf16.mxu0 0
          %1366 = vmatpush2.bf16.msra.mxu0 0
          %1367 = vmatprep.subr.bf16.mxu0 0
          %1368 = vmatpush2.bf16.msra.mxu0 0
          %1369 = vmatprep.subr.bf16.mxu0 0
          %1370 = vmatpush2.bf16.msra.mxu0 0
          %1371 = vmatprep.subr.bf16.mxu0 0
          %1372 = vmatpush2.bf16.msra.mxu0 0
          %1373 = vmatprep.mubr.bf16.mxu0 0
          %1374 = vmatmul.mubr.bf16.gmra.mxu0 %v1299
          %v1375 = vpop.f32.mrf.mxu0
          %v1376 = vadd.f32 0.0, %v1375
          %v1377 = vpop.f32.mrf.mxu0
          %v1378 = vpop.f32.mrf.mxu0
          %v1379 = vpop.f32.mrf.mxu0
          %1380 = vdwg.mxu0
          %v1381 = vadd.f32 %v1296, %v1335
          %v1382 = vxor.u32 %v1381, 2147483648
          %v1383 = vmul.f32 %v1382, 1.442695
          %v1384 = vpow.pop %v1383
          %v1385 = vadd.f32 %v1384, 1.0
          %v1386 = vrcp.pop %v1385
          %v1387 = vmul.f32 1.0, %v1386
          %v1388 = vadd.f32 %v1297, %v1337
          %v1389 = vxor.u32 %v1388, 2147483648
          %v1390 = vmul.f32 %v1389, 1.442695
          %v1391 = vpow.pop %v1390
          %v1392 = vadd.f32 %v1391, 1.0
          %v1393 = vrcp.pop %v1392
          %v1394 = vmul.f32 1.0, %v1393
          %v1395 = vadd.f32 %v1376, %v1156
          %v1396 = vmul.f32 %v1387, %v1395
          %v1397 = vadd.f32 %v1298, %v1396
          %v1398 = vtanh.pop %v1397
          %v1399 = vsub.f32 1.0, %v1394
          %v1400 = vmul.f32 %v1399, %v1398
          %v1401 = vmul.f32 %v1394, %v1292
          %v1402 = vadd.f32 %v1400, %v1401
          %s1403 = sadd.s32 %s410, 2
          %v1404 = vstv %s1403
          %vm1405 = vcmp.lt.s32.totalorder %v1404, %v921
          %v1406 = vsel %vm1405, 1, 0
          %1407 = vset.pattern.permute.xlu0 0
          %1408 = vperm.xlu0 %1407, %v1406
          %v1409 = vpop.permute.xlu0 %1408
          %vm1410 = vcmp.eq.s32.totalorder %v1409, 1
          %v1411 = vsel %vm1410, %v1402, %v1292
          %s1412 = scalar_lea.vmem [#allocation3], 36
          %v1413 = vld [vmem:[%s1412] sm:$0xff]
          %v1414 = vld [vmem:[%s1412 + $0x8] sm:$0xf]
          %v1415 = vunpack.c.l.bf16 %v1413
          %v1416 = vunpack.c.h.bf16 %v1413
          %v1417 = vunpack.c.l.bf16 %v1414
          %v1418 = vpack.c.bf16 %v1411, %v1411
          %1419 = vmatprep.subr.bf16.mxu0 %v1031
          %1420 = vmatpush1.bf16.msra.mxu0 %v1030
          %1421 = vmatprep.subr.bf16.mxu0 %v1028
          %1422 = vmatpush1.bf16.msra.mxu0 %v1027
          %1423 = vmatprep.subr.bf16.mxu0 %v1025
          %1424 = vmatpush1.bf16.msra.mxu0 %v1024
          %1425 = vmatprep.subr.bf16.mxu0 %v1022
          %1426 = vmatpush1.bf16.msra.mxu0 %v1021
          %1427 = vmatprep.subr.bf16.mxu0 %v1019
          %1428 = vmatpush1.bf16.msra.mxu0 %v1018
          %1429 = vmatprep.subr.bf16.mxu0 %v1016
          %1430 = vmatpush1.bf16.msra.mxu0 %v1015
          %1431 = vmatprep.subr.bf16.mxu0 %v1013
          %1432 = vmatpush1.bf16.msra.mxu0 %v1012
          %1433 = vmatprep.subr.bf16.mxu0 %v1010
          %1434 = vmatpush1.bf16.msra.mxu0 %v1009
          %1435 = vmatprep.subr.bf16.mxu0 0
          %1436 = vmatpush2.bf16.msra.mxu0 0
          %1437 = vmatprep.subr.bf16.mxu0 0
          %1438 = vmatpush2.bf16.msra.mxu0 0
          %1439 = vmatprep.subr.bf16.mxu0 0
          %1440 = vmatpush2.bf16.msra.mxu0 0
          %1441 = vmatprep.subr.bf16.mxu0 0
          %1442 = vmatpush2.bf16.msra.mxu0 0
          %1443 = vmatprep.subr.bf16.mxu0 0
          %1444 = vmatpush2.bf16.msra.mxu0 0
          %1445 = vmatprep.subr.bf16.mxu0 0
          %1446 = vmatpush2.bf16.msra.mxu0 0
          %1447 = vmatprep.subr.bf16.mxu0 0
          %1448 = vmatpush2.bf16.msra.mxu0 0
          %1449 = vmatprep.subr.bf16.mxu0 0
          %1450 = vmatpush2.bf16.msra.mxu0 0
          %1451 = vmatprep.mubr.bf16.mxu0 0
          %1452 = vmatmul.mubr.bf16.gmra.mxu0 %v1418
          %v1453 = vpop.f32.mrf.mxu0
          %v1454 = vadd.f32 0.0, %v1453
          %v1455 = vpop.f32.mrf.mxu0
          %v1456 = vadd.f32 0.0, %v1455
          %v1457 = vpop.f32.mrf.mxu0
          %v1458 = vpop.f32.mrf.mxu0
          %1459 = vdwg.mxu0
          %1460 = vmatprep.subr.bf16.mxu0 0
          %1461 = vmatpush1.bf16.msra.mxu0 %v1032
          %1462 = vmatprep.subr.bf16.mxu0 0
          %1463 = vmatpush1.bf16.msra.mxu0 %v1029
          %1464 = vmatprep.subr.bf16.mxu0 0
          %1465 = vmatpush1.bf16.msra.mxu0 %v1026
          %1466 = vmatprep.subr.bf16.mxu0 0
          %1467 = vmatpush1.bf16.msra.mxu0 %v1023
          %1468 = vmatprep.subr.bf16.mxu0 0
          %1469 = vmatpush1.bf16.msra.mxu0 %v1020
          %1470 = vmatprep.subr.bf16.mxu0 0
          %1471 = vmatpush1.bf16.msra.mxu0 %v1017
          %1472 = vmatprep.subr.bf16.mxu0 0
          %1473 = vmatpush1.bf16.msra.mxu0 %v1014
          %1474 = vmatprep.subr.bf16.mxu0 0
          %1475 = vmatpush1.bf16.msra.mxu0 %v1011
          %1476 = vmatprep.subr.bf16.mxu0 0
          %1477 = vmatpush2.bf16.msra.mxu0 0
          %1478 = vmatprep.subr.bf16.mxu0 0
          %1479 = vmatpush2.bf16.msra.mxu0 0
          %1480 = vmatprep.subr.bf16.mxu0 0
          %1481 = vmatpush2.bf16.msra.mxu0 0
          %1482 = vmatprep.subr.bf16.mxu0 0
          %1483 = vmatpush2.bf16.msra.mxu0 0
          %1484 = vmatprep.subr.bf16.mxu0 0
          %1485 = vmatpush2.bf16.msra.mxu0 0
          %1486 = vmatprep.subr.bf16.mxu0 0
          %1487 = vmatpush2.bf16.msra.mxu0 0
          %1488 = vmatprep.subr.bf16.mxu0 0
          %1489 = vmatpush2.bf16.msra.mxu0 0
          %1490 = vmatprep.subr.bf16.mxu0 0
          %1491 = vmatpush2.bf16.msra.mxu0 0
          %1492 = vmatprep.mubr.bf16.mxu0 0
          %1493 = vmatmul.mubr.bf16.gmra.mxu0 %v1418
          %v1494 = vpop.f32.mrf.mxu0
          %v1495 = vadd.f32 0.0, %v1494
          %v1496 = vpop.f32.mrf.mxu0
          %v1497 = vpop.f32.mrf.mxu0
          %v1498 = vpop.f32.mrf.mxu0
          %1499 = vdwg.mxu0
          %v1500 = vadd.f32 %v1415, %v1454
          %v1501 = vxor.u32 %v1500, 2147483648
          %v1502 = vmul.f32 %v1501, 1.442695
          %v1503 = vpow.pop %v1502
          %v1504 = vadd.f32 %v1503, 1.0
          %v1505 = vrcp.pop %v1504
          %v1506 = vmul.f32 1.0, %v1505
          %v1507 = vadd.f32 %v1416, %v1456
          %v1508 = vxor.u32 %v1507, 2147483648
          %v1509 = vmul.f32 %v1508, 1.442695
          %v1510 = vpow.pop %v1509
          %v1511 = vadd.f32 %v1510, 1.0
          %v1512 = vrcp.pop %v1511
          %v1513 = vmul.f32 1.0, %v1512
          %v1514 = vadd.f32 %v1495, %v1156
          %v1515 = vmul.f32 %v1506, %v1514
          %v1516 = vadd.f32 %v1417, %v1515
          %v1517 = vtanh.pop %v1516
          %v1518 = vsub.f32 1.0, %v1513
          %v1519 = vmul.f32 %v1518, %v1517
          %v1520 = vmul.f32 %v1513, %v1411
          %v1521 = vadd.f32 %v1519, %v1520
          %s1522 = sadd.s32 %s410, 3
          %v1523 = vstv %s1522
          %vm1524 = vcmp.lt.s32.totalorder %v1523, %v921
          %v1525 = vsel %vm1524, 1, 0
          %1526 = vset.pattern.permute.xlu0 0
          %1527 = vperm.xlu0 %1526, %v1525
          %v1528 = vpop.permute.xlu0 %1527
          %vm1529 = vcmp.eq.s32.totalorder %v1528, 1
          %v1530 = vsel %vm1529, %v1521, %v1411
          %s1531 = scalar_lea.vmem [#allocation3], 48
          %v1532 = vld [vmem:[%s1531] sm:$0xff]
          %v1533 = vld [vmem:[%s1531 + $0x8] sm:$0xf]
          %v1534 = vunpack.c.l.bf16 %v1532
          %v1535 = vunpack.c.h.bf16 %v1532
          %v1536 = vunpack.c.l.bf16 %v1533
          %v1537 = vpack.c.bf16 %v1530, %v1530
          %1538 = vmatprep.subr.bf16.mxu0 %v1031
          %1539 = vmatpush1.bf16.msra.mxu0 %v1030
          %1540 = vmatprep.subr.bf16.mxu0 %v1028
          %1541 = vmatpush1.bf16.msra.mxu0 %v1027
          %1542 = vmatprep.subr.bf16.mxu0 %v1025
          %1543 = vmatpush1.bf16.msra.mxu0 %v1024
          %1544 = vmatprep.subr.bf16.mxu0 %v1022
          %1545 = vmatpush1.bf16.msra.mxu0 %v1021
          %1546 = vmatprep.subr.bf16.mxu0 %v1019
          %1547 = vmatpush1.bf16.msra.mxu0 %v1018
          %1548 = vmatprep.subr.bf16.mxu0 %v1016
          %1549 = vmatpush1.bf16.msra.mxu0 %v1015
          %1550 = vmatprep.subr.bf16.mxu0 %v1013
          %1551 = vmatpush1.bf16.msra.mxu0 %v1012
          %1552 = vmatprep.subr.bf16.mxu0 %v1010
          %1553 = vmatpush1.bf16.msra.mxu0 %v1009
          %1554 = vmatprep.subr.bf16.mxu0 0
          %1555 = vmatpush2.bf16.msra.mxu0 0
          %1556 = vmatprep.subr.bf16.mxu0 0
          %1557 = vmatpush2.bf16.msra.mxu0 0
          %1558 = vmatprep.subr.bf16.mxu0 0
          %1559 = vmatpush2.bf16.msra.mxu0 0
          %1560 = vmatprep.subr.bf16.mxu0 0
          %1561 = vmatpush2.bf16.msra.mxu0 0
          %1562 = vmatprep.subr.bf16.mxu0 0
          %1563 = vmatpush2.bf16.msra.mxu0 0
          %1564 = vmatprep.subr.bf16.mxu0 0
          %1565 = vmatpush2.bf16.msra.mxu0 0
          %1566 = vmatprep.subr.bf16.mxu0 0
          %1567 = vmatpush2.bf16.msra.mxu0 0
          %1568 = vmatprep.subr.bf16.mxu0 0
          %1569 = vmatpush2.bf16.msra.mxu0 0
          %1570 = vmatprep.mubr.bf16.mxu0 0
          %1571 = vmatmul.mubr.bf16.gmra.mxu0 %v1537
          %v1572 = vpop.f32.mrf.mxu0
          %v1573 = vadd.f32 0.0, %v1572
          %v1574 = vpop.f32.mrf.mxu0
          %v1575 = vadd.f32 0.0, %v1574
          %v1576 = vpop.f32.mrf.mxu0
          %v1577 = vpop.f32.mrf.mxu0
          %1578 = vdwg.mxu0
          %1579 = vmatprep.subr.bf16.mxu0 0
          %1580 = vmatpush1.bf16.msra.mxu0 %v1032
          %1581 = vmatprep.subr.bf16.mxu0 0
          %1582 = vmatpush1.bf16.msra.mxu0 %v1029
          %1583 = vmatprep.subr.bf16.mxu0 0
          %1584 = vmatpush1.bf16.msra.mxu0 %v1026
          %1585 = vmatprep.subr.bf16.mxu0 0
          %1586 = vmatpush1.bf16.msra.mxu0 %v1023
          %1587 = vmatprep.subr.bf16.mxu0 0
          %1588 = vmatpush1.bf16.msra.mxu0 %v1020
          %1589 = vmatprep.subr.bf16.mxu0 0
          %1590 = vmatpush1.bf16.msra.mxu0 %v1017
          %1591 = vmatprep.subr.bf16.mxu0 0
          %1592 = vmatpush1.bf16.msra.mxu0 %v1014
          %1593 = vmatprep.subr.bf16.mxu0 0
          %1594 = vmatpush1.bf16.msra.mxu0 %v1011
          %1595 = vmatprep.subr.bf16.mxu0 0
          %1596 = vmatpush2.bf16.msra.mxu0 0
          %1597 = vmatprep.subr.bf16.mxu0 0
          %1598 = vmatpush2.bf16.msra.mxu0 0
          %1599 = vmatprep.subr.bf16.mxu0 0
          %1600 = vmatpush2.bf16.msra.mxu0 0
          %1601 = vmatprep.subr.bf16.mxu0 0
          %1602 = vmatpush2.bf16.msra.mxu0 0
          %1603 = vmatprep.subr.bf16.mxu0 0
          %1604 = vmatpush2.bf16.msra.mxu0 0
          %1605 = vmatprep.subr.bf16.mxu0 0
          %1606 = vmatpush2.bf16.msra.mxu0 0
          %1607 = vmatprep.subr.bf16.mxu0 0
          %1608 = vmatpush2.bf16.msra.mxu0 0
          %1609 = vmatprep.subr.bf16.mxu0 0
          %1610 = vmatpush2.bf16.msra.mxu0 0
          %1611 = vmatprep.mubr.bf16.mxu0 0
          %1612 = vmatmul.mubr.bf16.gmra.mxu0 %v1537
          %v1613 = vpop.f32.mrf.mxu0
          %v1614 = vadd.f32 0.0, %v1613
          %v1615 = vpop.f32.mrf.mxu0
          %v1616 = vpop.f32.mrf.mxu0
          %v1617 = vpop.f32.mrf.mxu0
          %1618 = vdwg.mxu0
          %v1619 = vadd.f32 %v1534, %v1573
          %v1620 = vxor.u32 %v1619, 2147483648
          %v1621 = vmul.f32 %v1620, 1.442695
          %v1622 = vpow.pop %v1621
          %v1623 = vadd.f32 %v1622, 1.0
          %v1624 = vrcp.pop %v1623
          %v1625 = vmul.f32 1.0, %v1624
          %v1626 = vadd.f32 %v1535, %v1575
          %v1627 = vxor.u32 %v1626, 2147483648
          %v1628 = vmul.f32 %v1627, 1.442695
          %v1629 = vpow.pop %v1628
          %v1630 = vadd.f32 %v1629, 1.0
          %v1631 = vrcp.pop %v1630
          %v1632 = vmul.f32 1.0, %v1631
          %v1633 = vadd.f32 %v1614, %v1156
          %v1634 = vmul.f32 %v1625, %v1633
          %v1635 = vadd.f32 %v1536, %v1634
          %v1636 = vtanh.pop %v1635
          %v1637 = vsub.f32 1.0, %v1632
          %v1638 = vmul.f32 %v1637, %v1636
          %v1639 = vmul.f32 %v1632, %v1530
          %v1640 = vadd.f32 %v1638, %v1639
          %s1641 = sadd.s32 %s410, 4
          %v1642 = vstv %s1641
          %vm1643 = vcmp.lt.s32.totalorder %v1642, %v921
          %v1644 = vsel %vm1643, 1, 0
          %1645 = vset.pattern.permute.xlu0 0
          %1646 = vperm.xlu0 %1645, %v1644
          %v1647 = vpop.permute.xlu0 %1646
          %vm1648 = vcmp.eq.s32.totalorder %v1647, 1
          %v1649 = vsel %vm1648, %v1640, %v1530
          %s1650 = scalar_lea.vmem [#allocation3], 60
          %v1651 = vld [vmem:[%s1650] sm:$0xff]
          %v1652 = vld [vmem:[%s1650 + $0x8] sm:$0xf]
          %v1653 = vunpack.c.l.bf16 %v1651
          %v1654 = vunpack.c.h.bf16 %v1651
          %v1655 = vunpack.c.l.bf16 %v1652
          %v1656 = vpack.c.bf16 %v1649, %v1649
          %1657 = vmatprep.subr.bf16.mxu0 %v1031
          %1658 = vmatpush1.bf16.msra.mxu0 %v1030
          %1659 = vmatprep.subr.bf16.mxu0 %v1028
          %1660 = vmatpush1.bf16.msra.mxu0 %v1027
          %1661 = vmatprep.subr.bf16.mxu0 %v1025
          %1662 = vmatpush1.bf16.msra.mxu0 %v1024
          %1663 = vmatprep.subr.bf16.mxu0 %v1022
          %1664 = vmatpush1.bf16.msra.mxu0 %v1021
          %1665 = vmatprep.subr.bf16.mxu0 %v1019
          %1666 = vmatpush1.bf16.msra.mxu0 %v1018
          %1667 = vmatprep.subr.bf16.mxu0 %v1016
          %1668 = vmatpush1.bf16.msra.mxu0 %v1015
          %1669 = vmatprep.subr.bf16.mxu0 %v1013
          %1670 = vmatpush1.bf16.msra.mxu0 %v1012
          %1671 = vmatprep.subr.bf16.mxu0 %v1010
          %1672 = vmatpush1.bf16.msra.mxu0 %v1009
          %1673 = vmatprep.subr.bf16.mxu0 0
          %1674 = vmatpush2.bf16.msra.mxu0 0
          %1675 = vmatprep.subr.bf16.mxu0 0
          %1676 = vmatpush2.bf16.msra.mxu0 0
          %1677 = vmatprep.subr.bf16.mxu0 0
          %1678 = vmatpush2.bf16.msra.mxu0 0
          %1679 = vmatprep.subr.bf16.mxu0 0
          %1680 = vmatpush2.bf16.msra.mxu0 0
          %1681 = vmatprep.subr.bf16.mxu0 0
          %1682 = vmatpush2.bf16.msra.mxu0 0
          %1683 = vmatprep.subr.bf16.mxu0 0
          %1684 = vmatpush2.bf16.msra.mxu0 0
          %1685 = vmatprep.subr.bf16.mxu0 0
          %1686 = vmatpush2.bf16.msra.mxu0 0
          %1687 = vmatprep.subr.bf16.mxu0 0
          %1688 = vmatpush2.bf16.msra.mxu0 0
          %1689 = vmatprep.mubr.bf16.mxu0 0
          %1690 = vmatmul.mubr.bf16.gmra.mxu0 %v1656
          %v1691 = vpop.f32.mrf.mxu0
          %v1692 = vadd.f32 0.0, %v1691
          %v1693 = vpop.f32.mrf.mxu0
          %v1694 = vadd.f32 0.0, %v1693
          %v1695 = vpop.f32.mrf.mxu0
          %v1696 = vpop.f32.mrf.mxu0
          %1697 = vdwg.mxu0
          %1698 = vmatprep.subr.bf16.mxu0 0
          %1699 = vmatpush1.bf16.msra.mxu0 %v1032
          %1700 = vmatprep.subr.bf16.mxu0 0
          %1701 = vmatpush1.bf16.msra.mxu0 %v1029
          %1702 = vmatprep.subr.bf16.mxu0 0
          %1703 = vmatpush1.bf16.msra.mxu0 %v1026
          %1704 = vmatprep.subr.bf16.mxu0 0
          %1705 = vmatpush1.bf16.msra.mxu0 %v1023
          %1706 = vmatprep.subr.bf16.mxu0 0
          %1707 = vmatpush1.bf16.msra.mxu0 %v1020
          %1708 = vmatprep.subr.bf16.mxu0 0
          %1709 = vmatpush1.bf16.msra.mxu0 %v1017
          %1710 = vmatprep.subr.bf16.mxu0 0
          %1711 = vmatpush1.bf16.msra.mxu0 %v1014
          %1712 = vmatprep.subr.bf16.mxu0 0
          %1713 = vmatpush1.bf16.msra.mxu0 %v1011
          %1714 = vmatprep.subr.bf16.mxu0 0
          %1715 = vmatpush2.bf16.msra.mxu0 0
          %1716 = vmatprep.subr.bf16.mxu0 0
          %1717 = vmatpush2.bf16.msra.mxu0 0
          %1718 = vmatprep.subr.bf16.mxu0 0
          %1719 = vmatpush2.bf16.msra.mxu0 0
          %1720 = vmatprep.subr.bf16.mxu0 0
          %1721 = vmatpush2.bf16.msra.mxu0 0
          %1722 = vmatprep.subr.bf16.mxu0 0
          %1723 = vmatpush2.bf16.msra.mxu0 0
          %1724 = vmatprep.subr.bf16.mxu0 0
          %1725 = vmatpush2.bf16.msra.mxu0 0
          %1726 = vmatprep.subr.bf16.mxu0 0
          %1727 = vmatpush2.bf16.msra.mxu0 0
          %1728 = vmatprep.subr.bf16.mxu0 0
          %1729 = vmatpush2.bf16.msra.mxu0 0
          %1730 = vmatprep.mubr.bf16.mxu0 0
          %1731 = vmatmul.mubr.bf16.gmra.mxu0 %v1656
          %v1732 = vpop.f32.mrf.mxu0
          %v1733 = vadd.f32 0.0, %v1732
          %v1734 = vpop.f32.mrf.mxu0
          %v1735 = vpop.f32.mrf.mxu0
          %v1736 = vpop.f32.mrf.mxu0
          %1737 = vdwg.mxu0
          %v1738 = vadd.f32 %v1653, %v1692
          %v1739 = vxor.u32 %v1738, 2147483648
          %v1740 = vmul.f32 %v1739, 1.442695
          %v1741 = vpow.pop %v1740
          %v1742 = vadd.f32 %v1741, 1.0
          %v1743 = vrcp.pop %v1742
          %v1744 = vmul.f32 1.0, %v1743
          %v1745 = vadd.f32 %v1654, %v1694
          %v1746 = vxor.u32 %v1745, 2147483648
          %v1747 = vmul.f32 %v1746, 1.442695
          %v1748 = vpow.pop %v1747
          %v1749 = vadd.f32 %v1748, 1.0
          %v1750 = vrcp.pop %v1749
          %v1751 = vmul.f32 1.0, %v1750
          %v1752 = vadd.f32 %v1733, %v1156
          %v1753 = vmul.f32 %v1744, %v1752
          %v1754 = vadd.f32 %v1655, %v1753
          %v1755 = vtanh.pop %v1754
          %v1756 = vsub.f32 1.0, %v1751
          %v1757 = vmul.f32 %v1756, %v1755
          %v1758 = vmul.f32 %v1751, %v1649
          %v1759 = vadd.f32 %v1757, %v1758
          %s1760 = sadd.s32 %s410, 5
          %v1761 = vstv %s1760
          %vm1762 = vcmp.lt.s32.totalorder %v1761, %v921
          %v1763 = vsel %vm1762, 1, 0
          %1764 = vset.pattern.permute.xlu0 0
          %1765 = vperm.xlu0 %1764, %v1763
          %v1766 = vpop.permute.xlu0 %1765
          %vm1767 = vcmp.eq.s32.totalorder %v1766, 1
          %v1768 = vsel %vm1767, %v1759, %v1649
          %s1769 = scalar_lea.vmem [#allocation3], 72
          %v1770 = vld [vmem:[%s1769] sm:$0xff]
          %v1771 = vld [vmem:[%s1769 + $0x8] sm:$0xf]
          %v1772 = vunpack.c.l.bf16 %v1770
          %v1773 = vunpack.c.h.bf16 %v1770
          %v1774 = vunpack.c.l.bf16 %v1771
          %v1775 = vpack.c.bf16 %v1768, %v1768
          %1776 = vmatprep.subr.bf16.mxu0 %v1031
          %1777 = vmatpush1.bf16.msra.mxu0 %v1030
          %1778 = vmatprep.subr.bf16.mxu0 %v1028
          %1779 = vmatpush1.bf16.msra.mxu0 %v1027
          %1780 = vmatprep.subr.bf16.mxu0 %v1025
          %1781 = vmatpush1.bf16.msra.mxu0 %v1024
          %1782 = vmatprep.subr.bf16.mxu0 %v1022
          %1783 = vmatpush1.bf16.msra.mxu0 %v1021
          %1784 = vmatprep.subr.bf16.mxu0 %v1019
          %1785 = vmatpush1.bf16.msra.mxu0 %v1018
          %1786 = vmatprep.subr.bf16.mxu0 %v1016
          %1787 = vmatpush1.bf16.msra.mxu0 %v1015
          %1788 = vmatprep.subr.bf16.mxu0 %v1013
          %1789 = vmatpush1.bf16.msra.mxu0 %v1012
          %1790 = vmatprep.subr.bf16.mxu0 %v1010
          %1791 = vmatpush1.bf16.msra.mxu0 %v1009
          %1792 = vmatprep.subr.bf16.mxu0 0
          %1793 = vmatpush2.bf16.msra.mxu0 0
          %1794 = vmatprep.subr.bf16.mxu0 0
          %1795 = vmatpush2.bf16.msra.mxu0 0
          %1796 = vmatprep.subr.bf16.mxu0 0
          %1797 = vmatpush2.bf16.msra.mxu0 0
          %1798 = vmatprep.subr.bf16.mxu0 0
          %1799 = vmatpush2.bf16.msra.mxu0 0
          %1800 = vmatprep.subr.bf16.mxu0 0
          %1801 = vmatpush2.bf16.msra.mxu0 0
          %1802 = vmatprep.subr.bf16.mxu0 0
          %1803 = vmatpush2.bf16.msra.mxu0 0
          %1804 = vmatprep.subr.bf16.mxu0 0
          %1805 = vmatpush2.bf16.msra.mxu0 0
          %1806 = vmatprep.subr.bf16.mxu0 0
          %1807 = vmatpush2.bf16.msra.mxu0 0
          %1808 = vmatprep.mubr.bf16.mxu0 0
          %1809 = vmatmul.mubr.bf16.gmra.mxu0 %v1775
          %v1810 = vpop.f32.mrf.mxu0
          %v1811 = vadd.f32 0.0, %v1810
          %v1812 = vpop.f32.mrf.mxu0
          %v1813 = vadd.f32 0.0, %v1812
          %v1814 = vpop.f32.mrf.mxu0
          %v1815 = vpop.f32.mrf.mxu0
          %1816 = vdwg.mxu0
          %1817 = vmatprep.subr.bf16.mxu0 0
          %1818 = vmatpush1.bf16.msra.mxu0 %v1032
          %1819 = vmatprep.subr.bf16.mxu0 0
          %1820 = vmatpush1.bf16.msra.mxu0 %v1029
          %1821 = vmatprep.subr.bf16.mxu0 0
          %1822 = vmatpush1.bf16.msra.mxu0 %v1026
          %1823 = vmatprep.subr.bf16.mxu0 0
          %1824 = vmatpush1.bf16.msra.mxu0 %v1023
          %1825 = vmatprep.subr.bf16.mxu0 0
          %1826 = vmatpush1.bf16.msra.mxu0 %v1020
          %1827 = vmatprep.subr.bf16.mxu0 0
          %1828 = vmatpush1.bf16.msra.mxu0 %v1017
          %1829 = vmatprep.subr.bf16.mxu0 0
          %1830 = vmatpush1.bf16.msra.mxu0 %v1014
          %1831 = vmatprep.subr.bf16.mxu0 0
          %1832 = vmatpush1.bf16.msra.mxu0 %v1011
          %1833 = vmatprep.subr.bf16.mxu0 0
          %1834 = vmatpush2.bf16.msra.mxu0 0
          %1835 = vmatprep.subr.bf16.mxu0 0
          %1836 = vmatpush2.bf16.msra.mxu0 0
          %1837 = vmatprep.subr.bf16.mxu0 0
          %1838 = vmatpush2.bf16.msra.mxu0 0
          %1839 = vmatprep.subr.bf16.mxu0 0
          %1840 = vmatpush2.bf16.msra.mxu0 0
          %1841 = vmatprep.subr.bf16.mxu0 0
          %1842 = vmatpush2.bf16.msra.mxu0 0
          %1843 = vmatprep.subr.bf16.mxu0 0
          %1844 = vmatpush2.bf16.msra.mxu0 0
          %1845 = vmatprep.subr.bf16.mxu0 0
          %1846 = vmatpush2.bf16.msra.mxu0 0
          %1847 = vmatprep.subr.bf16.mxu0 0
          %1848 = vmatpush2.bf16.msra.mxu0 0
          %1849 = vmatprep.mubr.bf16.mxu0 0
          %1850 = vmatmul.mubr.bf16.gmra.mxu0 %v1775
          %v1851 = vpop.f32.mrf.mxu0
          %v1852 = vadd.f32 0.0, %v1851
          %v1853 = vpop.f32.mrf.mxu0
          %v1854 = vpop.f32.mrf.mxu0
          %v1855 = vpop.f32.mrf.mxu0
          %1856 = vdwg.mxu0
          %v1857 = vadd.f32 %v1772, %v1811
          %v1858 = vxor.u32 %v1857, 2147483648
          %v1859 = vmul.f32 %v1858, 1.442695
          %v1860 = vpow.pop %v1859
          %v1861 = vadd.f32 %v1860, 1.0
          %v1862 = vrcp.pop %v1861
          %v1863 = vmul.f32 1.0, %v1862
          %v1864 = vadd.f32 %v1773, %v1813
          %v1865 = vxor.u32 %v1864, 2147483648
          %v1866 = vmul.f32 %v1865, 1.442695
          %v1867 = vpow.pop %v1866
          %v1868 = vadd.f32 %v1867, 1.0
          %v1869 = vrcp.pop %v1868
          %v1870 = vmul.f32 1.0, %v1869
          %v1871 = vadd.f32 %v1852, %v1156
          %v1872 = vmul.f32 %v1863, %v1871
          %v1873 = vadd.f32 %v1774, %v1872
          %v1874 = vtanh.pop %v1873
          %v1875 = vsub.f32 1.0, %v1870
          %v1876 = vmul.f32 %v1875, %v1874
          %v1877 = vmul.f32 %v1870, %v1768
          %v1878 = vadd.f32 %v1876, %v1877
          %s1879 = sadd.s32 %s410, 6
          %v1880 = vstv %s1879
          %vm1881 = vcmp.lt.s32.totalorder %v1880, %v921
          %v1882 = vsel %vm1881, 1, 0
          %1883 = vset.pattern.permute.xlu0 0
          %1884 = vperm.xlu0 %1883, %v1882
          %v1885 = vpop.permute.xlu0 %1884
          %vm1886 = vcmp.eq.s32.totalorder %v1885, 1
          %v1887 = vsel %vm1886, %v1878, %v1768
          %s1888 = scalar_lea.vmem [#allocation3], 84
          %v1889 = vld [vmem:[%s1888] sm:$0xff]
          %v1890 = vld [vmem:[%s1888 + $0x8] sm:$0xf]
          %v1891 = vunpack.c.l.bf16 %v1889
          %v1892 = vunpack.c.h.bf16 %v1889
          %v1893 = vunpack.c.l.bf16 %v1890
          %v1894 = vpack.c.bf16 %v1887, %v1887
          %1895 = vmatprep.subr.bf16.mxu0 %v1031
          %1896 = vmatpush1.bf16.msra.mxu0 %v1030
          %1897 = vmatprep.subr.bf16.mxu0 %v1028
          %1898 = vmatpush1.bf16.msra.mxu0 %v1027
          %1899 = vmatprep.subr.bf16.mxu0 %v1025
          %1900 = vmatpush1.bf16.msra.mxu0 %v1024
          %1901 = vmatprep.subr.bf16.mxu0 %v1022
          %1902 = vmatpush1.bf16.msra.mxu0 %v1021
          %1903 = vmatprep.subr.bf16.mxu0 %v1019
          %1904 = vmatpush1.bf16.msra.mxu0 %v1018
          %1905 = vmatprep.subr.bf16.mxu0 %v1016
          %1906 = vmatpush1.bf16.msra.mxu0 %v1015
          %1907 = vmatprep.subr.bf16.mxu0 %v1013
          %1908 = vmatpush1.bf16.msra.mxu0 %v1012
          %1909 = vmatprep.subr.bf16.mxu0 %v1010
          %1910 = vmatpush1.bf16.msra.mxu0 %v1009
          %1911 = vmatprep.subr.bf16.mxu0 0
          %1912 = vmatpush2.bf16.msra.mxu0 0
          %1913 = vmatprep.subr.bf16.mxu0 0
          %1914 = vmatpush2.bf16.msra.mxu0 0
          %1915 = vmatprep.subr.bf16.mxu0 0
          %1916 = vmatpush2.bf16.msra.mxu0 0
          %1917 = vmatprep.subr.bf16.mxu0 0
          %1918 = vmatpush2.bf16.msra.mxu0 0
          %1919 = vmatprep.subr.bf16.mxu0 0
          %1920 = vmatpush2.bf16.msra.mxu0 0
          %1921 = vmatprep.subr.bf16.mxu0 0
          %1922 = vmatpush2.bf16.msra.mxu0 0
          %1923 = vmatprep.subr.bf16.mxu0 0
          %1924 = vmatpush2.bf16.msra.mxu0 0
          %1925 = vmatprep.subr.bf16.mxu0 0
          %1926 = vmatpush2.bf16.msra.mxu0 0
          %1927 = vmatprep.mubr.bf16.mxu0 0
          %1928 = vmatmul.mubr.bf16.gmra.mxu0 %v1894
          %v1929 = vpop.f32.mrf.mxu0
          %v1930 = vadd.f32 0.0, %v1929
          %v1931 = vpop.f32.mrf.mxu0
          %v1932 = vadd.f32 0.0, %v1931
          %v1933 = vpop.f32.mrf.mxu0
          %v1934 = vpop.f32.mrf.mxu0
          %1935 = vdwg.mxu0
          %1936 = vmatprep.subr.bf16.mxu0 0
          %1937 = vmatpush1.bf16.msra.mxu0 %v1032
          %1938 = vmatprep.subr.bf16.mxu0 0
          %1939 = vmatpush1.bf16.msra.mxu0 %v1029
          %1940 = vmatprep.subr.bf16.mxu0 0
          %1941 = vmatpush1.bf16.msra.mxu0 %v1026
          %1942 = vmatprep.subr.bf16.mxu0 0
          %1943 = vmatpush1.bf16.msra.mxu0 %v1023
          %1944 = vmatprep.subr.bf16.mxu0 0
          %1945 = vmatpush1.bf16.msra.mxu0 %v1020
          %1946 = vmatprep.subr.bf16.mxu0 0
          %1947 = vmatpush1.bf16.msra.mxu0 %v1017
          %1948 = vmatprep.subr.bf16.mxu0 0
          %1949 = vmatpush1.bf16.msra.mxu0 %v1014
          %1950 = vmatprep.subr.bf16.mxu0 0
          %1951 = vmatpush1.bf16.msra.mxu0 %v1011
          %1952 = vmatprep.subr.bf16.mxu0 0
          %1953 = vmatpush2.bf16.msra.mxu0 0
          %1954 = vmatprep.subr.bf16.mxu0 0
          %1955 = vmatpush2.bf16.msra.mxu0 0
          %1956 = vmatprep.subr.bf16.mxu0 0
          %1957 = vmatpush2.bf16.msra.mxu0 0
          %1958 = vmatprep.subr.bf16.mxu0 0
          %1959 = vmatpush2.bf16.msra.mxu0 0
          %1960 = vmatprep.subr.bf16.mxu0 0
          %1961 = vmatpush2.bf16.msra.mxu0 0
          %1962 = vmatprep.subr.bf16.mxu0 0
          %1963 = vmatpush2.bf16.msra.mxu0 0
          %1964 = vmatprep.subr.bf16.mxu0 0
          %1965 = vmatpush2.bf16.msra.mxu0 0
          %1966 = vmatprep.subr.bf16.mxu0 0
          %1967 = vmatpush2.bf16.msra.mxu0 0
          %1968 = vmatprep.mubr.bf16.mxu0 0
          %1969 = vmatmul.mubr.bf16.gmra.mxu0 %v1894
          %v1970 = vpop.f32.mrf.mxu0
          %v1971 = vadd.f32 0.0, %v1970
          %v1972 = vpop.f32.mrf.mxu0
          %v1973 = vpop.f32.mrf.mxu0
          %v1974 = vpop.f32.mrf.mxu0
          %1975 = vdwg.mxu0
          %v1976 = vadd.f32 %v1891, %v1930
          %v1977 = vxor.u32 %v1976, 2147483648
          %v1978 = vmul.f32 %v1977, 1.442695
          %v1979 = vpow.pop %v1978
          %v1980 = vadd.f32 %v1979, 1.0
          %v1981 = vrcp.pop %v1980
          %v1982 = vmul.f32 1.0, %v1981
          %v1983 = vadd.f32 %v1892, %v1932
          %v1984 = vxor.u32 %v1983, 2147483648
          %v1985 = vmul.f32 %v1984, 1.442695
          %v1986 = vpow.pop %v1985
          %v1987 = vadd.f32 %v1986, 1.0
          %v1988 = vrcp.pop %v1987
          %v1989 = vmul.f32 1.0, %v1988
          %v1990 = vadd.f32 %v1971, %v1156
          %v1991 = vmul.f32 %v1982, %v1990
          %v1992 = vadd.f32 %v1893, %v1991
          %v1993 = vtanh.pop %v1992
          %v1994 = vsub.f32 1.0, %v1989
          %v1995 = vmul.f32 %v1994, %v1993
          %v1996 = vmul.f32 %v1989, %v1887
          %v1997 = vadd.f32 %v1995, %v1996
          %s1998 = sadd.s32 %s410, 7
          %v1999 = vstv %s1998
          %vm2000 = vcmp.lt.s32.totalorder %v1999, %v921
          %v2001 = vsel %vm2000, 1, 0
          %2002 = vset.pattern.permute.xlu0 0
          %2003 = vperm.xlu0 %2002, %v2001
          %v2004 = vpop.permute.xlu0 %2003
          %vm2005 = vcmp.eq.s32.totalorder %v2004, 1
          %v2006 = vsel %vm2005, %v1997, %v1887
          %2007 = vst [vmem:[#allocation2] sm:$0xff] %v2006
        $region76: #{tpu_custom_call.1} parent=51 // pred_fallthru
          _
        // Predicated region
        $region77: #{tpu_custom_call.1} parent=51 // pred_check
          %p2008 = pneg %p411
        $region78: #{tpu_custom_call.1} parent=51 // pred_check_branch
          %2010 = sbr.rel (%p2008) target = $region80
        $region79: #{tpu_custom_call.1} parent=51 // pred_region
          %v2011 = vld [vmem:[#allocation2] sm:$0xff]
          %v2012 = vpack.c.bf16 %v2011, %v2011
          %v2013 = vld [vmem:[#allocation12] sm:$0xf]
          %v2014 = vld [vmem:[#allocation12 + $0x4] sm:$0xf]
          %v2015 = vld [vmem:[#allocation12 + $0x8] sm:$0xf]
          %v2016 = vld [vmem:[#allocation12 + $0xc] sm:$0xf]
          %v2017 = vld [vmem:[#allocation12 + $0x10] sm:$0xf]
          %v2018 = vld [vmem:[#allocation12 + $0x14] sm:$0xf]
          %v2019 = vld [vmem:[#allocation12 + $0x18] sm:$0xf]
          %v2020 = vld [vmem:[#allocation12 + $0x1c] sm:$0xf]
          %v2021 = vld [vmem:[#allocation12 + $0x20] sm:$0xf]
          %v2022 = vld [vmem:[#allocation12 + $0x24] sm:$0xf]
          %v2023 = vld [vmem:[#allocation12 + $0x28] sm:$0xf]
          %v2024 = vld [vmem:[#allocation12 + $0x2c] sm:$0xf]
          %v2025 = vld [vmem:[#allocation12 + $0x30] sm:$0xf]
          %v2026 = vld [vmem:[#allocation12 + $0x34] sm:$0xf]
          %v2027 = vld [vmem:[#allocation12 + $0x38] sm:$0xf]
          %v2028 = vld [vmem:[#allocation12 + $0x3c] sm:$0xf]
          %v2029 = vld [vmem:[%s8] sm:$0x1]
          %v2031 = vlaneseq
          %v2032 = vshrl.u32 %v2031, 7
          %v2033 = vsub.s32 0, %v2032
          %v2034 = vrot.slane %v2029, %v2033
          %v2052 = vunpack.c.l.b16 %v2013
          %v2053 = vunpack.c.l.b16 %v2014
          %v2054 = vunpack.c.l.b16 %v2015
          %v2055 = vunpack.c.l.b16 %v2016
          %v2056 = vunpack.c.l.b16 %v2017
          %v2057 = vunpack.c.l.b16 %v2018
          %v2058 = vunpack.c.l.b16 %v2019
          %v2059 = vunpack.c.l.b16 %v2020
          %v2060 = vunpack.c.l.b16 %v2021
          %v2061 = vunpack.c.l.b16 %v2022
          %v2062 = vunpack.c.l.b16 %v2023
          %v2063 = vunpack.c.l.b16 %v2024
          %v2064 = vunpack.c.l.b16 %v2025
          %v2065 = vunpack.c.l.b16 %v2026
          %v2066 = vunpack.c.l.b16 %v2027
          %v2067 = vunpack.c.l.b16 %v2028
          %v2068 = vpack.c.b16 %v2053, %v2052
          %v2069 = vpack.c.b16 %v2055, %v2054
          %v2070 = vpack.c.b16 %v2057, %v2056
          %v2071 = vpack.c.b16 %v2059, %v2058
          %v2072 = vpack.c.b16 %v2061, %v2060
          %v2073 = vpack.c.b16 %v2063, %v2062
          %v2074 = vpack.c.b16 %v2065, %v2064
          %v2075 = vpack.c.b16 %v2067, %v2066
          %2084 = vmatprep.subr.bf16.mxu0 0
          %2085 = vmatpush1.bf16.msra.mxu0 %v2075
          %2086 = vmatprep.subr.bf16.mxu0 0
          %2087 = vmatpush1.bf16.msra.mxu0 %v2074
          %2088 = vmatprep.subr.bf16.mxu0 0
          %2089 = vmatpush1.bf16.msra.mxu0 %v2073
          %2090 = vmatprep.subr.bf16.mxu0 0
          %2091 = vmatpush1.bf16.msra.mxu0 %v2072
          %2092 = vmatprep.subr.bf16.mxu0 0
          %2093 = vmatpush1.bf16.msra.mxu0 %v2071
          %2094 = vmatprep.subr.bf16.mxu0 0
          %2095 = vmatpush1.bf16.msra.mxu0 %v2070
          %2096 = vmatprep.subr.bf16.mxu0 0
          %2097 = vmatpush1.bf16.msra.mxu0 %v2069
          %2098 = vmatprep.subr.bf16.mxu0 0
          %2099 = vmatpush1.bf16.msra.mxu0 %v2068
          %2100 = vmatprep.subr.bf16.mxu0 0
          %2101 = vmatpush2.bf16.msra.mxu0 0
          %2102 = vmatprep.subr.bf16.mxu0 0
          %2103 = vmatpush2.bf16.msra.mxu0 0
          %2104 = vmatprep.subr.bf16.mxu0 0
          %2105 = vmatpush2.bf16.msra.mxu0 0
          %2106 = vmatprep.subr.bf16.mxu0 0
          %2107 = vmatpush2.bf16.msra.mxu0 0
          %2108 = vmatprep.subr.bf16.mxu0 0
          %2109 = vmatpush2.bf16.msra.mxu0 0
          %2110 = vmatprep.subr.bf16.mxu0 0
          %2111 = vmatpush2.bf16.msra.mxu0 0
          %2112 = vmatprep.subr.bf16.mxu0 0
          %2113 = vmatpush2.bf16.msra.mxu0 0
          %2114 = vmatprep.subr.bf16.mxu0 0
          %2115 = vmatpush2.bf16.msra.mxu0 0
          %2116 = vmatprep.mubr.bf16.mxu0 0
          %2117 = vmatmul.mubr.bf16.gmra.mxu0 %v2012
          %v2118 = vpop.f32.mrf.mxu0
          %v2119 = vadd.f32 %v2034, %v2118
          %v2120 = vpop.f32.mrf.mxu0
          %v2121 = vpop.f32.mrf.mxu0
          %v2122 = vpop.f32.mrf.mxu0
          %2123 = vdwg.mxu0
          %v2124 = vmul.f32 %v2119, %v2119
          %2125 = vadd.xlane.f32.xlu0 %v2124
          %v2126 = vpop.xlane.xlu0 %2125
          %v2127 = vrsqrt.pop %v2126
          %v2128 = vmul.f32 %v2126, %v2127
          %vm2129 = vcmp.eq.f32.partialorder %v2126, inf
          %v2130 = vsel %vm2129, %v2126, %v2128
          %vm2131 = vcmp.eq.f32.partialorder %v2126, 0.0
          %v2132 = vand.u32 %v2126, 2147483648
          %v2133 = vsel %vm2131, %v2132, %v2130
          %v2134 = vadd.f32 %v2133, 1e-09
          %v2135 = vrcp.pop %v2134
          %v2136 = vmul.f32 %v2119, %v2135
          %v2137 = vld [vmem:[%s408] sm:$0xff]
          %vm2138 = vcmp.gt.s32.totalorder %v2137, 0
          %v2139 = vsel %vm2138, 1, 0
          %2140 = vset.pattern.permute.xlu0 0
          %2141 = vperm.xlu0 %2140, %v2139
          %v2142 = vpop.permute.xlu0 %2141
          %vm2143 = vcmp.eq.s32.totalorder %v2142, 1
          %v2144 = vsel %vm2143, %v2136, 0.0
          %2145 = vst [vmem:[%s403] sm:$0xff] %v2144
        $region80: #{tpu_custom_call.1} parent=51 // pred_fallthru
          _
        %s2146 = sand.u32 %s234, 1
        %s2147 = scalar_lea.sflag [#allocation8], %s2146
        %s2148 = sand.u32 %s234, 1
        %s2149 = smul.addr %s2148, 8
        %s2150 = scalar_lea.vmem [#allocation14], %s2149
        // Predicated region
        $region81: #{tpu_custom_call.1} parent=51 // pred_check
          %p2151 = pneg %p244
        $region82: #{tpu_custom_call.1} parent=51 // pred_check_branch
          %2153 = sbr.rel (%p2151) target = $region84
        $region83: #{tpu_custom_call.1} parent=51 // pred_region
          %s2155 = ssub.s32 128, 128
          %2156 = vsyncadd %s2147, %s2155
          %s2157 = smul.addr %s38, 128
          %s2158 = scalar_lea.hbm %s9, %s2157
          %s2160 = sshll.u32 %s2150, 4
          %s2161 = int_to_ptr.vmem [resolvable:$true] %s2160
          %2163 = dma.vmem_to_hbm [thread:$0]  %s2161, 128, %s2158, %s2147
        $region84: #{tpu_custom_call.1} parent=51 // pred_fallthru
          _
      $region52: #{tpu_custom_call.1} parent=5 // pred_fallthru
        _
      %p2164 = scmp.le.s32.totalorder 2, %s29
      // Predicated region
      $region85: #{tpu_custom_call.1} parent=5 // pred_check
        %p2165 = pneg %p2164
      $region86: #{tpu_custom_call.1} parent=5 // pred_check_branch
        %2167 = sbr.rel (%p2165) target = $region88
      $region87: #{tpu_custom_call.1} parent=5 // pred_region
        %s2168 = ssub.s32 %s29, 2
        // Predicated region
        $region89: #{tpu_custom_call.1} parent=87 // pred_check
          %p2169 = pneg %p250
        $region90: #{tpu_custom_call.1} parent=87 // pred_check_branch
          %2171 = sbr.rel (%p2169) target = $region92
        $region91: #{tpu_custom_call.1} parent=87 // pred_region
          %s2172 = sand.u32 %s235, 1
          %s2173 = scalar_lea.sflag [#allocation8], %s2172
          %s2174 = sand.u32 %s235, 1
          %s2175 = smul.addr %s2174, 8
          %s2176 = scalar_lea.vmem [#allocation14], %s2175
          %2177 = dma.done %s2173, 128
        $region92: #{tpu_custom_call.1} parent=87 // pred_fallthru
          _
      $region88: #{tpu_custom_call.1} parent=5 // pred_fallthru
        _
    $region6: #{tpu_custom_call.1} parent=1 // loop_footer
      %s33 = sadd.s32 1, %s29
    $region7: #{tpu_custom_call.1} parent=1 // loop_footer_branch
      %28 = sbr.rel target = $region3
    $region8: #{tpu_custom_call.1} parent=1 // loop_exit
      _
    %2178 = vsyncpa [#allocation7], 1
    %s2179 = scalar_lea.sflag [#allocation7], 1
    %2180 = vsyncpa %s2179, 1
    %2181 = vsyncpa [#allocation10], 1
    %2182 = vsyncpa [#allocation13], 1
    %2183 = vsyncpa [#allocation8], 1
    %s2184 = scalar_lea.sflag [#allocation8], 1
    %2185 = vsyncpa %s2184, 1

// kernel: tpu_custom_call.1
$region0: #{tpu_custom_call.1}
  #allocation0 [shape = 'u32[]', space=smem, size = 0x4, offset = 0x4, fixed_abs, tag = 'smem constant byte address 0x4 - core index']
  #allocation1 [shape = 'u32[144,128]{1,0:T(1,128)}', space=vmem, size = 0x12000, scoped, tag = 'internal scratch']
  #allocation2 [shape = 'f32[8,128]{1,0:T(8,128)}', space=vmem, size = 0x1000, scoped, tag = 'scratch operand']
  #allocation3 [shape = 'bf16[8,8,384]{2,1,0:T(8,128)(2,1)}', space=vmem, size = 0xc000, scoped, tag = 'scratch operand']
  #allocation4 [shape = 's32[1]{0}', space=sflag, size = 0x4, scoped, tag = 'scoped memory for tpu_custom_call.1']
  #allocation5 [shape = 'u8[512]{0}', space=smem, size = 0x200, scoped, tag = 'prefetched SMEM operand 0']
  %s0 = inlined_call_operand.vmem [shape: s32[2], index: 0, kind: input, shape index: {}]
  %s1 = inlined_call_operand.hbm [shape: bf16[8,16,128], index: 1, kind: input, shape index: {}]
  %s2 = inlined_call_operand.vmem [shape: s32[16,1], index: 2, kind: input, shape index: {}]
  %s3 = inlined_call_operand.hbm [shape: bf16[128,384], index: 3, kind: input, shape index: {}]
  %s4 = inlined_call_operand.hbm [shape: bf16[128,384], index: 4, kind: input, shape index: {}]
  %s5 = inlined_call_operand.vmem [shape: f32[1,384], index: 5, kind: input, shape index: {}]
  %s6 = inlined_call_operand.vmem [shape: f32[1,128], index: 6, kind: input, shape index: {}]
  %s7 = inlined_call_operand.hbm [shape: bf16[128,128], index: 7, kind: input, shape index: {}]
  %s8 = inlined_call_operand.vmem [shape: f32[1,128], index: 8, kind: input, shape index: {}]
  %s9 = inlined_call_operand.hbm [shape: f32[16,128], index: 9, kind: output, shape index: {}]
  %s10 = sld [smem:[#allocation0]]
  $region93: #{tpu_custom_call.1} parent=0
    _
  %s12 = ssub.s32 1, %s10
  %s13 = scalar_select 0, %s12, %s10
  %s14 = sshll.u32 %s0, 4
  %s15 = int_to_ptr.vmem [resolvable:$true] %s14
  %17 = dma.vmem_to_smem %s15, 16, [#allocation5], [#allocation4]
  %18 = dma.done [#allocation4], 16
  %19 = sfence
  $region1: #{tpu_custom_call.1} parent=0
    #allocation6 [shape = 'u8[32768]{0}', space=vmem, size = 0x8000, scoped, tag = 'input window, operand 1']
    #allocation7 [shape = 's32[2]{0}', space=sflag, size = 0x8, scoped, tag = 'scoped memory for tpu_custom_call.1']
    #allocation8 [shape = 's32[2]{0}', space=sflag, size = 0x8, scoped, tag = 'scoped memory for tpu_custom_call.1']
    #allocation9 [shape = 'u8[98304]{0}', space=vmem, size = 0x18000, scoped, tag = 'input window, operand 3, single buffered']
    #allocation10 [shape = 's32[1]{0}', space=sflag, size = 0x4, scoped, tag = 'scoped memory for tpu_custom_call.1']
    #allocation11 [shape = 'u8[98304]{0}', space=vmem, size = 0x18000, scoped, tag = 'input window, operand 4, single buffered']
    #allocation12 [shape = 'u8[32768]{0}', space=vmem, size = 0x8000, scoped, tag = 'input window, operand 7, single buffered']
    #allocation13 [shape = 's32[1]{0}', space=sflag, size = 0x4, scoped, tag = 'scoped memory for tpu_custom_call.1']
    #allocation14 [shape = 'u8[8192]{0}', space=vmem, size = 0x2000, scoped, tag = 'output window, operand 0']
    %20 = vsyncpa [#allocation7], 0
    %s21 = scalar_lea.sflag [#allocation7], 1
    %22 = vsyncpa %s21, 0
    %23 = vsyncpa [#allocation10], 0
    %24 = vsyncpa [#allocation13], 0
    %25 = vsyncpa [#allocation8], 0
    %s26 = scalar_lea.sflag [#allocation8], 1
    %27 = vsyncpa %s26, 0
    loop: start=0, step=1, limit=4
    $region2: #{tpu_custom_call.1} parent=1 // loop_pre_header
      _
    $region3: #{tpu_custom_call.1} parent=1 // loop_header
      %s29 = sphi 0, %s33
      %p30 = scmp.ge.s32.totalorder %s29, 4
      %s36 = sphi 0, %s48
      %s37 = sphi 0, %s44
      %s38 = sphi 0, %s36
      %s39 = sphi 0, %s37
      %s40 = sphi 0, %s38
      %s41 = sphi 0, %s39
      %s53 = sphi 0, %s55
      %s56 = sphi 0, %s53
      %s57 = sphi 0, %s56
      %s73 = sphi 0, %s57
      %s79 = sphi 0, %s81
      %s82 = sphi 0, %s79
      %s83 = sphi 0, %s82
      %s99 = sphi 0, %s83
      %s103 = sphi 0, %s103
      %s105 = sphi 0, %s103
      %s106 = sphi 0, %s105
      %s120 = sphi 0, %s106
      %s124 = sphi 0, %s124
      %s126 = sphi 0, %s124
      %s127 = sphi 0, %s126
      %s141 = sphi 0, %s127
      %s145 = sphi 0, %s145
      %s147 = sphi 0, %s145
      %s148 = sphi 0, %s147
      %s162 = sphi 0, %s148
      %s166 = sphi 0, %s166
      %s168 = sphi 0, %s166
      %s169 = sphi 0, %s168
      %s183 = sphi 0, %s169
      %s187 = sphi 0, %s187
      %s189 = sphi 0, %s187
      %s190 = sphi 0, %s189
      %s204 = sphi 0, %s190
      %s208 = sphi 0, %s208
      %s210 = sphi 0, %s208
      %s211 = sphi 0, %s210
      %s225 = sphi 0, %s211
      %s231 = sphi 0, %s233
      %s234 = sphi 0, %s231
      %s235 = sphi 0, %s234
      %s251 = sphi 0, %s235
    $region4: #{tpu_custom_call.1} parent=1 // loop_header_branch
      %32 = sbr.rel (%p30) target = $region8
    $region5: #{tpu_custom_call.1} parent=1 // loop_body
      %s34 = ssub.s32 %s29, 1
      %s35 = ssub.s32 %s29, 2
      %s42 = sadd.s32 1, %s37
      %p43 = scmp.ge.s32.totalorder %s42, 1
      %s44 = scalar_select %p43, 0, %s42
      %s45 = sadd.s32 1, %s36
      %s46 = scalar_select %p43, %s45, %s36
      %p47 = scmp.ge.s32.totalorder %s46, 2
      %s48 = scalar_select %p47, 0, %s46
      %s49 = ssub.s32 %s37, %s44
      %s50 = ssub.s32 %s36, %s48
      %s51 = sor.u32 %s49, %s50
      %p52 = scmp.eq.s32.totalorder %s51, 0
      %s54 = sadd.s32 %s53, 1
      %s55 = scalar_select %p52, %s53, %s54
      %p58 = pneg %p52
      %p59 = scmp.eq.s32.totalorder %s29, 1
      %p60 = por %p58, %p59
      %p61 = scmp.ne.s32.totalorder %s53, %s56
      %p62 = scmp.eq.s32.totalorder %s29, 0
      %p63 = por %p61, %p62
      %p64 = scmp.ne.s32.totalorder %s53, %s56
      %p65 = scmp.eq.s32.totalorder %s34, 1
      %p66 = por %p64, %p65
      %p67 = scmp.ne.s32.totalorder %s56, %s57
      %p68 = scmp.eq.s32.totalorder %s34, 0
      %p69 = por %p67, %p68
      %p70 = scmp.ne.s32.totalorder %s56, %s57
      %p71 = scmp.eq.s32.totalorder %s35, 1
      %p72 = por %p70, %p71
      %p74 = scmp.ne.s32.totalorder %s57, %s73
      %p75 = scmp.eq.s32.totalorder %s35, 0
      %p76 = por %p74, %p75
      %s77 = ssub.s32 %s36, %s48
      %p78 = scmp.eq.s32.totalorder %s77, 0
      %s80 = sadd.s32 %s79, 1
      %s81 = scalar_select %p78, %s79, %s80
      %p84 = pneg %p78
      %p85 = scmp.eq.s32.totalorder %s29, 1
      %p86 = por %p84, %p85
      %p87 = scmp.ne.s32.totalorder %s79, %s82
      %p88 = scmp.eq.s32.totalorder %s29, 0
      %p89 = por %p87, %p88
      %p90 = scmp.ne.s32.totalorder %s79, %s82
      %p91 = scmp.eq.s32.totalorder %s34, 1
      %p92 = por %p90, %p91
      %p93 = scmp.ne.s32.totalorder %s82, %s83
      %p94 = scmp.eq.s32.totalorder %s34, 0
      %p95 = por %p93, %p94
      %p96 = scmp.ne.s32.totalorder %s82, %s83
      %p97 = scmp.eq.s32.totalorder %s35, 1
      %p98 = por %p96, %p97
      %p100 = scmp.ne.s32.totalorder %s83, %s99
      %p101 = scmp.eq.s32.totalorder %s35, 0
      %p102 = por %p100, %p101
      %s104 = sadd.s32 %s103, 1
      %p107 = scmp.eq.s32.totalorder %s29, 1
      %p108 = scmp.ne.s32.totalorder %s103, %s105
      %p109 = scmp.eq.s32.totalorder %s29, 0
      %p110 = por %p108, %p109
      %p111 = scmp.ne.s32.totalorder %s103, %s105
      %p112 = scmp.eq.s32.totalorder %s34, 1
      %p113 = por %p111, %p112
      %p114 = scmp.ne.s32.totalorder %s105, %s106
      %p115 = scmp.eq.s32.totalorder %s34, 0
      %p116 = por %p114, %p115
      %p117 = scmp.ne.s32.totalorder %s105, %s106
      %p118 = scmp.eq.s32.totalorder %s35, 1
      %p119 = por %p117, %p118
      %p121 = scmp.ne.s32.totalorder %s106, %s120
      %p122 = scmp.eq.s32.totalorder %s35, 0
      %p123 = por %p121, %p122
      %s125 = sadd.s32 %s124, 1
      %p128 = scmp.eq.s32.totalorder %s29, 1
      %p129 = scmp.ne.s32.totalorder %s124, %s126
      %p130 = scmp.eq.s32.totalorder %s29, 0
      %p131 = por %p129, %p130
      %p132 = scmp.ne.s32.totalorder %s124, %s126
      %p133 = scmp.eq.s32.totalorder %s34, 1
      %p134 = por %p132, %p133
      %p135 = scmp.ne.s32.totalorder %s126, %s127
      %p136 = scmp.eq.s32.totalorder %s34, 0
      %p137 = por %p135, %p136
      %p138 = scmp.ne.s32.totalorder %s126, %s127
      %p139 = scmp.eq.s32.totalorder %s35, 1
      %p140 = por %p138, %p139
      %p142 = scmp.ne.s32.totalorder %s127, %s141
      %p143 = scmp.eq.s32.totalorder %s35, 0
      %p144 = por %p142, %p143
      %s146 = sadd.s32 %s145, 1
      %p149 = scmp.eq.s32.totalorder %s29, 1
      %p150 = scmp.ne.s32.totalorder %s145, %s147
      %p151 = scmp.eq.s32.totalorder %s29, 0
      %p152 = por %p150, %p151
      %p153 = scmp.ne.s32.totalorder %s145, %s147
      %p154 = scmp.eq.s32.totalorder %s34, 1
      %p155 = por %p153, %p154
      %p156 = scmp.ne.s32.totalorder %s147, %s148
      %p157 = scmp.eq.s32.totalorder %s34, 0
      %p158 = por %p156, %p157
      %p159 = scmp.ne.s32.totalorder %s147, %s148
      %p160 = scmp.eq.s32.totalorder %s35, 1
      %p161 = por %p159, %p160
      %p163 = scmp.ne.s32.totalorder %s148, %s162
      %p164 = scmp.eq.s32.totalorder %s35, 0
      %p165 = por %p163, %p164
      %s167 = sadd.s32 %s166, 1
      %p170 = scmp.eq.s32.totalorder %s29, 1
      %p171 = scmp.ne.s32.totalorder %s166, %s168
      %p172 = scmp.eq.s32.totalorder %s29, 0
      %p173 = por %p171, %p172
      %p174 = scmp.ne.s32.totalorder %s166, %s168
      %p175 = scmp.eq.s32.totalorder %s34, 1
      %p176 = por %p174, %p175
      %p177 = scmp.ne.s32.totalorder %s168, %s169
      %p178 = scmp.eq.s32.totalorder %s34, 0
      %p179 = por %p177, %p178
      %p180 = scmp.ne.s32.totalorder %s168, %s169
      %p181 = scmp.eq.s32.totalorder %s35, 1
      %p182 = por %p180, %p181
      %p184 = scmp.ne.s32.totalorder %s169, %s183
      %p185 = scmp.eq.s32.totalorder %s35, 0
      %p186 = por %p184, %p185
      %s188 = sadd.s32 %s187, 1
      %p191 = scmp.eq.s32.totalorder %s29, 1
      %p192 = scmp.ne.s32.totalorder %s187, %s189
      %p193 = scmp.eq.s32.totalorder %s29, 0
      %p194 = por %p192, %p193
      %p195 = scmp.ne.s32.totalorder %s187, %s189
      %p196 = scmp.eq.s32.totalorder %s34, 1
      %p197 = por %p195, %p196
      %p198 = scmp.ne.s32.totalorder %s189, %s190
      %p199 = scmp.eq.s32.totalorder %s34, 0
      %p200 = por %p198, %p199
      %p201 = scmp.ne.s32.totalorder %s189, %s190
      %p202 = scmp.eq.s32.totalorder %s35, 1
      %p203 = por %p201, %p202
      %p205 = scmp.ne.s32.totalorder %s190, %s204
      %p206 = scmp.eq.s32.totalorder %s35, 0
      %p207 = por %p205, %p206
      %s209 = sadd.s32 %s208, 1
      %p212 = scmp.eq.s32.totalorder %s29, 1
      %p213 = scmp.ne.s32.totalorder %s208, %s210
      %p214 = scmp.eq.s32.totalorder %s29, 0
      %p215 = por %p213, %p214
      %p216 = scmp.ne.s32.totalorder %s208, %s210
      %p217 = scmp.eq.s32.totalorder %s34, 1
      %p218 = por %p216, %p217
      %p219 = scmp.ne.s32.totalorder %s210, %s211
      %p220 = scmp.eq.s32.totalorder %s34, 0
      %p221 = por %p219, %p220
      %p222 = scmp.ne.s32.totalorder %s210, %s211
      %p223 = scmp.eq.s32.totalorder %s35, 1
      %p224 = por %p222, %p223
      %p226 = scmp.ne.s32.totalorder %s211, %s225
      %p227 = scmp.eq.s32.totalorder %s35, 0
      %p228 = por %p226, %p227
      %s229 = ssub.s32 %s36, %s48
      %p230 = scmp.eq.s32.totalorder %s229, 0
      %s232 = sadd.s32 %s231, 1
      %s233 = scalar_select %p230, %s231, %s232
      %p236 = pneg %p230
      %p237 = scmp.eq.s32.totalorder %s29, 1
      %p238 = por %p236, %p237
      %p239 = scmp.ne.s32.totalorder %s231, %s234
      %p240 = scmp.eq.s32.totalorder %s29, 0
      %p241 = por %p239, %p240
      %p242 = scmp.ne.s32.totalorder %s231, %s234
      %p243 = scmp.eq.s32.totalorder %s34, 1
      %p244 = por %p242, %p243
      %p245 = scmp.ne.s32.totalorder %s234, %s235
      %p246 = scmp.eq.s32.totalorder %s34, 0
      %p247 = por %p245, %p246
      %p248 = scmp.ne.s32.totalorder %s234, %s235
      %p249 = scmp.eq.s32.totalorder %s35, 1
      %p250 = por %p248, %p249
      %p252 = scmp.ne.s32.totalorder %s235, %s251
      %p253 = scmp.eq.s32.totalorder %s35, 0
      %p254 = por %p252, %p253
      %p255 = scmp.le.s32.totalorder 1, %s29
      %p256 = scmp.lt.s32.totalorder %s29, 3
      %p257 = pnand %p255, %p256
      %p258 = pneg %p257
      // Predicated region
      $region9: #{tpu_custom_call.1} parent=5 // pred_check
        _
      $region10: #{tpu_custom_call.1} parent=5 // pred_check_branch
        %260 = sbr.rel (%p257) target = $region12
      $region11: #{tpu_custom_call.1} parent=5 // pred_region
        %s261 = ssub.s32 %s29, 1
        // Predicated region
        $region13: #{tpu_custom_call.1} parent=11 // pred_check
          %p262 = pneg %p116
        $region14: #{tpu_custom_call.1} parent=11 // pred_check_branch
          %264 = sbr.rel (%p262) target = $region16
        $region15: #{tpu_custom_call.1} parent=11 // pred_region
          %s266 = ssub.s32 3072, 3072
          %267 = vsyncadd [#allocation10], %s266
          %s268 = sshll.u32 [#allocation9], 4
          %s269 = int_to_ptr.vmem [resolvable:$true] %s268
          %274 = dma.hbm_to_vmem [thread:$0]  %s3, 3072, %s269, [#allocation10], 192, 192, 12
        $region16: #{tpu_custom_call.1} parent=11 // pred_fallthru
          _
        // Predicated region
        $region17: #{tpu_custom_call.1} parent=11 // pred_check
          %p275 = pneg %p137
        $region18: #{tpu_custom_call.1} parent=11 // pred_check_branch
          %277 = sbr.rel (%p275) target = $region20
        $region19: #{tpu_custom_call.1} parent=11 // pred_region
          %s279 = ssub.s32 3072, 3072
          %280 = vsyncadd [#allocation10], %s279
          %s281 = sshll.u32 [#allocation11], 4
          %s282 = int_to_ptr.vmem [resolvable:$true] %s281
          %287 = dma.hbm_to_vmem [thread:$0]  %s4, 3072, %s282, [#allocation10], 192, 192, 12
        $region20: #{tpu_custom_call.1} parent=11 // pred_fallthru
          _
        // Predicated region
        $region21: #{tpu_custom_call.1} parent=11 // pred_check
          %p288 = pneg %p158
        $region22: #{tpu_custom_call.1} parent=11 // pred_check_branch
          %290 = sbr.rel (%p288) target = $region24
        $region23: #{tpu_custom_call.1} parent=11 // pred_region
          _
        $region24: #{tpu_custom_call.1} parent=11 // pred_fallthru
          _
        // Predicated region
        $region25: #{tpu_custom_call.1} parent=11 // pred_check
          %p291 = pneg %p179
        $region26: #{tpu_custom_call.1} parent=11 // pred_check_branch
          %293 = sbr.rel (%p291) target = $region28
        $region27: #{tpu_custom_call.1} parent=11 // pred_region
          _
        $region28: #{tpu_custom_call.1} parent=11 // pred_fallthru
          _
        // Predicated region
        $region29: #{tpu_custom_call.1} parent=11 // pred_check
          %p294 = pneg %p200
        $region30: #{tpu_custom_call.1} parent=11 // pred_check_branch
          %296 = sbr.rel (%p294) target = $region32
        $region31: #{tpu_custom_call.1} parent=11 // pred_region
          %s298 = ssub.s32 1024, 1024
          %299 = vsyncadd [#allocation13], %s298
          %s300 = sshll.u32 [#allocation12], 4
          %s301 = int_to_ptr.vmem [resolvable:$true] %s300
          %306 = dma.hbm_to_vmem [thread:$0]  %s7, 1024, %s301, [#allocation13], 64, 64, 4
        $region32: #{tpu_custom_call.1} parent=11 // pred_fallthru
          _
        // Predicated region
        $region33: #{tpu_custom_call.1} parent=11 // pred_check
          %p307 = pneg %p221
        $region34: #{tpu_custom_call.1} parent=11 // pred_check_branch
          %309 = sbr.rel (%p307) target = $region36
        $region35: #{tpu_custom_call.1} parent=11 // pred_region
          _
        $region36: #{tpu_custom_call.1} parent=11 // pred_fallthru
          _
      $region12: #{tpu_custom_call.1} parent=5 // pred_fallthru
        _
      %p310 = scmp.lt.s32.totalorder %s29, 2
      // Predicated region
      $region37: #{tpu_custom_call.1} parent=5 // pred_check
        %p311 = pneg %p310
      $region38: #{tpu_custom_call.1} parent=5 // pred_check_branch
        %313 = sbr.rel (%p311) target = $region40
      $region39: #{tpu_custom_call.1} parent=5 // pred_region
        // Predicated region
        $region41: #{tpu_custom_call.1} parent=39 // pred_check
          %p314 = pneg %p63
        $region42: #{tpu_custom_call.1} parent=39 // pred_check_branch
          %316 = sbr.rel (%p314) target = $region44
        $region43: #{tpu_custom_call.1} parent=39 // pred_region
          %s317 = sand.u32 %s53, 1
          %s318 = scalar_lea.sflag [#allocation7], %s317
          %s319 = sand.u32 %s53, 1
          %s320 = smul.addr %s319, 32
          %s321 = scalar_lea.vmem [#allocation6], %s320
          %s322 = smul.u32 8, %s37
          %s324 = ssub.s32 512, 512
          %325 = vsyncadd %s318, %s324
          %s326 = smul.addr %s322, 2
          %s327 = sadd.s32 %s36, %s326
          %s328 = smul.addr %s327, 64
          %s329 = scalar_lea.hbm %s1, %s328
          %s330 = sshll.u32 %s321, 4
          %s331 = int_to_ptr.vmem [resolvable:$true] %s330
          %336 = dma.hbm_to_vmem [thread:$0]  %s329, 512, %s331, %s318, 128, 64, 4
        $region44: #{tpu_custom_call.1} parent=39 // pred_fallthru
          _
        // Predicated region
        $region45: #{tpu_custom_call.1} parent=39 // pred_check
          %p337 = pneg %p89
        $region46: #{tpu_custom_call.1} parent=39 // pred_check_branch
          %339 = sbr.rel (%p337) target = $region48
        $region47: #{tpu_custom_call.1} parent=39 // pred_region
          %p340 = scmp.lt.s32.totalorder %s36, 1
          %s341 = scalar_select %p340, %s36, 1
          %s342 = smul.addr %s341, 8
          %s343 = scalar_lea.vmem %s2, %s342
        $region48: #{tpu_custom_call.1} parent=39 // pred_fallthru
          _
      $region40: #{tpu_custom_call.1} parent=5 // pred_fallthru
        _
      %p344 = scmp.le.s32.totalorder 1, %s29
      %p345 = scmp.lt.s32.totalorder %s29, 3
      %p346 = pnand %p344, %p345
      %p347 = pneg %p346
      // Predicated region
      $region49: #{tpu_custom_call.1} parent=5 // pred_check
        _
      $region50: #{tpu_custom_call.1} parent=5 // pred_check_branch
        %349 = sbr.rel (%p346) target = $region52
      $region51: #{tpu_custom_call.1} parent=5 // pred_region
        %s350 = ssub.s32 %s29, 1
        %s351 = sand.u32 %s56, 1
        %s352 = scalar_lea.sflag [#allocation7], %s351
        %s353 = sand.u32 %s56, 1
        %s354 = smul.addr %s353, 32
        %s355 = scalar_lea.vmem [#allocation6], %s354
        // Predicated region
        $region53: #{tpu_custom_call.1} parent=51 // pred_check
          %p356 = pneg %p69
        $region54: #{tpu_custom_call.1} parent=51 // pred_check_branch
          %358 = sbr.rel (%p356) target = $region56
        $region55: #{tpu_custom_call.1} parent=51 // pred_region
          %359 = dma.done %s352, 512
        $region56: #{tpu_custom_call.1} parent=51 // pred_fallthru
          _
        // Predicated region
        $region57: #{tpu_custom_call.1} parent=51 // pred_check
          %p360 = pneg %p116
        $region58: #{tpu_custom_call.1} parent=51 // pred_check_branch
          %362 = sbr.rel (%p360) target = $region60
        $region59: #{tpu_custom_call.1} parent=51 // pred_region
          %363 = dma.done [#allocation10], 3072
        $region60: #{tpu_custom_call.1} parent=51 // pred_fallthru
          _
        // Predicated region
        $region61: #{tpu_custom_call.1} parent=51 // pred_check
          %p364 = pneg %p137
        $region62: #{tpu_custom_call.1} parent=51 // pred_check_branch
          %366 = sbr.rel (%p364) target = $region64
        $region63: #{tpu_custom_call.1} parent=51 // pred_region
          %367 = dma.done [#allocation10], 3072
        $region64: #{tpu_custom_call.1} parent=51 // pred_fallthru
          _
        // Predicated region
        $region65: #{tpu_custom_call.1} parent=51 // pred_check
          %p368 = pneg %p200
        $region66: #{tpu_custom_call.1} parent=51 // pred_check_branch
          %370 = sbr.rel (%p368) target = $region68
        $region67: #{tpu_custom_call.1} parent=51 // pred_region
          %371 = dma.done [#allocation13], 1024
        $region68: #{tpu_custom_call.1} parent=51 // pred_fallthru
          _
        %s372 = sand.u32 %s56, 1
        %s373 = scalar_lea.sflag [#allocation7], %s372
        %s374 = sand.u32 %s56, 1
        %s375 = smul.addr %s374, 32
        %s376 = scalar_lea.vmem [#allocation6], %s375
        %p377 = pneg %p69
        %p378 = pneg %p66
        %p379 = scmp.lt.s32.totalorder %s38, 1
        %s380 = scalar_select %p379, %s38, 1
        %s381 = smul.addr %s380, 8
        %s382 = scalar_lea.vmem %s2, %s381
        %p383 = pneg %p95
        %p384 = pneg %p92
        %p385 = pneg %p116
        %p386 = pneg %p113
        %p387 = pneg %p137
        %p388 = pneg %p134
        %p389 = pneg %p158
        %p390 = pneg %p155
        %p391 = pneg %p179
        %p392 = pneg %p176
        %p393 = pneg %p200
        %p394 = pneg %p197
        %p395 = pneg %p221
        %p396 = pneg %p218
        %p397 = pneg %p247
        %p398 = pneg %p244
        %s399 = sand.u32 %s234, 1
        %s400 = scalar_lea.sflag [#allocation8], %s399
        %s401 = sand.u32 %s234, 1
        %s402 = smul.addr %s401, 8
        %s403 = scalar_lea.vmem [#allocation14], %s402
        %s404 = smul.u32 8, %s39
        %p405 = scmp.lt.s32.totalorder %s38, 1
        %s406 = scalar_select %p405, %s38, 1
        %s407 = smul.addr %s406, 8
        %s408 = scalar_lea.vmem %s2, %s407
        %s410 = smul.u32 %s39, 8
        %p411 = scmp.eq.s32.totalorder %s39, 0
        // Predicated region
        $region69: #{tpu_custom_call.1} parent=51 // pred_check
          %p412 = pneg %p411
        $region70: #{tpu_custom_call.1} parent=51 // pred_check_branch
          %414 = sbr.rel (%p412) target = $region72
        $region71: #{tpu_custom_call.1} parent=51 // pred_region
          %415 = vst [vmem:[#allocation2] sm:$0xff] 0.0
        $region72: #{tpu_custom_call.1} parent=51 // pred_fallthru
          _
        %s416 = sld [smem:[#allocation5 + %s38]]
        %p417 = scmp.lt.s32.totalorder %s410, %s416
        // Predicated region
        $region73: #{tpu_custom_call.1} parent=51 // pred_check
          %p418 = pneg %p417
        $region74: #{tpu_custom_call.1} parent=51 // pred_check_branch
          %420 = sbr.rel (%p418) target = $region76
        $region75: #{tpu_custom_call.1} parent=51 // pred_region
          %v421 = vld [vmem:[%s355] sm:$0xf]
          %v422 = vld [vmem:[%s355 + $0x4] sm:$0xf]
          %v423 = vld [vmem:[%s355 + $0x8] sm:$0xf]
          %v424 = vld [vmem:[%s355 + $0xc] sm:$0xf]
          %v425 = vld [vmem:[%s355 + $0x10] sm:$0xf]
          %v426 = vld [vmem:[%s355 + $0x14] sm:$0xf]
          %v427 = vld [vmem:[%s355 + $0x18] sm:$0xf]
          %v428 = vld [vmem:[%s355 + $0x1c] sm:$0xf]
          %v429 = vld [vmem:[#allocation9] sm:$0xff]
          %v430 = vld [vmem:[#allocation9 + $0x8] sm:$0xf]
          %v431 = vld [vmem:[#allocation9 + $0xc] sm:$0xff]
          %v432 = vld [vmem:[#allocation9 + $0x14] sm:$0xf]
          %v433 = vld [vmem:[#allocation9 + $0x18] sm:$0xff]
          %v434 = vld [vmem:[#allocation9 + $0x20] sm:$0xf]
          %v435 = vld [vmem:[#allocation9 + $0x24] sm:$0xff]
          %v436 = vld [vmem:[#allocation9 + $0x2c] sm:$0xf]
          %v437 = vld [vmem:[#allocation9 + $0x30] sm:$0xff]
          %v438 = vld [vmem:[#allocation9 + $0x38] sm:$0xf]
          %v439 = vld [vmem:[#allocation9 + $0x3c] sm:$0xff]
          %v440 = vld [vmem:[#allocation9 + $0x44] sm:$0xf]
          %v441 = vld [vmem:[#allocation9 + $0x48] sm:$0xff]
          %v442 = vld [vmem:[#allocation9 + $0x50] sm:$0xf]
          %v443 = vld [vmem:[#allocation9 + $0x54] sm:$0xff]
          %v444 = vld [vmem:[#allocation9 + $0x5c] sm:$0xf]
          %v445 = vld [vmem:[#allocation9 + $0x60] sm:$0xff]
          %v446 = vld [vmem:[#allocation9 + $0x68] sm:$0xf]
          %v447 = vld [vmem:[#allocation9 + $0x6c] sm:$0xff]
          %v448 = vld [vmem:[#allocation9 + $0x74] sm:$0xf]
          %v449 = vld [vmem:[#allocation9 + $0x78] sm:$0xff]
          %v450 = vld [vmem:[#allocation9 + $0x80] sm:$0xf]
          %v451 = vld [vmem:[#allocation9 + $0x84] sm:$0xff]
          %v452 = vld [vmem:[#allocation9 + $0x8c] sm:$0xf]
          %v453 = vld [vmem:[#allocation9 + $0x90] sm:$0xff]
          %v454 = vld [vmem:[#allocation9 + $0x98] sm:$0xf]
          %v455 = vld [vmem:[#allocation9 + $0x9c] sm:$0xff]
          %v456 = vld [vmem:[#allocation9 + $0xa4] sm:$0xf]
          %v457 = vld [vmem:[#allocation9 + $0xa8] sm:$0xff]
          %v458 = vld [vmem:[#allocation9 + $0xb0] sm:$0xf]
          %v459 = vld [vmem:[#allocation9 + $0xb4] sm:$0xff]
          %v460 = vld [vmem:[#allocation9 + $0xbc] sm:$0xf]
          %v461 = vld [vmem:[%s5] sm:$0x7]
          %v463 = vlaneseq
          %v464 = vshrl.u32 %v463, 7
          %v465 = vsub.s32 0, %v464
          %v466 = vrot.slane %v461, %v465
          %v467 = vlaneseq
          %v468 = vshrl.u32 %v467, 7
          %v469 = vsub.s32 1, %v468
          %v470 = vrot.slane %v461, %v469
          %v471 = vlaneseq
          %v472 = vshrl.u32 %v471, 7
          %v473 = vsub.s32 2, %v472
          %v474 = vrot.slane %v461, %v473
          %v486 = vunpack.c.l.b16 %v421
          %v487 = vunpack.c.l.b16 %v422
          %v488 = vunpack.c.l.b16 %v423
          %v489 = vunpack.c.l.b16 %v424
          %v490 = vunpack.c.l.b16 %v425
          %v491 = vunpack.c.l.b16 %v426
          %v492 = vunpack.c.l.b16 %v427
          %v493 = vunpack.c.l.b16 %v428
          %v494 = vpack.c.b16 %v487, %v486
          %v495 = vpack.c.b16 %v489, %v488
          %v496 = vpack.c.b16 %v491, %v490
          %v497 = vpack.c.b16 %v493, %v492
          %v534 = vunpack.c.l.b16 %v429
          %v535 = vunpack.c.h.b16 %v429
          %v536 = vunpack.c.l.b16 %v430
          %v537 = vunpack.c.l.b16 %v431
          %v538 = vunpack.c.h.b16 %v431
          %v539 = vunpack.c.l.b16 %v432
          %v540 = vunpack.c.l.b16 %v433
          %v541 = vunpack.c.h.b16 %v433
          %v542 = vunpack.c.l.b16 %v434
          %v543 = vunpack.c.l.b16 %v435
          %v544 = vunpack.c.h.b16 %v435
          %v545 = vunpack.c.l.b16 %v436
          %v546 = vunpack.c.l.b16 %v437
          %v547 = vunpack.c.h.b16 %v437
          %v548 = vunpack.c.l.b16 %v438
          %v549 = vunpack.c.l.b16 %v439
          %v550 = vunpack.c.h.b16 %v439
          %v551 = vunpack.c.l.b16 %v440
          %v552 = vunpack.c.l.b16 %v441
          %v553 = vunpack.c.h.b16 %v441
          %v554 = vunpack.c.l.b16 %v442
          %v555 = vunpack.c.l.b16 %v443
          %v556 = vunpack.c.h.b16 %v443
          %v557 = vunpack.c.l.b16 %v444
          %v558 = vunpack.c.l.b16 %v445
          %v559 = vunpack.c.h.b16 %v445
          %v560 = vunpack.c.l.b16 %v446
          %v561 = vunpack.c.l.b16 %v447
          %v562 = vunpack.c.h.b16 %v447
          %v563 = vunpack.c.l.b16 %v448
          %v564 = vunpack.c.l.b16 %v449
          %v565 = vunpack.c.h.b16 %v449
          %v566 = vunpack.c.l.b16 %v450
          %v567 = vunpack.c.l.b16 %v451
          %v568 = vunpack.c.h.b16 %v451
          %v569 = vunpack.c.l.b16 %v452
          %v570 = vunpack.c.l.b16 %v453
          %v571 = vunpack.c.h.b16 %v453
          %v572 = vunpack.c.l.b16 %v454
          %v573 = vunpack.c.l.b16 %v455
          %v574 = vunpack.c.h.b16 %v455
          %v575 = vunpack.c.l.b16 %v456
          %v576 = vunpack.c.l.b16 %v457
          %v577 = vunpack.c.h.b16 %v457
          %v578 = vunpack.c.l.b16 %v458
          %v579 = vunpack.c.l.b16 %v459
          %v580 = vunpack.c.h.b16 %v459
          %v581 = vunpack.c.l.b16 %v460
          %v582 = vpack.c.b16 %v537, %v534
          %v583 = vpack.c.b16 %v538, %v535
          %v584 = vpack.c.b16 %v539, %v536
          %v585 = vpack.c.b16 %v543, %v540
          %v586 = vpack.c.b16 %v544, %v541
          %v587 = vpack.c.b16 %v545, %v542
          %v588 = vpack.c.b16 %v549, %v546
          %v589 = vpack.c.b16 %v550, %v547
          %v590 = vpack.c.b16 %v551, %v548
          %v591 = vpack.c.b16 %v555, %v552
          %v592 = vpack.c.b16 %v556, %v553
          %v593 = vpack.c.b16 %v557, %v554
          %v594 = vpack.c.b16 %v561, %v558
          %v595 = vpack.c.b16 %v562, %v559
          %v596 = vpack.c.b16 %v563, %v560
          %v597 = vpack.c.b16 %v567, %v564
          %v598 = vpack.c.b16 %v568, %v565
          %v599 = vpack.c.b16 %v569, %v566
          %v600 = vpack.c.b16 %v573, %v570
          %v601 = vpack.c.b16 %v574, %v571
          %v602 = vpack.c.b16 %v575, %v572
          %v603 = vpack.c.b16 %v579, %v576
          %v604 = vpack.c.b16 %v580, %v577
          %v605 = vpack.c.b16 %v581, %v578
          %630 = vmatprep.subr.bf16.mxu0 %v604
          %631 = vmatpush1.bf16.msra.mxu0 %v603
          %632 = vmatprep.subr.bf16.mxu0 %v601
          %633 = vmatpush1.bf16.msra.mxu0 %v600
          %634 = vmatprep.subr.bf16.mxu0 %v598
          %635 = vmatpush1.bf16.msra.mxu0 %v597
          %636 = vmatprep.subr.bf16.mxu0 %v595
          %637 = vmatpush1.bf16.msra.mxu0 %v594
          %638 = vmatprep.subr.bf16.mxu0 %v592
          %639 = vmatpush1.bf16.msra.mxu0 %v591
          %640 = vmatprep.subr.bf16.mxu0 %v589
          %641 = vmatpush1.bf16.msra.mxu0 %v588
          %642 = vmatprep.subr.bf16.mxu0 %v586
          %643 = vmatpush1.bf16.msra.mxu0 %v585
          %644 = vmatprep.subr.bf16.mxu0 %v583
          %645 = vmatpush1.bf16.msra.mxu0 %v582
          %646 = vmatprep.subr.bf16.mxu0 0
          %647 = vmatpush2.bf16.msra.mxu0 0
          %648 = vmatprep.subr.bf16.mxu0 0
          %649 = vmatpush2.bf16.msra.mxu0 0
          %650 = vmatprep.subr.bf16.mxu0 0
          %651 = vmatpush2.bf16.msra.mxu0 0
          %652 = vmatprep.subr.bf16.mxu0 0
          %653 = vmatpush2.bf16.msra.mxu0 0
          %654 = vmatprep.subr.bf16.mxu0 0
          %655 = vmatpush2.bf16.msra.mxu0 0
          %656 = vmatprep.subr.bf16.mxu0 0
          %657 = vmatpush2.bf16.msra.mxu0 0
          %658 = vmatprep.subr.bf16.mxu0 0
          %659 = vmatpush2.bf16.msra.mxu0 0
          %660 = vmatprep.subr.bf16.mxu0 0
          %661 = vmatpush2.bf16.msra.mxu0 0
          %662 = vmatprep.mubr.bf16.mxu0 0
          %663 = vmatmul.mubr.bf16.gmra.mxu0 %v494
          %v664 = vpop.f32.mrf.mxu0
          %v665 = vadd.f32 %v466, %v664
          %v666 = vpop.f32.mrf.mxu0
          %v667 = vadd.f32 %v470, %v666
          %v668 = vpop.f32.mrf.mxu0
          %v669 = vadd.f32 %v466, %v668
          %v670 = vpop.f32.mrf.mxu0
          %v671 = vadd.f32 %v470, %v670
          %672 = vmatprep.mubr.bf16.mxu0 0
          %673 = vmatmul.mubr.bf16.gmra.mxu0 %v495
          %v674 = vpop.f32.mrf.mxu0
          %v675 = vadd.f32 %v466, %v674
          %v676 = vpop.f32.mrf.mxu0
          %v677 = vadd.f32 %v470, %v676
          %v678 = vpop.f32.mrf.mxu0
          %v679 = vadd.f32 %v466, %v678
          %v680 = vpop.f32.mrf.mxu0
          %v681 = vadd.f32 %v470, %v680
          %682 = vmatprep.mubr.bf16.mxu0 0
          %683 = vmatmul.mubr.bf16.gmra.mxu0 %v496
          %v684 = vpop.f32.mrf.mxu0
          %v685 = vadd.f32 %v466, %v684
          %v686 = vpop.f32.mrf.mxu0
          %v687 = vadd.f32 %v470, %v686
          %v688 = vpop.f32.mrf.mxu0
          %v689 = vadd.f32 %v466, %v688
          %v690 = vpop.f32.mrf.mxu0
          %v691 = vadd.f32 %v470, %v690
          %692 = vmatprep.mubr.bf16.mxu0 0
          %693 = vmatmul.mubr.bf16.gmra.mxu0 %v497
          %v694 = vpop.f32.mrf.mxu0
          %v695 = vadd.f32 %v466, %v694
          %v696 = vpop.f32.mrf.mxu0
          %v697 = vadd.f32 %v470, %v696
          %v698 = vpop.f32.mrf.mxu0
          %v699 = vadd.f32 %v466, %v698
          %v700 = vpop.f32.mrf.mxu0
          %v701 = vadd.f32 %v470, %v700
          %702 = vdwg.mxu0
          %703 = vmatprep.subr.bf16.mxu0 0
          %704 = vmatpush1.bf16.msra.mxu0 %v605
          %705 = vmatprep.subr.bf16.mxu0 0
          %706 = vmatpush1.bf16.msra.mxu0 %v602
          %707 = vmatprep.subr.bf16.mxu0 0
          %708 = vmatpush1.bf16.msra.mxu0 %v599
          %709 = vmatprep.subr.bf16.mxu0 0
          %710 = vmatpush1.bf16.msra.mxu0 %v596
          %711 = vmatprep.subr.bf16.mxu0 0
          %712 = vmatpush1.bf16.msra.mxu0 %v593
          %713 = vmatprep.subr.bf16.mxu0 0
          %714 = vmatpush1.bf16.msra.mxu0 %v590
          %715 = vmatprep.subr.bf16.mxu0 0
          %716 = vmatpush1.bf16.msra.mxu0 %v587
          %717 = vmatprep.subr.bf16.mxu0 0
          %718 = vmatpush1.bf16.msra.mxu0 %v584
          %719 = vmatprep.subr.bf16.mxu0 0
          %720 = vmatpush2.bf16.msra.mxu0 0
          %721 = vmatprep.subr.bf16.mxu0 0
          %722 = vmatpush2.bf16.msra.mxu0 0
          %723 = vmatprep.subr.bf16.mxu0 0
          %724 = vmatpush2.bf16.msra.mxu0 0
          %725 = vmatprep.subr.bf16.mxu0 0
          %726 = vmatpush2.bf16.msra.mxu0 0
          %727 = vmatprep.subr.bf16.mxu0 0
          %728 = vmatpush2.bf16.msra.mxu0 0
          %729 = vmatprep.subr.bf16.mxu0 0
          %730 = vmatpush2.bf16.msra.mxu0 0
          %731 = vmatprep.subr.bf16.mxu0 0
          %732 = vmatpush2.bf16.msra.mxu0 0
          %733 = vmatprep.subr.bf16.mxu0 0
          %734 = vmatpush2.bf16.msra.mxu0 0
          %735 = vmatprep.mubr.bf16.mxu0 0
          %736 = vmatmul.mubr.bf16.gmra.mxu0 %v494
          %v737 = vpop.f32.mrf.mxu0
          %v738 = vadd.f32 %v474, %v737
          %v739 = vpop.f32.mrf.mxu0
          %v740 = vpop.f32.mrf.mxu0
          %v741 = vadd.f32 %v474, %v740
          %v742 = vpop.f32.mrf.mxu0
          %743 = vmatprep.mubr.bf16.mxu0 0
          %744 = vmatmul.mubr.bf16.gmra.mxu0 %v495
          %v745 = vpop.f32.mrf.mxu0
          %v746 = vadd.f32 %v474, %v745
          %v747 = vpop.f32.mrf.mxu0
          %v748 = vpop.f32.mrf.mxu0
          %v749 = vadd.f32 %v474, %v748
          %v750 = vpop.f32.mrf.mxu0
          %751 = vmatprep.mubr.bf16.mxu0 0
          %752 = vmatmul.mubr.bf16.gmra.mxu0 %v496
          %v753 = vpop.f32.mrf.mxu0
          %v754 = vadd.f32 %v474, %v753
          %v755 = vpop.f32.mrf.mxu0
          %v756 = vpop.f32.mrf.mxu0
          %v757 = vadd.f32 %v474, %v756
          %v758 = vpop.f32.mrf.mxu0
          %759 = vmatprep.mubr.bf16.mxu0 0
          %760 = vmatmul.mubr.bf16.gmra.mxu0 %v497
          %v761 = vpop.f32.mrf.mxu0
          %v762 = vadd.f32 %v474, %v761
          %v763 = vpop.f32.mrf.mxu0
          %v764 = vpop.f32.mrf.mxu0
          %v765 = vadd.f32 %v474, %v764
          %v766 = vpop.f32.mrf.mxu0
          %767 = vdwg.mxu0
          %v768 = vpack.c.bf16 %v665, %v665
          %v769 = vpack.c.bf16 %v667, %v667
          %v770 = vpack.c.bf16 %v738, %v738
          %v771 = vpack.c.bf16 %v669, %v669
          %v772 = vpack.c.bf16 %v671, %v671
          %v773 = vpack.c.bf16 %v741, %v741
          %v774 = vpack.c.bf16 %v675, %v675
          %v775 = vpack.c.bf16 %v677, %v677
          %v776 = vpack.c.bf16 %v746, %v746
          %v777 = vpack.c.bf16 %v679, %v679
          %v778 = vpack.c.bf16 %v681, %v681
          %v779 = vpack.c.bf16 %v749, %v749
          %v780 = vpack.c.bf16 %v685, %v685
          %v781 = vpack.c.bf16 %v687, %v687
          %v782 = vpack.c.bf16 %v754, %v754
          %v783 = vpack.c.bf16 %v689, %v689
          %v784 = vpack.c.bf16 %v691, %v691
          %v785 = vpack.c.bf16 %v757, %v757
          %v786 = vpack.c.bf16 %v695, %v695
          %v787 = vpack.c.bf16 %v697, %v697
          %v788 = vpack.c.bf16 %v762, %v762
          %v789 = vpack.c.bf16 %v699, %v699
          %v790 = vpack.c.bf16 %v701, %v701
          %v791 = vpack.c.bf16 %v765, %v765
          %v816 = vunpack.c.l.b16 %v768
          %v817 = vunpack.c.l.b16 %v769
          %v818 = vunpack.c.l.b16 %v770
          %v819 = vunpack.c.l.b16 %v771
          %v820 = vunpack.c.l.b16 %v772
          %v821 = vunpack.c.l.b16 %v773
          %v822 = vunpack.c.l.b16 %v774
          %v823 = vunpack.c.l.b16 %v775
          %v824 = vunpack.c.l.b16 %v776
          %v825 = vunpack.c.l.b16 %v777
          %v826 = vunpack.c.l.b16 %v778
          %v827 = vunpack.c.l.b16 %v779
          %v828 = vunpack.c.l.b16 %v780
          %v829 = vunpack.c.l.b16 %v781
          %v830 = vunpack.c.l.b16 %v782
          %v831 = vunpack.c.l.b16 %v783
          %v832 = vunpack.c.l.b16 %v784
          %v833 = vunpack.c.l.b16 %v785
          %v834 = vunpack.c.l.b16 %v786
          %v835 = vunpack.c.l.b16 %v787
          %v836 = vunpack.c.l.b16 %v788
          %v837 = vunpack.c.l.b16 %v789
          %v838 = vunpack.c.l.b16 %v790
          %v839 = vunpack.c.l.b16 %v791
          %v840 = vpack.c.b16 %v817, %v816
          %v841 = vpack.c.b16 %v818, %v818
          %v842 = vpack.c.b16 %v820, %v819
          %v843 = vpack.c.b16 %v821, %v821
          %v844 = vpack.c.b16 %v823, %v822
          %v845 = vpack.c.b16 %v824, %v824
          %v846 = vpack.c.b16 %v826, %v825
          %v847 = vpack.c.b16 %v827, %v827
          %v848 = vpack.c.b16 %v829, %v828
          %v849 = vpack.c.b16 %v830, %v830
          %v850 = vpack.c.b16 %v832, %v831
          %v851 = vpack.c.b16 %v833, %v833
          %v852 = vpack.c.b16 %v835, %v834
          %v853 = vpack.c.b16 %v836, %v836
          %v854 = vpack.c.b16 %v838, %v837
          %v855 = vpack.c.b16 %v839, %v839
          %872 = vst [vmem:[#allocation3] sm:$0xff] %v840
          %873 = vst [vmem:[#allocation3 + $0x8] sm:$0xf] %v841
          %874 = vst [vmem:[#allocation3 + $0xc] sm:$0xff] %v842
          %875 = vst [vmem:[#allocation3 + $0x14] sm:$0xf] %v843
          %876 = vst [vmem:[#allocation3 + $0x18] sm:$0xff] %v844
          %877 = vst [vmem:[#allocation3 + $0x20] sm:$0xf] %v845
          %878 = vst [vmem:[#allocation3 + $0x24] sm:$0xff] %v846
          %879 = vst [vmem:[#allocation3 + $0x2c] sm:$0xf] %v847
          %880 = vst [vmem:[#allocation3 + $0x30] sm:$0xff] %v848
          %881 = vst [vmem:[#allocation3 + $0x38] sm:$0xf] %v849
          %882 = vst [vmem:[#allocation3 + $0x3c] sm:$0xff] %v850
          %883 = vst [vmem:[#allocation3 + $0x44] sm:$0xf] %v851
          %884 = vst [vmem:[#allocation3 + $0x48] sm:$0xff] %v852
          %885 = vst [vmem:[#allocation3 + $0x50] sm:$0xf] %v853
          %886 = vst [vmem:[#allocation3 + $0x54] sm:$0xff] %v854
          %887 = vst [vmem:[#allocation3 + $0x5c] sm:$0xf] %v855
          %v888 = vld [vmem:[#allocation11] sm:$0xff]
          %v889 = vld [vmem:[#allocation11 + $0x8] sm:$0xf]
          %v890 = vld [vmem:[#allocation11 + $0xc] sm:$0xff]
          %v891 = vld [vmem:[#allocation11 + $0x14] sm:$0xf]
          %v892 = vld [vmem:[#allocation11 + $0x18] sm:$0xff]
          %v893 = vld [vmem:[#allocation11 + $0x20] sm:$0xf]
          %v894 = vld [vmem:[#allocation11 + $0x24] sm:$0xff]
          %v895 = vld [vmem:[#allocation11 + $0x2c] sm:$0xf]
          %v896 = vld [vmem:[#allocation11 + $0x30] sm:$0xff]
          %v897 = vld [vmem:[#allocation11 + $0x38] sm:$0xf]
          %v898 = vld [vmem:[#allocation11 + $0x3c] sm:$0xff]
          %v899 = vld [vmem:[#allocation11 + $0x44] sm:$0xf]
          %v900 = vld [vmem:[#allocation11 + $0x48] sm:$0xff]
          %v901 = vld [vmem:[#allocation11 + $0x50] sm:$0xf]
          %v902 = vld [vmem:[#allocation11 + $0x54] sm:$0xff]
          %v903 = vld [vmem:[#allocation11 + $0x5c] sm:$0xf]
          %v904 = vld [vmem:[#allocation11 + $0x60] sm:$0xff]
          %v905 = vld [vmem:[#allocation11 + $0x68] sm:$0xf]
          %v906 = vld [vmem:[#allocation11 + $0x6c] sm:$0xff]
          %v907 = vld [vmem:[#allocation11 + $0x74] sm:$0xf]
          %v908 = vld [vmem:[#allocation11 + $0x78] sm:$0xff]
          %v909 = vld [vmem:[#allocation11 + $0x80] sm:$0xf]
          %v910 = vld [vmem:[#allocation11 + $0x84] sm:$0xff]
          %v911 = vld [vmem:[#allocation11 + $0x8c] sm:$0xf]
          %v912 = vld [vmem:[#allocation11 + $0x90] sm:$0xff]
          %v913 = vld [vmem:[#allocation11 + $0x98] sm:$0xf]
          %v914 = vld [vmem:[#allocation11 + $0x9c] sm:$0xff]
          %v915 = vld [vmem:[#allocation11 + $0xa4] sm:$0xf]
          %v916 = vld [vmem:[#allocation11 + $0xa8] sm:$0xff]
          %v917 = vld [vmem:[#allocation11 + $0xb0] sm:$0xf]
          %v918 = vld [vmem:[#allocation11 + $0xb4] sm:$0xff]
          %v919 = vld [vmem:[#allocation11 + $0xbc] sm:$0xf]
          %v920 = vld [vmem:[%s6] sm:$0x1]
          %v921 = vld [vmem:[%s408] sm:$0xff]
          %v922 = vld [vmem:[#allocation2] sm:$0xff]
          %v923 = vld [vmem:[#allocation3] sm:$0xff]
          %v924 = vld [vmem:[#allocation3 + $0x8] sm:$0xf]
          %v925 = vunpack.c.l.bf16 %v923
          %v926 = vunpack.c.h.bf16 %v923
          %v927 = vunpack.c.l.bf16 %v924
          %v928 = vpack.c.bf16 %v922, %v922
          %v961 = vunpack.c.l.b16 %v888
          %v962 = vunpack.c.h.b16 %v888
          %v963 = vunpack.c.l.b16 %v889
          %v964 = vunpack.c.l.b16 %v890
          %v965 = vunpack.c.h.b16 %v890
          %v966 = vunpack.c.l.b16 %v891
          %v967 = vunpack.c.l.b16 %v892
          %v968 = vunpack.c.h.b16 %v892
          %v969 = vunpack.c.l.b16 %v893
          %v970 = vunpack.c.l.b16 %v894
          %v971 = vunpack.c.h.b16 %v894
          %v972 = vunpack.c.l.b16 %v895
          %v973 = vunpack.c.l.b16 %v896
          %v974 = vunpack.c.h.b16 %v896
          %v975 = vunpack.c.l.b16 %v897
          %v976 = vunpack.c.l.b16 %v898
          %v977 = vunpack.c.h.b16 %v898
          %v978 = vunpack.c.l.b16 %v899
          %v979 = vunpack.c.l.b16 %v900
          %v980 = vunpack.c.h.b16 %v900
          %v981 = vunpack.c.l.b16 %v901
          %v982 = vunpack.c.l.b16 %v902
          %v983 = vunpack.c.h.b16 %v902
          %v984 = vunpack.c.l.b16 %v903
          %v985 = vunpack.c.l.b16 %v904
          %v986 = vunpack.c.h.b16 %v904
          %v987 = vunpack.c.l.b16 %v905
          %v988 = vunpack.c.l.b16 %v906
          %v989 = vunpack.c.h.b16 %v906
          %v990 = vunpack.c.l.b16 %v907
          %v991 = vunpack.c.l.b16 %v908
          %v992 = vunpack.c.h.b16 %v908
          %v993 = vunpack.c.l.b16 %v909
          %v994 = vunpack.c.l.b16 %v910
          %v995 = vunpack.c.h.b16 %v910
          %v996 = vunpack.c.l.b16 %v911
          %v997 = vunpack.c.l.b16 %v912
          %v998 = vunpack.c.h.b16 %v912
          %v999 = vunpack.c.l.b16 %v913
          %v1000 = vunpack.c.l.b16 %v914
          %v1001 = vunpack.c.h.b16 %v914
          %v1002 = vunpack.c.l.b16 %v915
          %v1003 = vunpack.c.l.b16 %v916
          %v1004 = vunpack.c.h.b16 %v916
          %v1005 = vunpack.c.l.b16 %v917
          %v1006 = vunpack.c.l.b16 %v918
          %v1007 = vunpack.c.h.b16 %v918
          %v1008 = vunpack.c.l.b16 %v919
          %v1009 = vpack.c.b16 %v964, %v961
          %v1010 = vpack.c.b16 %v965, %v962
          %v1011 = vpack.c.b16 %v966, %v963
          %v1012 = vpack.c.b16 %v970, %v967
          %v1013 = vpack.c.b16 %v971, %v968
          %v1014 = vpack.c.b16 %v972, %v969
          %v1015 = vpack.c.b16 %v976, %v973
          %v1016 = vpack.c.b16 %v977, %v974
          %v1017 = vpack.c.b16 %v978, %v975
          %v1018 = vpack.c.b16 %v982, %v979
          %v1019 = vpack.c.b16 %v983, %v980
          %v1020 = vpack.c.b16 %v984, %v981
          %v1021 = vpack.c.b16 %v988, %v985
          %v1022 = vpack.c.b16 %v989, %v986
          %v1023 = vpack.c.b16 %v990, %v987
          %v1024 = vpack.c.b16 %v994, %v991
          %v1025 = vpack.c.b16 %v995, %v992
          %v1026 = vpack.c.b16 %v996, %v993
          %v1027 = vpack.c.b16 %v1000, %v997
          %v1028 = vpack.c.b16 %v1001, %v998
          %v1029 = vpack.c.b16 %v1002, %v999
          %v1030 = vpack.c.b16 %v1006, %v1003
          %v1031 = vpack.c.b16 %v1007, %v1004
          %v1032 = vpack.c.b16 %v1008, %v1005
          %1057 = vmatprep.subr.bf16.mxu0 %v1031
          %1058 = vmatpush1.bf16.msra.mxu0 %v1030
          %1059 = vmatprep.subr.bf16.mxu0 %v1028
          %1060 = vmatpush1.bf16.msra.mxu0 %v1027
          %1061 = vmatprep.subr.bf16.mxu0 %v1025
          %1062 = vmatpush1.bf16.msra.mxu0 %v1024
          %1063 = vmatprep.subr.bf16.mxu0 %v1022
          %1064 = vmatpush1.bf16.msra.mxu0 %v1021
          %1065 = vmatprep.subr.bf16.mxu0 %v1019
          %1066 = vmatpush1.bf16.msra.mxu0 %v1018
          %1067 = vmatprep.subr.bf16.mxu0 %v1016
          %1068 = vmatpush1.bf16.msra.mxu0 %v1015
          %1069 = vmatprep.subr.bf16.mxu0 %v1013
          %1070 = vmatpush1.bf16.msra.mxu0 %v1012
          %1071 = vmatprep.subr.bf16.mxu0 %v1010
          %1072 = vmatpush1.bf16.msra.mxu0 %v1009
          %1073 = vmatprep.subr.bf16.mxu0 0
          %1074 = vmatpush2.bf16.msra.mxu0 0
          %1075 = vmatprep.subr.bf16.mxu0 0
          %1076 = vmatpush2.bf16.msra.mxu0 0
          %1077 = vmatprep.subr.bf16.mxu0 0
          %1078 = vmatpush2.bf16.msra.mxu0 0
          %1079 = vmatprep.subr.bf16.mxu0 0
          %1080 = vmatpush2.bf16.msra.mxu0 0
          %1081 = vmatprep.subr.bf16.mxu0 0
          %1082 = vmatpush2.bf16.msra.mxu0 0
          %1083 = vmatprep.subr.bf16.mxu0 0
          %1084 = vmatpush2.bf16.msra.mxu0 0
          %1085 = vmatprep.subr.bf16.mxu0 0
          %1086 = vmatpush2.bf16.msra.mxu0 0
          %1087 = vmatprep.subr.bf16.mxu0 0
          %1088 = vmatpush2.bf16.msra.mxu0 0
          %1089 = vmatprep.mubr.bf16.mxu0 0
          %1090 = vmatmul.mubr.bf16.gmra.mxu0 %v928
          %v1091 = vpop.f32.mrf.mxu0
          %v1092 = vadd.f32 0.0, %v1091
          %v1093 = vpop.f32.mrf.mxu0
          %v1094 = vadd.f32 0.0, %v1093
          %v1095 = vpop.f32.mrf.mxu0
          %v1096 = vpop.f32.mrf.mxu0
          %1097 = vdwg.mxu0
          %1098 = vmatprep.subr.bf16.mxu0 0
          %1099 = vmatpush1.bf16.msra.mxu0 %v1032
          %1100 = vmatprep.subr.bf16.mxu0 0
          %1101 = vmatpush1.bf16.msra.mxu0 %v1029
          %1102 = vmatprep.subr.bf16.mxu0 0
          %1103 = vmatpush1.bf16.msra.mxu0 %v1026
          %1104 = vmatprep.subr.bf16.mxu0 0
          %1105 = vmatpush1.bf16.msra.mxu0 %v1023
          %1106 = vmatprep.subr.bf16.mxu0 0
          %1107 = vmatpush1.bf16.msra.mxu0 %v1020
          %1108 = vmatprep.subr.bf16.mxu0 0
          %1109 = vmatpush1.bf16.msra.mxu0 %v1017
          %1110 = vmatprep.subr.bf16.mxu0 0
          %1111 = vmatpush1.bf16.msra.mxu0 %v1014
          %1112 = vmatprep.subr.bf16.mxu0 0
          %1113 = vmatpush1.bf16.msra.mxu0 %v1011
          %1114 = vmatprep.subr.bf16.mxu0 0
          %1115 = vmatpush2.bf16.msra.mxu0 0
          %1116 = vmatprep.subr.bf16.mxu0 0
          %1117 = vmatpush2.bf16.msra.mxu0 0
          %1118 = vmatprep.subr.bf16.mxu0 0
          %1119 = vmatpush2.bf16.msra.mxu0 0
          %1120 = vmatprep.subr.bf16.mxu0 0
          %1121 = vmatpush2.bf16.msra.mxu0 0
          %1122 = vmatprep.subr.bf16.mxu0 0
          %1123 = vmatpush2.bf16.msra.mxu0 0
          %1124 = vmatprep.subr.bf16.mxu0 0
          %1125 = vmatpush2.bf16.msra.mxu0 0
          %1126 = vmatprep.subr.bf16.mxu0 0
          %1127 = vmatpush2.bf16.msra.mxu0 0
          %1128 = vmatprep.subr.bf16.mxu0 0
          %1129 = vmatpush2.bf16.msra.mxu0 0
          %1130 = vmatprep.mubr.bf16.mxu0 0
          %1131 = vmatmul.mubr.bf16.gmra.mxu0 %v928
          %v1132 = vpop.f32.mrf.mxu0
          %v1133 = vadd.f32 0.0, %v1132
          %v1134 = vpop.f32.mrf.mxu0
          %v1135 = vpop.f32.mrf.mxu0
          %v1136 = vpop.f32.mrf.mxu0
          %1137 = vdwg.mxu0
          %v1138 = vadd.f32 %v925, %v1092
          %v1139 = vxor.u32 %v1138, 2147483648
          %v1140 = vmul.f32 %v1139, 1.442695
          %v1141 = vpow.pop %v1140
          %v1142 = vadd.f32 %v1141, 1.0
          %v1143 = vrcp.pop %v1142
          %v1144 = vmul.f32 1.0, %v1143
          %v1145 = vadd.f32 %v926, %v1094
          %v1146 = vxor.u32 %v1145, 2147483648
          %v1147 = vmul.f32 %v1146, 1.442695
          %v1148 = vpow.pop %v1147
          %v1149 = vadd.f32 %v1148, 1.0
          %v1150 = vrcp.pop %v1149
          %v1151 = vmul.f32 1.0, %v1150
          %v1153 = vlaneseq
          %v1154 = vshrl.u32 %v1153, 7
          %v1155 = vsub.s32 0, %v1154
          %v1156 = vrot.slane %v920, %v1155
          %v1158 = vadd.f32 %v1133, %v1156
          %v1159 = vmul.f32 %v1144, %v1158
          %v1160 = vadd.f32 %v927, %v1159
          %v1161 = vtanh.pop %v1160
          %v1162 = vsub.f32 1.0, %v1151
          %v1163 = vmul.f32 %v1162, %v1161
          %v1164 = vmul.f32 %v1151, %v922
          %v1165 = vadd.f32 %v1163, %v1164
          %v1166 = vstv %s410
          %vm1167 = vcmp.lt.s32.totalorder %v1166, %v921
          %v1168 = vsel %vm1167, 1, 0
          %1169 = vset.pattern.permute.xlu0 0
          %1170 = vperm.xlu0 %1169, %v1168
          %v1171 = vpop.permute.xlu0 %1170
          %vm1172 = vcmp.eq.s32.totalorder %v1171, 1
          %v1173 = vsel %vm1172, %v1165, %v922
          %s1174 = scalar_lea.vmem [#allocation3], 12
          %v1175 = vld [vmem:[%s1174] sm:$0xff]
          %v1176 = vld [vmem:[%s1174 + $0x8] sm:$0xf]
          %v1177 = vunpack.c.l.bf16 %v1175
          %v1178 = vunpack.c.h.bf16 %v1175
          %v1179 = vunpack.c.l.bf16 %v1176
          %v1180 = vpack.c.bf16 %v1173, %v1173
          %1181 = vmatprep.subr.bf16.mxu0 %v1031
          %1182 = vmatpush1.bf16.msra.mxu0 %v1030
          %1183 = vmatprep.subr.bf16.mxu0 %v1028
          %1184 = vmatpush1.bf16.msra.mxu0 %v1027
          %1185 = vmatprep.subr.bf16.mxu0 %v1025
          %1186 = vmatpush1.bf16.msra.mxu0 %v1024
          %1187 = vmatprep.subr.bf16.mxu0 %v1022
          %1188 = vmatpush1.bf16.msra.mxu0 %v1021
          %1189 = vmatprep.subr.bf16.mxu0 %v1019
          %1190 = vmatpush1.bf16.msra.mxu0 %v1018
          %1191 = vmatprep.subr.bf16.mxu0 %v1016
          %1192 = vmatpush1.bf16.msra.mxu0 %v1015
          %1193 = vmatprep.subr.bf16.mxu0 %v1013
          %1194 = vmatpush1.bf16.msra.mxu0 %v1012
          %1195 = vmatprep.subr.bf16.mxu0 %v1010
          %1196 = vmatpush1.bf16.msra.mxu0 %v1009
          %1197 = vmatprep.subr.bf16.mxu0 0
          %1198 = vmatpush2.bf16.msra.mxu0 0
          %1199 = vmatprep.subr.bf16.mxu0 0
          %1200 = vmatpush2.bf16.msra.mxu0 0
          %1201 = vmatprep.subr.bf16.mxu0 0
          %1202 = vmatpush2.bf16.msra.mxu0 0
          %1203 = vmatprep.subr.bf16.mxu0 0
          %1204 = vmatpush2.bf16.msra.mxu0 0
          %1205 = vmatprep.subr.bf16.mxu0 0
          %1206 = vmatpush2.bf16.msra.mxu0 0
          %1207 = vmatprep.subr.bf16.mxu0 0
          %1208 = vmatpush2.bf16.msra.mxu0 0
          %1209 = vmatprep.subr.bf16.mxu0 0
          %1210 = vmatpush2.bf16.msra.mxu0 0
          %1211 = vmatprep.subr.bf16.mxu0 0
          %1212 = vmatpush2.bf16.msra.mxu0 0
          %1213 = vmatprep.mubr.bf16.mxu0 0
          %1214 = vmatmul.mubr.bf16.gmra.mxu0 %v1180
          %v1215 = vpop.f32.mrf.mxu0
          %v1216 = vadd.f32 0.0, %v1215
          %v1217 = vpop.f32.mrf.mxu0
          %v1218 = vadd.f32 0.0, %v1217
          %v1219 = vpop.f32.mrf.mxu0
          %v1220 = vpop.f32.mrf.mxu0
          %1221 = vdwg.mxu0
          %1222 = vmatprep.subr.bf16.mxu0 0
          %1223 = vmatpush1.bf16.msra.mxu0 %v1032
          %1224 = vmatprep.subr.bf16.mxu0 0
          %1225 = vmatpush1.bf16.msra.mxu0 %v1029
          %1226 = vmatprep.subr.bf16.mxu0 0
          %1227 = vmatpush1.bf16.msra.mxu0 %v1026
          %1228 = vmatprep.subr.bf16.mxu0 0
          %1229 = vmatpush1.bf16.msra.mxu0 %v1023
          %1230 = vmatprep.subr.bf16.mxu0 0
          %1231 = vmatpush1.bf16.msra.mxu0 %v1020
          %1232 = vmatprep.subr.bf16.mxu0 0
          %1233 = vmatpush1.bf16.msra.mxu0 %v1017
          %1234 = vmatprep.subr.bf16.mxu0 0
          %1235 = vmatpush1.bf16.msra.mxu0 %v1014
          %1236 = vmatprep.subr.bf16.mxu0 0
          %1237 = vmatpush1.bf16.msra.mxu0 %v1011
          %1238 = vmatprep.subr.bf16.mxu0 0
          %1239 = vmatpush2.bf16.msra.mxu0 0
          %1240 = vmatprep.subr.bf16.mxu0 0
          %1241 = vmatpush2.bf16.msra.mxu0 0
          %1242 = vmatprep.subr.bf16.mxu0 0
          %1243 = vmatpush2.bf16.msra.mxu0 0
          %1244 = vmatprep.subr.bf16.mxu0 0
          %1245 = vmatpush2.bf16.msra.mxu0 0
          %1246 = vmatprep.subr.bf16.mxu0 0
          %1247 = vmatpush2.bf16.msra.mxu0 0
          %1248 = vmatprep.subr.bf16.mxu0 0
          %1249 = vmatpush2.bf16.msra.mxu0 0
          %1250 = vmatprep.subr.bf16.mxu0 0
          %1251 = vmatpush2.bf16.msra.mxu0 0
          %1252 = vmatprep.subr.bf16.mxu0 0
          %1253 = vmatpush2.bf16.msra.mxu0 0
          %1254 = vmatprep.mubr.bf16.mxu0 0
          %1255 = vmatmul.mubr.bf16.gmra.mxu0 %v1180
          %v1256 = vpop.f32.mrf.mxu0
          %v1257 = vadd.f32 0.0, %v1256
          %v1258 = vpop.f32.mrf.mxu0
          %v1259 = vpop.f32.mrf.mxu0
          %v1260 = vpop.f32.mrf.mxu0
          %1261 = vdwg.mxu0
          %v1262 = vadd.f32 %v1177, %v1216
          %v1263 = vxor.u32 %v1262, 2147483648
          %v1264 = vmul.f32 %v1263, 1.442695
          %v1265 = vpow.pop %v1264
          %v1266 = vadd.f32 %v1265, 1.0
          %v1267 = vrcp.pop %v1266
          %v1268 = vmul.f32 1.0, %v1267
          %v1269 = vadd.f32 %v1178, %v1218
          %v1270 = vxor.u32 %v1269, 2147483648
          %v1271 = vmul.f32 %v1270, 1.442695
          %v1272 = vpow.pop %v1271
          %v1273 = vadd.f32 %v1272, 1.0
          %v1274 = vrcp.pop %v1273
          %v1275 = vmul.f32 1.0, %v1274
          %v1276 = vadd.f32 %v1257, %v1156
          %v1277 = vmul.f32 %v1268, %v1276
          %v1278 = vadd.f32 %v1179, %v1277
          %v1279 = vtanh.pop %v1278
          %v1280 = vsub.f32 1.0, %v1275
          %v1281 = vmul.f32 %v1280, %v1279
          %v1282 = vmul.f32 %v1275, %v1173
          %v1283 = vadd.f32 %v1281, %v1282
          %s1284 = sadd.s32 %s410, 1
          %v1285 = vstv %s1284
          %vm1286 = vcmp.lt.s32.totalorder %v1285, %v921
          %v1287 = vsel %vm1286, 1, 0
          %1288 = vset.pattern.permute.xlu0 0
          %1289 = vperm.xlu0 %1288, %v1287
          %v1290 = vpop.permute.xlu0 %1289
          %vm1291 = vcmp.eq.s32.totalorder %v1290, 1
          %v1292 = vsel %vm1291, %v1283, %v1173
          %s1293 = scalar_lea.vmem [#allocation3], 24
          %v1294 = vld [vmem:[%s1293] sm:$0xff]
          %v1295 = vld [vmem:[%s1293 + $0x8] sm:$0xf]
          %v1296 = vunpack.c.l.bf16 %v1294
          %v1297 = vunpack.c.h.bf16 %v1294
          %v1298 = vunpack.c.l.bf16 %v1295
          %v1299 = vpack.c.bf16 %v1292, %v1292
          %1300 = vmatprep.subr.bf16.mxu0 %v1031
          %1301 = vmatpush1.bf16.msra.mxu0 %v1030
          %1302 = vmatprep.subr.bf16.mxu0 %v1028
          %1303 = vmatpush1.bf16.msra.mxu0 %v1027
          %1304 = vmatprep.subr.bf16.mxu0 %v1025
          %1305 = vmatpush1.bf16.msra.mxu0 %v1024
          %1306 = vmatprep.subr.bf16.mxu0 %v1022
          %1307 = vmatpush1.bf16.msra.mxu0 %v1021
          %1308 = vmatprep.subr.bf16.mxu0 %v1019
          %1309 = vmatpush1.bf16.msra.mxu0 %v1018
          %1310 = vmatprep.subr.bf16.mxu0 %v1016
          %1311 = vmatpush1.bf16.msra.mxu0 %v1015
          %1312 = vmatprep.subr.bf16.mxu0 %v1013
          %1313 = vmatpush1.bf16.msra.mxu0 %v1012
          %1314 = vmatprep.subr.bf16.mxu0 %v1010
          %1315 = vmatpush1.bf16.msra.mxu0 %v1009
          %1316 = vmatprep.subr.bf16.mxu0 0
          %1317 = vmatpush2.bf16.msra.mxu0 0
          %1318 = vmatprep.subr.bf16.mxu0 0
          %1319 = vmatpush2.bf16.msra.mxu0 0
          %1320 = vmatprep.subr.bf16.mxu0 0
          %1321 = vmatpush2.bf16.msra.mxu0 0
          %1322 = vmatprep.subr.bf16.mxu0 0
          %1323 = vmatpush2.bf16.msra.mxu0 0
          %1324 = vmatprep.subr.bf16.mxu0 0
          %1325 = vmatpush2.bf16.msra.mxu0 0
          %1326 = vmatprep.subr.bf16.mxu0 0
          %1327 = vmatpush2.bf16.msra.mxu0 0
          %1328 = vmatprep.subr.bf16.mxu0 0
          %1329 = vmatpush2.bf16.msra.mxu0 0
          %1330 = vmatprep.subr.bf16.mxu0 0
          %1331 = vmatpush2.bf16.msra.mxu0 0
          %1332 = vmatprep.mubr.bf16.mxu0 0
          %1333 = vmatmul.mubr.bf16.gmra.mxu0 %v1299
          %v1334 = vpop.f32.mrf.mxu0
          %v1335 = vadd.f32 0.0, %v1334
          %v1336 = vpop.f32.mrf.mxu0
          %v1337 = vadd.f32 0.0, %v1336
          %v1338 = vpop.f32.mrf.mxu0
          %v1339 = vpop.f32.mrf.mxu0
          %1340 = vdwg.mxu0
          %1341 = vmatprep.subr.bf16.mxu0 0
          %1342 = vmatpush1.bf16.msra.mxu0 %v1032
          %1343 = vmatprep.subr.bf16.mxu0 0
          %1344 = vmatpush1.bf16.msra.mxu0 %v1029
          %1345 = vmatprep.subr.bf16.mxu0 0
          %1346 = vmatpush1.bf16.msra.mxu0 %v1026
          %1347 = vmatprep.subr.bf16.mxu0 0
          %1348 = vmatpush1.bf16.msra.mxu0 %v1023
          %1349 = vmatprep.subr.bf16.mxu0 0
          %1350 = vmatpush1.bf16.msra.mxu0 %v1020
          %1351 = vmatprep.subr.bf16.mxu0 0
          %1352 = vmatpush1.bf16.msra.mxu0 %v1017
          %1353 = vmatprep.subr.bf16.mxu0 0
          %1354 = vmatpush1.bf16.msra.mxu0 %v1014
          %1355 = vmatprep.subr.bf16.mxu0 0
          %1356 = vmatpush1.bf16.msra.mxu0 %v1011
          %1357 = vmatprep.subr.bf16.mxu0 0
          %1358 = vmatpush2.bf16.msra.mxu0 0
          %1359 = vmatprep.subr.bf16.mxu0 0
          %1360 = vmatpush2.bf16.msra.mxu0 0
          %1361 = vmatprep.subr.bf16.mxu0 0
          %1362 = vmatpush2.bf16.msra.mxu0 0
          %1363 = vmatprep.subr.bf16.mxu0 0
          %1364 = vmatpush2.bf16.msra.mxu0 0
          %1365 = vmatprep.subr.bf16.mxu0 0
          %1366 = vmatpush2.bf16.msra.mxu0 0
          %1367 = vmatprep.subr.bf16.mxu0 0
          %1368 = vmatpush2.bf16.msra.mxu0 0
          %1369 = vmatprep.subr.bf16.mxu0 0
          %1370 = vmatpush2.bf16.msra.mxu0 0
          %1371 = vmatprep.subr.bf16.mxu0 0
          %1372 = vmatpush2.bf16.msra.mxu0 0
          %1373 = vmatprep.mubr.bf16.mxu0 0
          %1374 = vmatmul.mubr.bf16.gmra.mxu0 %v1299
          %v1375 = vpop.f32.mrf.mxu0
          %v1376 = vadd.f32 0.0, %v1375
          %v1377 = vpop.f32.mrf.mxu0
          %v1378 = vpop.f32.mrf.mxu0
          %v1379 = vpop.f32.mrf.mxu0
          %1380 = vdwg.mxu0
          %v1381 = vadd.f32 %v1296, %v1335
          %v1382 = vxor.u32 %v1381, 2147483648
          %v1383 = vmul.f32 %v1382, 1.442695
          %v1384 = vpow.pop %v1383
          %v1385 = vadd.f32 %v1384, 1.0
          %v1386 = vrcp.pop %v1385
          %v1387 = vmul.f32 1.0, %v1386
          %v1388 = vadd.f32 %v1297, %v1337
          %v1389 = vxor.u32 %v1388, 2147483648
          %v1390 = vmul.f32 %v1389, 1.442695
          %v1391 = vpow.pop %v1390
          %v1392 = vadd.f32 %v1391, 1.0
          %v1393 = vrcp.pop %v1392
          %v1394 = vmul.f32 1.0, %v1393
          %v1395 = vadd.f32 %v1376, %v1156
          %v1396 = vmul.f32 %v1387, %v1395
          %v1397 = vadd.f32 %v1298, %v1396
          %v1398 = vtanh.pop %v1397
          %v1399 = vsub.f32 1.0, %v1394
          %v1400 = vmul.f32 %v1399, %v1398
          %v1401 = vmul.f32 %v1394, %v1292
          %v1402 = vadd.f32 %v1400, %v1401
          %s1403 = sadd.s32 %s410, 2
          %v1404 = vstv %s1403
          %vm1405 = vcmp.lt.s32.totalorder %v1404, %v921
          %v1406 = vsel %vm1405, 1, 0
          %1407 = vset.pattern.permute.xlu0 0
          %1408 = vperm.xlu0 %1407, %v1406
          %v1409 = vpop.permute.xlu0 %1408
          %vm1410 = vcmp.eq.s32.totalorder %v1409, 1
          %v1411 = vsel %vm1410, %v1402, %v1292
          %s1412 = scalar_lea.vmem [#allocation3], 36
          %v1413 = vld [vmem:[%s1412] sm:$0xff]
          %v1414 = vld [vmem:[%s1412 + $0x8] sm:$0xf]
          %v1415 = vunpack.c.l.bf16 %v1413
          %v1416 = vunpack.c.h.bf16 %v1413
          %v1417 = vunpack.c.l.bf16 %v1414
          %v1418 = vpack.c.bf16 %v1411, %v1411
          %1419 = vmatprep.subr.bf16.mxu0 %v1031
          %1420 = vmatpush1.bf16.msra.mxu0 %v1030
          %1421 = vmatprep.subr.bf16.mxu0 %v1028
          %1422 = vmatpush1.bf16.msra.mxu0 %v1027
          %1423 = vmatprep.subr.bf16.mxu0 %v1025
          %1424 = vmatpush1.bf16.msra.mxu0 %v1024
          %1425 = vmatprep.subr.bf16.mxu0 %v1022
          %1426 = vmatpush1.bf16.msra.mxu0 %v1021
          %1427 = vmatprep.subr.bf16.mxu0 %v1019
          %1428 = vmatpush1.bf16.msra.mxu0 %v1018
          %1429 = vmatprep.subr.bf16.mxu0 %v1016
          %1430 = vmatpush1.bf16.msra.mxu0 %v1015
          %1431 = vmatprep.subr.bf16.mxu0 %v1013
          %1432 = vmatpush1.bf16.msra.mxu0 %v1012
          %1433 = vmatprep.subr.bf16.mxu0 %v1010
          %1434 = vmatpush1.bf16.msra.mxu0 %v1009
          %1435 = vmatprep.subr.bf16.mxu0 0
          %1436 = vmatpush2.bf16.msra.mxu0 0
          %1437 = vmatprep.subr.bf16.mxu0 0
          %1438 = vmatpush2.bf16.msra.mxu0 0
          %1439 = vmatprep.subr.bf16.mxu0 0
          %1440 = vmatpush2.bf16.msra.mxu0 0
          %1441 = vmatprep.subr.bf16.mxu0 0
          %1442 = vmatpush2.bf16.msra.mxu0 0
          %1443 = vmatprep.subr.bf16.mxu0 0
          %1444 = vmatpush2.bf16.msra.mxu0 0
          %1445 = vmatprep.subr.bf16.mxu0 0
          %1446 = vmatpush2.bf16.msra.mxu0 0
          %1447 = vmatprep.subr.bf16.mxu0 0
          %1448 = vmatpush2.bf16.msra.mxu0 0
          %1449 = vmatprep.subr.bf16.mxu0 0
          %1450 = vmatpush2.bf16.msra.mxu0 0
          %1451 = vmatprep.mubr.bf16.mxu0 0
          %1452 = vmatmul.mubr.bf16.gmra.mxu0 %v1418
          %v1453 = vpop.f32.mrf.mxu0
          %v1454 = vadd.f32 0.0, %v1453
          %v1455 = vpop.f32.mrf.mxu0
          %v1456 = vadd.f32 0.0, %v1455
          %v1457 = vpop.f32.mrf.mxu0
          %v1458 = vpop.f32.mrf.mxu0
          %1459 = vdwg.mxu0
          %1460 = vmatprep.subr.bf16.mxu0 0
          %1461 = vmatpush1.bf16.msra.mxu0 %v1032
          %1462 = vmatprep.subr.bf16.mxu0 0
          %1463 = vmatpush1.bf16.msra.mxu0 %v1029
          %1464 = vmatprep.subr.bf16.mxu0 0
          %1465 = vmatpush1.bf16.msra.mxu0 %v1026
          %1466 = vmatprep.subr.bf16.mxu0 0
          %1467 = vmatpush1.bf16.msra.mxu0 %v1023
          %1468 = vmatprep.subr.bf16.mxu0 0
          %1469 = vmatpush1.bf16.msra.mxu0 %v1020
          %1470 = vmatprep.subr.bf16.mxu0 0
          %1471 = vmatpush1.bf16.msra.mxu0 %v1017
          %1472 = vmatprep.subr.bf16.mxu0 0
          %1473 = vmatpush1.bf16.msra.mxu0 %v1014
          %1474 = vmatprep.subr.bf16.mxu0 0
          %1475 = vmatpush1.bf16.msra.mxu0 %v1011
          %1476 = vmatprep.subr.bf16.mxu0 0
          %1477 = vmatpush2.bf16.msra.mxu0 0
          %1478 = vmatprep.subr.bf16.mxu0 0
          %1479 = vmatpush2.bf16.msra.mxu0 0
          %1480 = vmatprep.subr.bf16.mxu0 0
          %1481 = vmatpush2.bf16.msra.mxu0 0
          %1482 = vmatprep.subr.bf16.mxu0 0
          %1483 = vmatpush2.bf16.msra.mxu0 0
          %1484 = vmatprep.subr.bf16.mxu0 0
          %1485 = vmatpush2.bf16.msra.mxu0 0
          %1486 = vmatprep.subr.bf16.mxu0 0
          %1487 = vmatpush2.bf16.msra.mxu0 0
          %1488 = vmatprep.subr.bf16.mxu0 0
          %1489 = vmatpush2.bf16.msra.mxu0 0
          %1490 = vmatprep.subr.bf16.mxu0 0
          %1491 = vmatpush2.bf16.msra.mxu0 0
          %1492 = vmatprep.mubr.bf16.mxu0 0
          %1493 = vmatmul.mubr.bf16.gmra.mxu0 %v1418
          %v1494 = vpop.f32.mrf.mxu0
          %v1495 = vadd.f32 0.0, %v1494
          %v1496 = vpop.f32.mrf.mxu0
          %v1497 = vpop.f32.mrf.mxu0
          %v1498 = vpop.f32.mrf.mxu0
          %1499 = vdwg.mxu0
          %v1500 = vadd.f32 %v1415, %v1454
          %v1501 = vxor.u32 %v1500, 2147483648
          %v1502 = vmul.f32 %v1501, 1.442695
          %v1503 = vpow.pop %v1502
          %v1504 = vadd.f32 %v1503, 1.0
          %v1505 = vrcp.pop %v1504
          %v1506 = vmul.f32 1.0, %v1505
          %v1507 = vadd.f32 %v1416, %v1456
          %v1508 = vxor.u32 %v1507, 2147483648
          %v1509 = vmul.f32 %v1508, 1.442695
          %v1510 = vpow.pop %v1509
          %v1511 = vadd.f32 %v1510, 1.0
          %v1512 = vrcp.pop %v1511
          %v1513 = vmul.f32 1.0, %v1512
          %v1514 = vadd.f32 %v1495, %v1156
          %v1515 = vmul.f32 %v1506, %v1514
          %v1516 = vadd.f32 %v1417, %v1515
          %v1517 = vtanh.pop %v1516
          %v1518 = vsub.f32 1.0, %v1513
          %v1519 = vmul.f32 %v1518, %v1517
          %v1520 = vmul.f32 %v1513, %v1411
          %v1521 = vadd.f32 %v1519, %v1520
          %s1522 = sadd.s32 %s410, 3
          %v1523 = vstv %s1522
          %vm1524 = vcmp.lt.s32.totalorder %v1523, %v921
          %v1525 = vsel %vm1524, 1, 0
          %1526 = vset.pattern.permute.xlu0 0
          %1527 = vperm.xlu0 %1526, %v1525
          %v1528 = vpop.permute.xlu0 %1527
          %vm1529 = vcmp.eq.s32.totalorder %v1528, 1
          %v1530 = vsel %vm1529, %v1521, %v1411
          %s1531 = scalar_lea.vmem [#allocation3], 48
          %v1532 = vld [vmem:[%s1531] sm:$0xff]
          %v1533 = vld [vmem:[%s1531 + $0x8] sm:$0xf]
          %v1534 = vunpack.c.l.bf16 %v1532
          %v1535 = vunpack.c.h.bf16 %v1532
          %v1536 = vunpack.c.l.bf16 %v1533
          %v1537 = vpack.c.bf16 %v1530, %v1530
          %1538 = vmatprep.subr.bf16.mxu0 %v1031
          %1539 = vmatpush1.bf16.msra.mxu0 %v1030
          %1540 = vmatprep.subr.bf16.mxu0 %v1028
          %1541 = vmatpush1.bf16.msra.mxu0 %v1027
          %1542 = vmatprep.subr.bf16.mxu0 %v1025
          %1543 = vmatpush1.bf16.msra.mxu0 %v1024
          %1544 = vmatprep.subr.bf16.mxu0 %v1022
          %1545 = vmatpush1.bf16.msra.mxu0 %v1021
          %1546 = vmatprep.subr.bf16.mxu0 %v1019
          %1547 = vmatpush1.bf16.msra.mxu0 %v1018
          %1548 = vmatprep.subr.bf16.mxu0 %v1016
          %1549 = vmatpush1.bf16.msra.mxu0 %v1015
          %1550 = vmatprep.subr.bf16.mxu0 %v1013
          %1551 = vmatpush1.bf16.msra.mxu0 %v1012
          %1552 = vmatprep.subr.bf16.mxu0 %v1010
          %1553 = vmatpush1.bf16.msra.mxu0 %v1009
          %1554 = vmatprep.subr.bf16.mxu0 0
          %1555 = vmatpush2.bf16.msra.mxu0 0
          %1556 = vmatprep.subr.bf16.mxu0 0
          %1557 = vmatpush2.bf16.msra.mxu0 0
          %1558 = vmatprep.subr.bf16.mxu0 0
          %1559 = vmatpush2.bf16.msra.mxu0 0
          %1560 = vmatprep.subr.bf16.mxu0 0
          %1561 = vmatpush2.bf16.msra.mxu0 0
          %1562 = vmatprep.subr.bf16.mxu0 0
          %1563 = vmatpush2.bf16.msra.mxu0 0
          %1564 = vmatprep.subr.bf16.mxu0 0
          %1565 = vmatpush2.bf16.msra.mxu0 0
          %1566 = vmatprep.subr.bf16.mxu0 0
          %1567 = vmatpush2.bf16.msra.mxu0 0
          %1568 = vmatprep.subr.bf16.mxu0 0
          %1569 = vmatpush2.bf16.msra.mxu0 0
          %1570 = vmatprep.mubr.bf16.mxu0 0
          %1571 = vmatmul.mubr.bf16.gmra.mxu0 %v1537
          %v1572 = vpop.f32.mrf.mxu0
          %v1573 = vadd.f32 0.0, %v1572
          %v1574 = vpop.f32.mrf.mxu0
          %v1575 = vadd.f32 0.0, %v1574
          %v1576 = vpop.f32.mrf.mxu0
          %v1577 = vpop.f32.mrf.mxu0
          %1578 = vdwg.mxu0
          %1579 = vmatprep.subr.bf16.mxu0 0
          %1580 = vmatpush1.bf16.msra.mxu0 %v1032
          %1581 = vmatprep.subr.bf16.mxu0 0
          %1582 = vmatpush1.bf16.msra.mxu0 %v1029
          %1583 = vmatprep.subr.bf16.mxu0 0
          %1584 = vmatpush1.bf16.msra.mxu0 %v1026
          %1585 = vmatprep.subr.bf16.mxu0 0
          %1586 = vmatpush1.bf16.msra.mxu0 %v1023
          %1587 = vmatprep.subr.bf16.mxu0 0
          %1588 = vmatpush1.bf16.msra.mxu0 %v1020
          %1589 = vmatprep.subr.bf16.mxu0 0
          %1590 = vmatpush1.bf16.msra.mxu0 %v1017
          %1591 = vmatprep.subr.bf16.mxu0 0
          %1592 = vmatpush1.bf16.msra.mxu0 %v1014
          %1593 = vmatprep.subr.bf16.mxu0 0
          %1594 = vmatpush1.bf16.msra.mxu0 %v1011
          %1595 = vmatprep.subr.bf16.mxu0 0
          %1596 = vmatpush2.bf16.msra.mxu0 0
          %1597 = vmatprep.subr.bf16.mxu0 0
          %1598 = vmatpush2.bf16.msra.mxu0 0
          %1599 = vmatprep.subr.bf16.mxu0 0
          %1600 = vmatpush2.bf16.msra.mxu0 0
          %1601 = vmatprep.subr.bf16.mxu0 0
          %1602 = vmatpush2.bf16.msra.mxu0 0
          %1603 = vmatprep.subr.bf16.mxu0 0
          %1604 = vmatpush2.bf16.msra.mxu0 0
          %1605 = vmatprep.subr.bf16.mxu0 0
          %1606 = vmatpush2.bf16.msra.mxu0 0
          %1607 = vmatprep.subr.bf16.mxu0 0
          %1608 = vmatpush2.bf16.msra.mxu0 0
          %1609 = vmatprep.subr.bf16.mxu0 0
          %1610 = vmatpush2.bf16.msra.mxu0 0
          %1611 = vmatprep.mubr.bf16.mxu0 0
          %1612 = vmatmul.mubr.bf16.gmra.mxu0 %v1537
          %v1613 = vpop.f32.mrf.mxu0
          %v1614 = vadd.f32 0.0, %v1613
          %v1615 = vpop.f32.mrf.mxu0
          %v1616 = vpop.f32.mrf.mxu0
          %v1617 = vpop.f32.mrf.mxu0
          %1618 = vdwg.mxu0
          %v1619 = vadd.f32 %v1534, %v1573
          %v1620 = vxor.u32 %v1619, 2147483648
          %v1621 = vmul.f32 %v1620, 1.442695
          %v1622 = vpow.pop %v1621
          %v1623 = vadd.f32 %v1622, 1.0
          %v1624 = vrcp.pop %v1623
          %v1625 = vmul.f32 1.0, %v1624
          %v1626 = vadd.f32 %v1535, %v1575
          %v1627 = vxor.u32 %v1626, 2147483648
          %v1628 = vmul.f32 %v1627, 1.442695
          %v1629 = vpow.pop %v1628
          %v1630 = vadd.f32 %v1629, 1.0
          %v1631 = vrcp.pop %v1630
          %v1632 = vmul.f32 1.0, %v1631
          %v1633 = vadd.f32 %v1614, %v1156
          %v1634 = vmul.f32 %v1625, %v1633
          %v1635 = vadd.f32 %v1536, %v1634
          %v1636 = vtanh.pop %v1635
          %v1637 = vsub.f32 1.0, %v1632
          %v1638 = vmul.f32 %v1637, %v1636
          %v1639 = vmul.f32 %v1632, %v1530
          %v1640 = vadd.f32 %v1638, %v1639
          %s1641 = sadd.s32 %s410, 4
          %v1642 = vstv %s1641
          %vm1643 = vcmp.lt.s32.totalorder %v1642, %v921
          %v1644 = vsel %vm1643, 1, 0
          %1645 = vset.pattern.permute.xlu0 0
          %1646 = vperm.xlu0 %1645, %v1644
          %v1647 = vpop.permute.xlu0 %1646
          %vm1648 = vcmp.eq.s32.totalorder %v1647, 1
          %v1649 = vsel %vm1648, %v1640, %v1530
          %s1650 = scalar_lea.vmem [#allocation3], 60
          %v1651 = vld [vmem:[%s1650] sm:$0xff]
          %v1652 = vld [vmem:[%s1650 + $0x8] sm:$0xf]
          %v1653 = vunpack.c.l.bf16 %v1651
          %v1654 = vunpack.c.h.bf16 %v1651
          %v1655 = vunpack.c.l.bf16 %v1652
          %v1656 = vpack.c.bf16 %v1649, %v1649
          %1657 = vmatprep.subr.bf16.mxu0 %v1031
          %1658 = vmatpush1.bf16.msra.mxu0 %v1030
          %1659 = vmatprep.subr.bf16.mxu0 %v1028
          %1660 = vmatpush1.bf16.msra.mxu0 %v1027
          %1661 = vmatprep.subr.bf16.mxu0 %v1025
          %1662 = vmatpush1.bf16.msra.mxu0 %v1024
          %1663 = vmatprep.subr.bf16.mxu0 %v1022
          %1664 = vmatpush1.bf16.msra.mxu0 %v1021
          %1665 = vmatprep.subr.bf16.mxu0 %v1019
          %1666 = vmatpush1.bf16.msra.mxu0 %v1018
          %1667 = vmatprep.subr.bf16.mxu0 %v1016
          %1668 = vmatpush1.bf16.msra.mxu0 %v1015
          %1669 = vmatprep.subr.bf16.mxu0 %v1013
          %1670 = vmatpush1.bf16.msra.mxu0 %v1012
          %1671 = vmatprep.subr.bf16.mxu0 %v1010
          %1672 = vmatpush1.bf16.msra.mxu0 %v1009
          %1673 = vmatprep.subr.bf16.mxu0 0
          %1674 = vmatpush2.bf16.msra.mxu0 0
          %1675 = vmatprep.subr.bf16.mxu0 0
          %1676 = vmatpush2.bf16.msra.mxu0 0
          %1677 = vmatprep.subr.bf16.mxu0 0
          %1678 = vmatpush2.bf16.msra.mxu0 0
          %1679 = vmatprep.subr.bf16.mxu0 0
          %1680 = vmatpush2.bf16.msra.mxu0 0
          %1681 = vmatprep.subr.bf16.mxu0 0
          %1682 = vmatpush2.bf16.msra.mxu0 0
          %1683 = vmatprep.subr.bf16.mxu0 0
          %1684 = vmatpush2.bf16.msra.mxu0 0
          %1685 = vmatprep.subr.bf16.mxu0 0
          %1686 = vmatpush2.bf16.msra.mxu0 0
          %1687 = vmatprep.subr.bf16.mxu0 0
          %1688 = vmatpush2.bf16.msra.mxu0 0
          %1689 = vmatprep.mubr.bf16.mxu0 0
          %1690 = vmatmul.mubr.bf16.gmra.mxu0 %v1656
          %v1691 = vpop.f32.mrf.mxu0
          %v1692 = vadd.f32 0.0, %v1691
          %v1693 = vpop.f32.mrf.mxu0
          %v1694 = vadd.f32 0.0, %v1693
          %v1695 = vpop.f32.mrf.mxu0
          %v1696 = vpop.f32.mrf.mxu0
          %1697 = vdwg.mxu0
          %1698 = vmatprep.subr.bf16.mxu0 0
          %1699 = vmatpush1.bf16.msra.mxu0 %v1032
          %1700 = vmatprep.subr.bf16.mxu0 0
          %1701 = vmatpush1.bf16.msra.mxu0 %v1029
          %1702 = vmatprep.subr.bf16.mxu0 0
          %1703 = vmatpush1.bf16.msra.mxu0 %v1026
          %1704 = vmatprep.subr.bf16.mxu0 0
          %1705 = vmatpush1.bf16.msra.mxu0 %v1023
          %1706 = vmatprep.subr.bf16.mxu0 0
          %1707 = vmatpush1.bf16.msra.mxu0 %v1020
          %1708 = vmatprep.subr.bf16.mxu0 0
          %1709 = vmatpush1.bf16.msra.mxu0 %v1017
          %1710 = vmatprep.subr.bf16.mxu0 0
          %1711 = vmatpush1.bf16.msra.mxu0 %v1014
          %1712 = vmatprep.subr.bf16.mxu0 0
          %1713 = vmatpush1.bf16.msra.mxu0 %v1011
          %1714 = vmatprep.subr.bf16.mxu0 0
          %1715 = vmatpush2.bf16.msra.mxu0 0
          %1716 = vmatprep.subr.bf16.mxu0 0
          %1717 = vmatpush2.bf16.msra.mxu0 0
          %1718 = vmatprep.subr.bf16.mxu0 0
          %1719 = vmatpush2.bf16.msra.mxu0 0
          %1720 = vmatprep.subr.bf16.mxu0 0
          %1721 = vmatpush2.bf16.msra.mxu0 0
          %1722 = vmatprep.subr.bf16.mxu0 0
          %1723 = vmatpush2.bf16.msra.mxu0 0
          %1724 = vmatprep.subr.bf16.mxu0 0
          %1725 = vmatpush2.bf16.msra.mxu0 0
          %1726 = vmatprep.subr.bf16.mxu0 0
          %1727 = vmatpush2.bf16.msra.mxu0 0
          %1728 = vmatprep.subr.bf16.mxu0 0
          %1729 = vmatpush2.bf16.msra.mxu0 0
          %1730 = vmatprep.mubr.bf16.mxu0 0
          %1731 = vmatmul.mubr.bf16.gmra.mxu0 %v1656
          %v1732 = vpop.f32.mrf.mxu0
          %v1733 = vadd.f32 0.0, %v1732
          %v1734 = vpop.f32.mrf.mxu0
          %v1735 = vpop.f32.mrf.mxu0
          %v1736 = vpop.f32.mrf.mxu0
          %1737 = vdwg.mxu0
          %v1738 = vadd.f32 %v1653, %v1692
          %v1739 = vxor.u32 %v1738, 2147483648
          %v1740 = vmul.f32 %v1739, 1.442695
          %v1741 = vpow.pop %v1740
          %v1742 = vadd.f32 %v1741, 1.0
          %v1743 = vrcp.pop %v1742
          %v1744 = vmul.f32 1.0, %v1743
          %v1745 = vadd.f32 %v1654, %v1694
          %v1746 = vxor.u32 %v1745, 2147483648
          %v1747 = vmul.f32 %v1746, 1.442695
          %v1748 = vpow.pop %v1747
          %v1749 = vadd.f32 %v1748, 1.0
          %v1750 = vrcp.pop %v1749
          %v1751 = vmul.f32 1.0, %v1750
          %v1752 = vadd.f32 %v1733, %v1156
          %v1753 = vmul.f32 %v1744, %v1752
          %v1754 = vadd.f32 %v1655, %v1753
          %v1755 = vtanh.pop %v1754
          %v1756 = vsub.f32 1.0, %v1751
          %v1757 = vmul.f32 %v1756, %v1755
          %v1758 = vmul.f32 %v1751, %v1649
          %v1759 = vadd.f32 %v1757, %v1758
          %s1760 = sadd.s32 %s410, 5
          %v1761 = vstv %s1760
          %vm1762 = vcmp.lt.s32.totalorder %v1761, %v921
          %v1763 = vsel %vm1762, 1, 0
          %1764 = vset.pattern.permute.xlu0 0
          %1765 = vperm.xlu0 %1764, %v1763
          %v1766 = vpop.permute.xlu0 %1765
          %vm1767 = vcmp.eq.s32.totalorder %v1766, 1
          %v1768 = vsel %vm1767, %v1759, %v1649
          %s1769 = scalar_lea.vmem [#allocation3], 72
          %v1770 = vld [vmem:[%s1769] sm:$0xff]
          %v1771 = vld [vmem:[%s1769 + $0x8] sm:$0xf]
          %v1772 = vunpack.c.l.bf16 %v1770
          %v1773 = vunpack.c.h.bf16 %v1770
          %v1774 = vunpack.c.l.bf16 %v1771
          %v1775 = vpack.c.bf16 %v1768, %v1768
          %1776 = vmatprep.subr.bf16.mxu0 %v1031
          %1777 = vmatpush1.bf16.msra.mxu0 %v1030
          %1778 = vmatprep.subr.bf16.mxu0 %v1028
          %1779 = vmatpush1.bf16.msra.mxu0 %v1027
          %1780 = vmatprep.subr.bf16.mxu0 %v1025
          %1781 = vmatpush1.bf16.msra.mxu0 %v1024
          %1782 = vmatprep.subr.bf16.mxu0 %v1022
          %1783 = vmatpush1.bf16.msra.mxu0 %v1021
          %1784 = vmatprep.subr.bf16.mxu0 %v1019
          %1785 = vmatpush1.bf16.msra.mxu0 %v1018
          %1786 = vmatprep.subr.bf16.mxu0 %v1016
          %1787 = vmatpush1.bf16.msra.mxu0 %v1015
          %1788 = vmatprep.subr.bf16.mxu0 %v1013
          %1789 = vmatpush1.bf16.msra.mxu0 %v1012
          %1790 = vmatprep.subr.bf16.mxu0 %v1010
          %1791 = vmatpush1.bf16.msra.mxu0 %v1009
          %1792 = vmatprep.subr.bf16.mxu0 0
          %1793 = vmatpush2.bf16.msra.mxu0 0
          %1794 = vmatprep.subr.bf16.mxu0 0
          %1795 = vmatpush2.bf16.msra.mxu0 0
          %1796 = vmatprep.subr.bf16.mxu0 0
          %1797 = vmatpush2.bf16.msra.mxu0 0
          %1798 = vmatprep.subr.bf16.mxu0 0
          %1799 = vmatpush2.bf16.msra.mxu0 0
          %1800 = vmatprep.subr.bf16.mxu0 0
          %1801 = vmatpush2.bf16.msra.mxu0 0
          %1802 = vmatprep.subr.bf16.mxu0 0
          %1803 = vmatpush2.bf16.msra.mxu0 0
          %1804 = vmatprep.subr.bf16.mxu0 0
          %1805 = vmatpush2.bf16.msra.mxu0 0
          %1806 = vmatprep.subr.bf16.mxu0 0
          %1807 = vmatpush2.bf16.msra.mxu0 0
          %1808 = vmatprep.mubr.bf16.mxu0 0
          %1809 = vmatmul.mubr.bf16.gmra.mxu0 %v1775
          %v1810 = vpop.f32.mrf.mxu0
          %v1811 = vadd.f32 0.0, %v1810
          %v1812 = vpop.f32.mrf.mxu0
          %v1813 = vadd.f32 0.0, %v1812
          %v1814 = vpop.f32.mrf.mxu0
          %v1815 = vpop.f32.mrf.mxu0
          %1816 = vdwg.mxu0
          %1817 = vmatprep.subr.bf16.mxu0 0
          %1818 = vmatpush1.bf16.msra.mxu0 %v1032
          %1819 = vmatprep.subr.bf16.mxu0 0
          %1820 = vmatpush1.bf16.msra.mxu0 %v1029
          %1821 = vmatprep.subr.bf16.mxu0 0
          %1822 = vmatpush1.bf16.msra.mxu0 %v1026
          %1823 = vmatprep.subr.bf16.mxu0 0
          %1824 = vmatpush1.bf16.msra.mxu0 %v1023
          %1825 = vmatprep.subr.bf16.mxu0 0
          %1826 = vmatpush1.bf16.msra.mxu0 %v1020
          %1827 = vmatprep.subr.bf16.mxu0 0
          %1828 = vmatpush1.bf16.msra.mxu0 %v1017
          %1829 = vmatprep.subr.bf16.mxu0 0
          %1830 = vmatpush1.bf16.msra.mxu0 %v1014
          %1831 = vmatprep.subr.bf16.mxu0 0
          %1832 = vmatpush1.bf16.msra.mxu0 %v1011
          %1833 = vmatprep.subr.bf16.mxu0 0
          %1834 = vmatpush2.bf16.msra.mxu0 0
          %1835 = vmatprep.subr.bf16.mxu0 0
          %1836 = vmatpush2.bf16.msra.mxu0 0
          %1837 = vmatprep.subr.bf16.mxu0 0
          %1838 = vmatpush2.bf16.msra.mxu0 0
          %1839 = vmatprep.subr.bf16.mxu0 0
          %1840 = vmatpush2.bf16.msra.mxu0 0
          %1841 = vmatprep.subr.bf16.mxu0 0
          %1842 = vmatpush2.bf16.msra.mxu0 0
          %1843 = vmatprep.subr.bf16.mxu0 0
          %1844 = vmatpush2.bf16.msra.mxu0 0
          %1845 = vmatprep.subr.bf16.mxu0 0
          %1846 = vmatpush2.bf16.msra.mxu0 0
          %1847 = vmatprep.subr.bf16.mxu0 0
          %1848 = vmatpush2.bf16.msra.mxu0 0
          %1849 = vmatprep.mubr.bf16.mxu0 0
          %1850 = vmatmul.mubr.bf16.gmra.mxu0 %v1775
          %v1851 = vpop.f32.mrf.mxu0
          %v1852 = vadd.f32 0.0, %v1851
          %v1853 = vpop.f32.mrf.mxu0
          %v1854 = vpop.f32.mrf.mxu0
          %v1855 = vpop.f32.mrf.mxu0
          %1856 = vdwg.mxu0
          %v1857 = vadd.f32 %v1772, %v1811
          %v1858 = vxor.u32 %v1857, 2147483648
          %v1859 = vmul.f32 %v1858, 1.442695
          %v1860 = vpow.pop %v1859
          %v1861 = vadd.f32 %v1860, 1.0
          %v1862 = vrcp.pop %v1861
          %v1863 = vmul.f32 1.0, %v1862
          %v1864 = vadd.f32 %v1773, %v1813
          %v1865 = vxor.u32 %v1864, 2147483648
          %v1866 = vmul.f32 %v1865, 1.442695
          %v1867 = vpow.pop %v1866
          %v1868 = vadd.f32 %v1867, 1.0
          %v1869 = vrcp.pop %v1868
          %v1870 = vmul.f32 1.0, %v1869
          %v1871 = vadd.f32 %v1852, %v1156
          %v1872 = vmul.f32 %v1863, %v1871
          %v1873 = vadd.f32 %v1774, %v1872
          %v1874 = vtanh.pop %v1873
          %v1875 = vsub.f32 1.0, %v1870
          %v1876 = vmul.f32 %v1875, %v1874
          %v1877 = vmul.f32 %v1870, %v1768
          %v1878 = vadd.f32 %v1876, %v1877
          %s1879 = sadd.s32 %s410, 6
          %v1880 = vstv %s1879
          %vm1881 = vcmp.lt.s32.totalorder %v1880, %v921
          %v1882 = vsel %vm1881, 1, 0
          %1883 = vset.pattern.permute.xlu0 0
          %1884 = vperm.xlu0 %1883, %v1882
          %v1885 = vpop.permute.xlu0 %1884
          %vm1886 = vcmp.eq.s32.totalorder %v1885, 1
          %v1887 = vsel %vm1886, %v1878, %v1768
          %s1888 = scalar_lea.vmem [#allocation3], 84
          %v1889 = vld [vmem:[%s1888] sm:$0xff]
          %v1890 = vld [vmem:[%s1888 + $0x8] sm:$0xf]
          %v1891 = vunpack.c.l.bf16 %v1889
          %v1892 = vunpack.c.h.bf16 %v1889
          %v1893 = vunpack.c.l.bf16 %v1890
          %v1894 = vpack.c.bf16 %v1887, %v1887
          %1895 = vmatprep.subr.bf16.mxu0 %v1031
          %1896 = vmatpush1.bf16.msra.mxu0 %v1030
          %1897 = vmatprep.subr.bf16.mxu0 %v1028
          %1898 = vmatpush1.bf16.msra.mxu0 %v1027
          %1899 = vmatprep.subr.bf16.mxu0 %v1025
          %1900 = vmatpush1.bf16.msra.mxu0 %v1024
          %1901 = vmatprep.subr.bf16.mxu0 %v1022
          %1902 = vmatpush1.bf16.msra.mxu0 %v1021
          %1903 = vmatprep.subr.bf16.mxu0 %v1019
          %1904 = vmatpush1.bf16.msra.mxu0 %v1018
          %1905 = vmatprep.subr.bf16.mxu0 %v1016
          %1906 = vmatpush1.bf16.msra.mxu0 %v1015
          %1907 = vmatprep.subr.bf16.mxu0 %v1013
          %1908 = vmatpush1.bf16.msra.mxu0 %v1012
          %1909 = vmatprep.subr.bf16.mxu0 %v1010
          %1910 = vmatpush1.bf16.msra.mxu0 %v1009
          %1911 = vmatprep.subr.bf16.mxu0 0
          %1912 = vmatpush2.bf16.msra.mxu0 0
          %1913 = vmatprep.subr.bf16.mxu0 0
          %1914 = vmatpush2.bf16.msra.mxu0 0
          %1915 = vmatprep.subr.bf16.mxu0 0
          %1916 = vmatpush2.bf16.msra.mxu0 0
          %1917 = vmatprep.subr.bf16.mxu0 0
          %1918 = vmatpush2.bf16.msra.mxu0 0
          %1919 = vmatprep.subr.bf16.mxu0 0
          %1920 = vmatpush2.bf16.msra.mxu0 0
          %1921 = vmatprep.subr.bf16.mxu0 0
          %1922 = vmatpush2.bf16.msra.mxu0 0
          %1923 = vmatprep.subr.bf16.mxu0 0
          %1924 = vmatpush2.bf16.msra.mxu0 0
          %1925 = vmatprep.subr.bf16.mxu0 0
          %1926 = vmatpush2.bf16.msra.mxu0 0
          %1927 = vmatprep.mubr.bf16.mxu0 0
          %1928 = vmatmul.mubr.bf16.gmra.mxu0 %v1894
          %v1929 = vpop.f32.mrf.mxu0
          %v1930 = vadd.f32 0.0, %v1929
          %v1931 = vpop.f32.mrf.mxu0
          %v1932 = vadd.f32 0.0, %v1931
          %v1933 = vpop.f32.mrf.mxu0
          %v1934 = vpop.f32.mrf.mxu0
          %1935 = vdwg.mxu0
          %1936 = vmatprep.subr.bf16.mxu0 0
          %1937 = vmatpush1.bf16.msra.mxu0 %v1032
          %1938 = vmatprep.subr.bf16.mxu0 0
          %1939 = vmatpush1.bf16.msra.mxu0 %v1029
          %1940 = vmatprep.subr.bf16.mxu0 0
          %1941 = vmatpush1.bf16.msra.mxu0 %v1026
          %1942 = vmatprep.subr.bf16.mxu0 0
          %1943 = vmatpush1.bf16.msra.mxu0 %v1023
          %1944 = vmatprep.subr.bf16.mxu0 0
          %1945 = vmatpush1.bf16.msra.mxu0 %v1020
          %1946 = vmatprep.subr.bf16.mxu0 0
          %1947 = vmatpush1.bf16.msra.mxu0 %v1017
          %1948 = vmatprep.subr.bf16.mxu0 0
          %1949 = vmatpush1.bf16.msra.mxu0 %v1014
          %1950 = vmatprep.subr.bf16.mxu0 0
          %1951 = vmatpush1.bf16.msra.mxu0 %v1011
          %1952 = vmatprep.subr.bf16.mxu0 0
          %1953 = vmatpush2.bf16.msra.mxu0 0
          %1954 = vmatprep.subr.bf16.mxu0 0
          %1955 = vmatpush2.bf16.msra.mxu0 0
          %1956 = vmatprep.subr.bf16.mxu0 0
          %1957 = vmatpush2.bf16.msra.mxu0 0
          %1958 = vmatprep.subr.bf16.mxu0 0
          %1959 = vmatpush2.bf16.msra.mxu0 0
          %1960 = vmatprep.subr.bf16.mxu0 0
          %1961 = vmatpush2.bf16.msra.mxu0 0
          %1962 = vmatprep.subr.bf16.mxu0 0
          %1963 = vmatpush2.bf16.msra.mxu0 0
          %1964 = vmatprep.subr.bf16.mxu0 0
          %1965 = vmatpush2.bf16.msra.mxu0 0
          %1966 = vmatprep.subr.bf16.mxu0 0
          %1967 = vmatpush2.bf16.msra.mxu0 0
          %1968 = vmatprep.mubr.bf16.mxu0 0
          %1969 = vmatmul.mubr.bf16.gmra.mxu0 %v1894
          %v1970 = vpop.f32.mrf.mxu0
          %v1971 = vadd.f32 0.0, %v1970
          %v1972 = vpop.f32.mrf.mxu0
          %v1973 = vpop.f32.mrf.mxu0
          %v1974 = vpop.f32.mrf.mxu0
          %1975 = vdwg.mxu0
          %v1976 = vadd.f32 %v1891, %v1930
          %v1977 = vxor.u32 %v1976, 2147483648
          %v1978 = vmul.f32 %v1977, 1.442695
          %v1979 = vpow.pop %v1978
          %v1980 = vadd.f32 %v1979, 1.0
          %v1981 = vrcp.pop %v1980
          %v1982 = vmul.f32 1.0, %v1981
          %v1983 = vadd.f32 %v1892, %v1932
          %v1984 = vxor.u32 %v1983, 2147483648
          %v1985 = vmul.f32 %v1984, 1.442695
          %v1986 = vpow.pop %v1985
          %v1987 = vadd.f32 %v1986, 1.0
          %v1988 = vrcp.pop %v1987
          %v1989 = vmul.f32 1.0, %v1988
          %v1990 = vadd.f32 %v1971, %v1156
          %v1991 = vmul.f32 %v1982, %v1990
          %v1992 = vadd.f32 %v1893, %v1991
          %v1993 = vtanh.pop %v1992
          %v1994 = vsub.f32 1.0, %v1989
          %v1995 = vmul.f32 %v1994, %v1993
          %v1996 = vmul.f32 %v1989, %v1887
          %v1997 = vadd.f32 %v1995, %v1996
          %s1998 = sadd.s32 %s410, 7
          %v1999 = vstv %s1998
          %vm2000 = vcmp.lt.s32.totalorder %v1999, %v921
          %v2001 = vsel %vm2000, 1, 0
          %2002 = vset.pattern.permute.xlu0 0
          %2003 = vperm.xlu0 %2002, %v2001
          %v2004 = vpop.permute.xlu0 %2003
          %vm2005 = vcmp.eq.s32.totalorder %v2004, 1
          %v2006 = vsel %vm2005, %v1997, %v1887
          %2007 = vst [vmem:[#allocation2] sm:$0xff] %v2006
        $region76: #{tpu_custom_call.1} parent=51 // pred_fallthru
          _
        // Predicated region
        $region77: #{tpu_custom_call.1} parent=51 // pred_check
          %p2008 = pneg %p411
        $region78: #{tpu_custom_call.1} parent=51 // pred_check_branch
          %2010 = sbr.rel (%p2008) target = $region80
        $region79: #{tpu_custom_call.1} parent=51 // pred_region
          %v2011 = vld [vmem:[#allocation2] sm:$0xff]
          %v2012 = vpack.c.bf16 %v2011, %v2011
          %v2013 = vld [vmem:[#allocation12] sm:$0xf]
          %v2014 = vld [vmem:[#allocation12 + $0x4] sm:$0xf]
          %v2015 = vld [vmem:[#allocation12 + $0x8] sm:$0xf]
          %v2016 = vld [vmem:[#allocation12 + $0xc] sm:$0xf]
          %v2017 = vld [vmem:[#allocation12 + $0x10] sm:$0xf]
          %v2018 = vld [vmem:[#allocation12 + $0x14] sm:$0xf]
          %v2019 = vld [vmem:[#allocation12 + $0x18] sm:$0xf]
          %v2020 = vld [vmem:[#allocation12 + $0x1c] sm:$0xf]
          %v2021 = vld [vmem:[#allocation12 + $0x20] sm:$0xf]
          %v2022 = vld [vmem:[#allocation12 + $0x24] sm:$0xf]
          %v2023 = vld [vmem:[#allocation12 + $0x28] sm:$0xf]
          %v2024 = vld [vmem:[#allocation12 + $0x2c] sm:$0xf]
          %v2025 = vld [vmem:[#allocation12 + $0x30] sm:$0xf]
          %v2026 = vld [vmem:[#allocation12 + $0x34] sm:$0xf]
          %v2027 = vld [vmem:[#allocation12 + $0x38] sm:$0xf]
          %v2028 = vld [vmem:[#allocation12 + $0x3c] sm:$0xf]
          %v2029 = vld [vmem:[%s8] sm:$0x1]
          %v2031 = vlaneseq
          %v2032 = vshrl.u32 %v2031, 7
          %v2033 = vsub.s32 0, %v2032
          %v2034 = vrot.slane %v2029, %v2033
          %v2052 = vunpack.c.l.b16 %v2013
          %v2053 = vunpack.c.l.b16 %v2014
          %v2054 = vunpack.c.l.b16 %v2015
          %v2055 = vunpack.c.l.b16 %v2016
          %v2056 = vunpack.c.l.b16 %v2017
          %v2057 = vunpack.c.l.b16 %v2018
          %v2058 = vunpack.c.l.b16 %v2019
          %v2059 = vunpack.c.l.b16 %v2020
          %v2060 = vunpack.c.l.b16 %v2021
          %v2061 = vunpack.c.l.b16 %v2022
          %v2062 = vunpack.c.l.b16 %v2023
          %v2063 = vunpack.c.l.b16 %v2024
          %v2064 = vunpack.c.l.b16 %v2025
          %v2065 = vunpack.c.l.b16 %v2026
          %v2066 = vunpack.c.l.b16 %v2027
          %v2067 = vunpack.c.l.b16 %v2028
          %v2068 = vpack.c.b16 %v2053, %v2052
          %v2069 = vpack.c.b16 %v2055, %v2054
          %v2070 = vpack.c.b16 %v2057, %v2056
          %v2071 = vpack.c.b16 %v2059, %v2058
          %v2072 = vpack.c.b16 %v2061, %v2060
          %v2073 = vpack.c.b16 %v2063, %v2062
          %v2074 = vpack.c.b16 %v2065, %v2064
          %v2075 = vpack.c.b16 %v2067, %v2066
          %2084 = vmatprep.subr.bf16.mxu0 0
          %2085 = vmatpush1.bf16.msra.mxu0 %v2075
          %2086 = vmatprep.subr.bf16.mxu0 0
          %2087 = vmatpush1.bf16.msra.mxu0 %v2074
          %2088 = vmatprep.subr.bf16.mxu0 0
          %2089 = vmatpush1.bf16.msra.mxu0 %v2073
          %2090 = vmatprep.subr.bf16.mxu0 0
          %2091 = vmatpush1.bf16.msra.mxu0 %v2072
          %2092 = vmatprep.subr.bf16.mxu0 0
          %2093 = vmatpush1.bf16.msra.mxu0 %v2071
          %2094 = vmatprep.subr.bf16.mxu0 0
          %2095 = vmatpush1.bf16.msra.mxu0 %v2070
          %2096 = vmatprep.subr.bf16.mxu0 0
          %2097 = vmatpush1.bf16.msra.mxu0 %v2069
          %2098 = vmatprep.subr.bf16.mxu0 0
          %2099 = vmatpush1.bf16.msra.mxu0 %v2068
          %2100 = vmatprep.subr.bf16.mxu0 0
          %2101 = vmatpush2.bf16.msra.mxu0 0
          %2102 = vmatprep.subr.bf16.mxu0 0
          %2103 = vmatpush2.bf16.msra.mxu0 0
          %2104 = vmatprep.subr.bf16.mxu0 0
          %2105 = vmatpush2.bf16.msra.mxu0 0
          %2106 = vmatprep.subr.bf16.mxu0 0
          %2107 = vmatpush2.bf16.msra.mxu0 0
          %2108 = vmatprep.subr.bf16.mxu0 0
          %2109 = vmatpush2.bf16.msra.mxu0 0
          %2110 = vmatprep.subr.bf16.mxu0 0
          %2111 = vmatpush2.bf16.msra.mxu0 0
          %2112 = vmatprep.subr.bf16.mxu0 0
          %2113 = vmatpush2.bf16.msra.mxu0 0
          %2114 = vmatprep.subr.bf16.mxu0 0
          %2115 = vmatpush2.bf16.msra.mxu0 0
          %2116 = vmatprep.mubr.bf16.mxu0 0
          %2117 = vmatmul.mubr.bf16.gmra.mxu0 %v2012
          %v2118 = vpop.f32.mrf.mxu0
          %v2119 = vadd.f32 %v2034, %v2118
          %v2120 = vpop.f32.mrf.mxu0
          %v2121 = vpop.f32.mrf.mxu0
          %v2122 = vpop.f32.mrf.mxu0
          %2123 = vdwg.mxu0
          %v2124 = vmul.f32 %v2119, %v2119
          %2125 = vadd.xlane.f32.xlu0 %v2124
          %v2126 = vpop.xlane.xlu0 %2125
          %v2127 = vrsqrt.pop %v2126
          %v2128 = vmul.f32 %v2126, %v2127
          %vm2129 = vcmp.eq.f32.partialorder %v2126, inf
          %v2130 = vsel %vm2129, %v2126, %v2128
          %vm2131 = vcmp.eq.f32.partialorder %v2126, 0.0
          %v2132 = vand.u32 %v2126, 2147483648
          %v2133 = vsel %vm2131, %v2132, %v2130
          %v2134 = vadd.f32 %v2133, 1e-09
          %v2135 = vrcp.pop %v2134
          %v2136 = vmul.f32 %v2119, %v2135
          %v2137 = vld [vmem:[%s408] sm:$0xff]
          %vm2138 = vcmp.gt.s32.totalorder %v2137, 0
          %v2139 = vsel %vm2138, 1, 0
          %2140 = vset.pattern.permute.xlu0 0
          %2141 = vperm.xlu0 %2140, %v2139
          %v2142 = vpop.permute.xlu0 %2141
          %vm2143 = vcmp.eq.s32.totalorder %v2142, 1
          %v2144 = vsel %vm2143, %v2136, 0.0
          %2145 = vst [vmem:[%s403] sm:$0xff] %v2144
        $region80: #{tpu_custom_call.1} parent=51 // pred_fallthru
          _
        %s2146 = sand.u32 %s234, 1
        %s2147 = scalar_lea.sflag [#allocation8], %s2146
        %s2148 = sand.u32 %s234, 1
        %s2149 = smul.addr %s2148, 8
        %s2150 = scalar_lea.vmem [#allocation14], %s2149
        // Predicated region
        $region81: #{tpu_custom_call.1} parent=51 // pred_check
          %p2151 = pneg %p244
        $region82: #{tpu_custom_call.1} parent=51 // pred_check_branch
          %2153 = sbr.rel (%p2151) target = $region84
        $region83: #{tpu_custom_call.1} parent=51 // pred_region
          %s2155 = ssub.s32 128, 128
          %2156 = vsyncadd %s2147, %s2155
          %s2157 = smul.addr %s38, 128
          %s2158 = scalar_lea.hbm %s9, %s2157
          %s2160 = sshll.u32 %s2150, 4
          %s2161 = int_to_ptr.vmem [resolvable:$true] %s2160
          %2163 = dma.vmem_to_hbm [thread:$0]  %s2161, 128, %s2158, %s2147
        $region84: #{tpu_custom_call.1} parent=51 // pred_fallthru
          _
      $region52: #{tpu_custom_call.1} parent=5 // pred_fallthru
        _
      %p2164 = scmp.le.s32.totalorder 2, %s29
      // Predicated region
      $region85: #{tpu_custom_call.1} parent=5 // pred_check
        %p2165 = pneg %p2164
      $region86: #{tpu_custom_call.1} parent=5 // pred_check_branch
        %2167 = sbr.rel (%p2165) target = $region88
      $region87: #{tpu_custom_call.1} parent=5 // pred_region
        %s2168 = ssub.s32 %s29, 2
        // Predicated region
        $region89: #{tpu_custom_call.1} parent=87 // pred_check
          %p2169 = pneg %p250
        $region90: #{tpu_custom_call.1} parent=87 // pred_check_branch
          %2171 = sbr.rel (%p2169) target = $region92
        $region91: #{tpu_custom_call.1} parent=87 // pred_region
          %s2172 = sand.u32 %s235, 1
          %s2173 = scalar_lea.sflag [#allocation8], %s2172
          %s2174 = sand.u32 %s235, 1
          %s2175 = smul.addr %s2174, 8
          %s2176 = scalar_lea.vmem [#allocation14], %s2175
          %2177 = dma.done %s2173, 128
        $region92: #{tpu_custom_call.1} parent=87 // pred_fallthru
          _
      $region88: #{tpu_custom_call.1} parent=5 // pred_fallthru
        _
    $region6: #{tpu_custom_call.1} parent=1 // loop_footer
      %s33 = sadd.s32 1, %s29
    $region7: #{tpu_custom_call.1} parent=1 // loop_footer_branch
      %28 = sbr.rel target = $region3
    $region8: #{tpu_custom_call.1} parent=1 // loop_exit
      _
    %2178 = vsyncpa [#allocation7], 1
    %s2179 = scalar_lea.sflag [#allocation7], 1
    %2180 = vsyncpa %s2179, 1
    %2181 = vsyncpa [#allocation10], 1
    %2182 = vsyncpa [#allocation13], 1
    %2183 = vsyncpa [#allocation8], 1
    %s2184 = scalar_lea.sflag [#allocation8], 1
    %2185 = vsyncpa %s2184, 1

</llo_original>
